<compile_context>
chip_gen: v5e
topology: v5e:2x2
jax: 0.10.0
libtpu: 0.0.40
codegen_flags: <defaults>
</compile_context>

<pallas_src>
import functools
import math

import jax
import jax.numpy as jnp
from jax.experimental import pallas as pl
from jax.experimental.pallas import tpu as pltpu


HIDDEN_SIZES = [1024, 128, 64, 16, 1]
_SQRT_2_OVER_PI = math.sqrt(2.0 / math.pi)
_INV_SQRT_2 = 1.0 / math.sqrt(2.0)


# ---------------------------------------------------------------------------
# Activations
# ---------------------------------------------------------------------------
def _gelu_tanh(x):
    """tanh-approximate GELU; tanh lands in the EUP slot (VALU stays light)."""
    dt = x.dtype
    c = jnp.asarray(_SQRT_2_OVER_PI, dt)
    k = jnp.asarray(0.044715, dt)
    half = jnp.asarray(0.5, dt)
    one = jnp.asarray(1.0, dt)
    return half * x * (one + jnp.tanh(c * (x + k * x * x * x)))


def _gelu_erf(x):
    """Exact erf GELU (torch nn.GELU() default); VALU-heavy, parity option."""
    xf = x.astype(jnp.float32)
    y = 0.5 * xf * (1.0 + jax.lax.erf(xf * _INV_SQRT_2))
    return y.astype(x.dtype)


# ---------------------------------------------------------------------------
# Kernel
# ---------------------------------------------------------------------------
def _mlp_kernel(x_ref,
                w1_ref, b1_ref,
                w2_ref, b2_ref,
                w3_ref, b3_ref,
                w4_ref, b4_ref,
                w5row_ref, b5_ref,
                o_ref,
                *, act_dtype, approximate):
    gelu = _gelu_tanh if approximate else _gelu_erf

    def bias_gelu(h_f32, b_ref):
        # Fused downcast + bias-add + GELU in act_dtype (bf16 on v6e/v7x).
        h = h_f32.astype(act_dtype) + b_ref[...].astype(act_dtype)
        return gelu(h)

    # Layer 1: Linear(input_size, 1024) + GELU   (bf16 x bf16 -> f32 on MXU;
    # the x cast happens in-kernel, hidden under the pipeline).
    h = jnp.dot(x_ref[...].astype(jnp.bfloat16), w1_ref[...],
                preferred_element_type=jnp.float32)
    h = bias_gelu(h, b1_ref)
    # Layer 2: Linear(1024, 128) + GELU
    h = jnp.dot(h.astype(jnp.bfloat16), w2_ref[...],
                preferred_element_type=jnp.float32)
    h = bias_gelu(h, b2_ref)
    # Layer 3: Linear(128, 64) + GELU
    h = jnp.dot(h.astype(jnp.bfloat16), w3_ref[...],
                preferred_element_type=jnp.float32)
    h = bias_gelu(h, b3_ref)
    # Layer 4: Linear(64, 16) + GELU
    h = jnp.dot(h.astype(jnp.bfloat16), w4_ref[...],
                preferred_element_type=jnp.float32)
    h = bias_gelu(h, b4_ref)
    # Layer 5: Linear(16, 1) -- VPU broadcast-multiply + lane reduction
    # (w5row_ref is the pre-transposed (1, 16) f32 weight row).
    out = jnp.sum(h.astype(jnp.float32) * w5row_ref[...],
                  axis=-1, keepdims=True) + b5_ref[...]

    o_ref[...] = out.astype(o_ref.dtype)


# ---------------------------------------------------------------------------
# Generation-aware configuration
# ---------------------------------------------------------------------------
def _device_kind():
    try:
        return jax.devices()[0].device_kind.lower()
    except Exception:  # pragma: no cover - no device available at trace time
        return ""


def _tpu_config():
    """(num_tensorcores, has_bf16_vpu) from the device kind string."""
    kind = _device_kind()
    num_cores = 2 if "v7" in kind else 1          # v7x: 2 TCs/chip
    bf16_vpu = ("v6" in kind) or ("v7" in kind)   # v6e/v7x VPU does bf16
    return num_cores, bf16_vpu


def _pick_batch_tile(B, *, num_cores=1, max_tile=2048):
    """Largest batch tile <= max_tile that divides B.

    On single-TC chips (v5e/v6e) this is usually the whole batch (one grid
    step, minimal per-step overhead).  On multi-TC chips (v7x) the number of
    grid steps is kept a multiple of num_cores so the 'parallel' axis splits
    evenly across TensorCores.
    """
    cap = min(max_tile, B)
    if num_cores > 1 and B >= 2 * num_cores * 8:
        cap = min(cap, B // num_cores)
    for mult in (16, 8):   # prefer multiples of 16 (bf16 sublane packing)
        best = 0
        t = mult
        while t <= cap:
            if B % t == 0 and (num_cores <= 1 or (B // t) % num_cores == 0):
                best = t
            t += mult
        if best:
            return best
    return B  # tiny batch: single full-array block


# ---------------------------------------------------------------------------
# Params
# ---------------------------------------------------------------------------
def init_mlp_params(input_size, key):
    """Xavier-uniform weights (as in the torch init), zero biases (f32)."""
    sizes = [input_size] + HIDDEN_SIZES
    params = []
    for i in range(len(sizes) - 1):
        fan_in, fan_out = sizes[i], sizes[i + 1]
        key, sub = jax.random.split(key)
        limit = math.sqrt(6.0 / (fan_in + fan_out))
        # torch stores W as (out, in); we store transposed (in, out) for h @ W.
        w = jax.random.uniform(sub, (fan_in, fan_out), jnp.float32, -limit, limit)
        b = jnp.zeros((1, fan_out), jnp.float32)
        params.append((w, b))
    return params


def prepare_mlp_params(params):
    """One-time conversion to kernel-ready operands (do this once, not per call):
    bf16 weights for the hidden layers, a (1, 16) f32 row for the tail layer,
    f32 biases.  Returns a flat tuple in kernel argument order."""
    n = len(params)
    flat = []
    for li, (w, b) in enumerate(params):
        if li < n - 1:
            flat.append(w.astype(jnp.bfloat16))            # MXU operand
        else:
            assert w.shape[1] == 1, "tail-layer VPU reduction assumes out_dim == 1"
            flat.append(jnp.transpose(w).astype(jnp.float32))  # (1, 16) row
        flat.append(b.astype(jnp.float32))
    return tuple(flat)


# ---------------------------------------------------------------------------
# Forward
# ---------------------------------------------------------------------------
def mlp_forward(x, flat_params, *, batch_tile=None, approximate_gelu=True,
                activation_dtype=None, vmem_limit_bytes=48 * 1024 * 1024):
    """x: (B, input_size) f32; flat_params: output of prepare_mlp_params()."""
    B, in_dim = x.shape
    num_cores, bf16_vpu = _tpu_config()
    if activation_dtype is None:
        # bf16 bias/GELU only where the VPU supports it (v6e/v7x); f32 on v5e.
        activation_dtype = jnp.bfloat16 if bf16_vpu else jnp.float32
    if batch_tile is None:
        batch_tile = _pick_batch_tile(B, num_cores=num_cores)
    assert B % batch_tile == 0, "batch must be divisible by batch_tile"

    out_dim = flat_params[-1].shape[-1]   # b5 is (1, 1)

    in_specs = [pl.BlockSpec((batch_tile, in_dim), lambda i: (i, 0))]
    for p in flat_params:
        # Full-array blocks with a constant index_map: resident across steps.
        in_specs.append(pl.BlockSpec(p.shape, lambda i: (0, 0)))
    out_spec = pl.BlockSpec((batch_tile, out_dim), lambda i: (i, 0))

    kernel = functools.partial(_mlp_kernel,
                               act_dtype=activation_dtype,
                               approximate=approximate_gelu)

    return pl.pallas_call(
        kernel,
        out_shape=jax.ShapeDtypeStruct((B, out_dim), jnp.float32),
        grid_spec=pltpu.PrefetchScalarGridSpec(
            num_scalar_prefetch=0,
            grid=(B // batch_tile,),
            in_specs=in_specs,
            out_specs=out_spec,
        ),
        compiler_params=pltpu.CompilerParams(
            dimension_semantics=("parallel",),
            vmem_limit_bytes=vmem_limit_bytes,
        ),
    )(x, *flat_params)


# ---------------------------------------------------------------------------
# Pure-JAX references
# ---------------------------------------------------------------------------
def mlp_reference(x, params, *, match_kernel=False, approximate_gelu=True,
                  activation_dtype=jnp.float32):
    """match_kernel=True mirrors the kernel's precision path (bf16 matmul
    operands, act_dtype bias/GELU, chosen GELU form); otherwise full-f32
    exact-erf reference matching torch semantics."""
    h = x
    n = len(params)
    for li, (w, b) in enumerate(params):
        if li < n - 1:
            if match_kernel:
                z = jnp.dot(h.astype(jnp.bfloat16), w.astype(jnp.bfloat16),
                            preferred_element_type=jnp.float32)
                z = z.astype(activation_dtype) + b.astype(activation_dtype)
                h = _gelu_tanh(z) if approximate_gelu else _gelu_erf(z)
            else:
                z = jnp.dot(h, w, preferred_element_type=jnp.float32) + b
                h = _gelu_erf(z)
        else:
            h = jnp.dot(h.astype(jnp.float32), w,
                        preferred_element_type=jnp.float32) + b
    return h.astype(jnp.float32)


# ---------------------------------------------------------------------------
# Demo / self-check
# ---------------------------------------------------------------------------
if __name__ == "__main__":
    key = jax.random.PRNGKey(0)
    key, xkey = jax.random.split(key)

    batch = 256
    input_size = 32
    x = jax.random.normal(xkey, (batch, input_size), jnp.float32)

    params = init_mlp_params(input_size, key)
    flat_params = prepare_mlp_params(params)   # one-time bf16/layout conversion

    out = mlp_forward(x, flat_params)          # generation-aware tile selection
    out = jax.block_until_ready(out)

    _, bf16_vpu = _tpu_config()
    act_dtype = jnp.bfloat16 if bf16_vpu else jnp.float32
    ref_matched = mlp_reference(x, params, match_kernel=True,
                                approximate_gelu=True,
                                activation_dtype=act_dtype)
    ref_f32 = mlp_reference(x, params, match_kernel=False)

    assert out.shape == (batch, 1), out.shape
    err_m = float(jnp.max(jnp.abs(out - ref_matched)))
    err_f = float(jnp.max(jnp.abs(out - ref_f32)))
    assert jnp.allclose(out, ref_matched, atol=1e-2, rtol=5e-2), (
        f"max abs err vs matched-precision ref {err_m}")
    assert jnp.allclose(out, ref_f32, atol=5e-2, rtol=1e-1), (
        f"max abs err vs f32 exact-GELU ref {err_f}")

    print("KERNEL_OK")
</pallas_src>

<mosaic_0001>
module attributes {stable_mosaic.version = 11 : i64} {
  func.func @_mlp_kernel(%arg0: i32, %arg1: memref<256x32xf32, #tpu.memory_space<vmem>>, %arg2: memref<32x1024xbf16, #tpu.memory_space<vmem>>, %arg3: memref<1x1024xf32, #tpu.memory_space<vmem>>, %arg4: memref<1024x128xbf16, #tpu.memory_space<vmem>>, %arg5: memref<1x128xf32, #tpu.memory_space<vmem>>, %arg6: memref<128x64xbf16, #tpu.memory_space<vmem>>, %arg7: memref<1x64xf32, #tpu.memory_space<vmem>>, %arg8: memref<64x16xbf16, #tpu.memory_space<vmem>>, %arg9: memref<1x16xf32, #tpu.memory_space<vmem>>, %arg10: memref<1x16xf32, #tpu.memory_space<vmem>>, %arg11: memref<1x1xf32, #tpu.memory_space<vmem>>, %arg12: memref<256x1xf32, #tpu.memory_space<vmem>>) attributes {dimension_semantics = [#tpu.dimension_semantics<parallel>], iteration_bounds = array<i64: 1>, scalar_prefetch = 0 : i64, scratch_operands = 0 : i64, tpu.core_type = #tpu.core_type<tc>, window_params = [{transform_indices = @transform_0, window_bounds = array<i64: 256, 32>}, {pipeline_mode = #tpu.pipeline_mode<synchronous>, transform_indices = @transform_1, window_bounds = array<i64: 32, 1024>}, {pipeline_mode = #tpu.pipeline_mode<synchronous>, transform_indices = @transform_2, window_bounds = array<i64: 1, 1024>}, {pipeline_mode = #tpu.pipeline_mode<synchronous>, transform_indices = @transform_3, window_bounds = array<i64: 1024, 128>}, {pipeline_mode = #tpu.pipeline_mode<synchronous>, transform_indices = @transform_4, window_bounds = array<i64: 1, 128>}, {pipeline_mode = #tpu.pipeline_mode<synchronous>, transform_indices = @transform_5, window_bounds = array<i64: 128, 64>}, {pipeline_mode = #tpu.pipeline_mode<synchronous>, transform_indices = @transform_6, window_bounds = array<i64: 1, 64>}, {pipeline_mode = #tpu.pipeline_mode<synchronous>, transform_indices = @transform_7, window_bounds = array<i64: 64, 16>}, {pipeline_mode = #tpu.pipeline_mode<synchronous>, transform_indices = @transform_8, window_bounds = array<i64: 1, 16>}, {pipeline_mode = #tpu.pipeline_mode<synchronous>, transform_indices = @transform_9, window_bounds = array<i64: 1, 16>}, {pipeline_mode = #tpu.pipeline_mode<synchronous>, transform_indices = @transform_10, window_bounds = array<i64: 1, 1>}, {transform_indices = @transform_11, window_bounds = array<i64: 256, 1>}]} {
    %c0 = arith.constant 0 : index
    %c0_0 = arith.constant 0 : index
    %0 = vector.load %arg1[%c0, %c0_0] : memref<256x32xf32, #tpu.memory_space<vmem>>, vector<256x32xf32>
    %1 = arith.truncf %0 : vector<256x32xf32> to vector<256x32xbf16>
    %c0_1 = arith.constant 0 : index
    %c0_2 = arith.constant 0 : index
    %2 = vector.load %arg2[%c0_1, %c0_2] : memref<32x1024xbf16, #tpu.memory_space<vmem>>, vector<32x1024xbf16>
    %cst = arith.constant dense<0.000000e+00> : vector<256x1024xf32>
    %3 = tpu.matmul %1, %2, %cst {dimension_numbers = #tpu.dot_dimension_numbers<[1], [0], [0], [1], [0, 0, 1, 1], [], []>} : vector<256x32xbf16>, vector<32x1024xbf16>, vector<256x1024xf32> -> vector<256x1024xf32>
    %c0_3 = arith.constant 0 : index
    %c0_4 = arith.constant 0 : index
    %4 = vector.load %arg3[%c0_3, %c0_4] : memref<1x1024xf32, #tpu.memory_space<vmem>>, vector<1x1024xf32>
    %5 = vector.broadcast %4 : vector<1x1024xf32> to vector<256x1024xf32>
    %6 = arith.addf %3, %5 : vector<256x1024xf32>
    %cst_5 = arith.constant 5.000000e-01 : f32
    %7 = vector.broadcast %cst_5 : f32 to vector<256x1024xf32>
    %8 = arith.mulf %7, %6 : vector<256x1024xf32>
    %cst_6 = arith.constant 4.471500e-02 : f32
    %9 = vector.broadcast %cst_6 : f32 to vector<256x1024xf32>
    %10 = arith.mulf %9, %6 : vector<256x1024xf32>
    %11 = arith.mulf %10, %6 : vector<256x1024xf32>
    %12 = arith.mulf %11, %6 : vector<256x1024xf32>
    %13 = arith.addf %6, %12 : vector<256x1024xf32>
    %cst_7 = arith.constant 0.797884583 : f32
    %14 = vector.broadcast %cst_7 : f32 to vector<256x1024xf32>
    %15 = arith.mulf %14, %13 : vector<256x1024xf32>
    %16 = math.tanh %15 : vector<256x1024xf32>
    %cst_8 = arith.constant 1.000000e+00 : f32
    %17 = vector.broadcast %cst_8 : f32 to vector<256x1024xf32>
    %18 = arith.addf %17, %16 : vector<256x1024xf32>
    %19 = arith.mulf %8, %18 : vector<256x1024xf32>
    %20 = arith.truncf %19 : vector<256x1024xf32> to vector<256x1024xbf16>
    %c0_9 = arith.constant 0 : index
    %c0_10 = arith.constant 0 : index
    %21 = vector.load %arg4[%c0_9, %c0_10] : memref<1024x128xbf16, #tpu.memory_space<vmem>>, vector<1024x128xbf16>
    %cst_11 = arith.constant dense<0.000000e+00> : vector<256x128xf32>
    %22 = tpu.matmul %20, %21, %cst_11 {dimension_numbers = #tpu.dot_dimension_numbers<[1], [0], [0], [1], [0, 0, 1, 1], [], []>} : vector<256x1024xbf16>, vector<1024x128xbf16>, vector<256x128xf32> -> vector<256x128xf32>
    %c0_12 = arith.constant 0 : index
    %c0_13 = arith.constant 0 : index
    %23 = vector.load %arg5[%c0_12, %c0_13] : memref<1x128xf32, #tpu.memory_space<vmem>>, vector<1x128xf32>
    %24 = vector.broadcast %23 : vector<1x128xf32> to vector<256x128xf32>
    %25 = arith.addf %22, %24 : vector<256x128xf32>
    %cst_14 = arith.constant 5.000000e-01 : f32
    %26 = vector.broadcast %cst_14 : f32 to vector<256x128xf32>
    %27 = arith.mulf %26, %25 : vector<256x128xf32>
    %cst_15 = arith.constant 4.471500e-02 : f32
    %28 = vector.broadcast %cst_15 : f32 to vector<256x128xf32>
    %29 = arith.mulf %28, %25 : vector<256x128xf32>
    %30 = arith.mulf %29, %25 : vector<256x128xf32>
    %31 = arith.mulf %30, %25 : vector<256x128xf32>
    %32 = arith.addf %25, %31 : vector<256x128xf32>
    %cst_16 = arith.constant 0.797884583 : f32
    %33 = vector.broadcast %cst_16 : f32 to vector<256x128xf32>
    %34 = arith.mulf %33, %32 : vector<256x128xf32>
    %35 = math.tanh %34 : vector<256x128xf32>
    %cst_17 = arith.constant 1.000000e+00 : f32
    %36 = vector.broadcast %cst_17 : f32 to vector<256x128xf32>
    %37 = arith.addf %36, %35 : vector<256x128xf32>
    %38 = arith.mulf %27, %37 : vector<256x128xf32>
    %39 = arith.truncf %38 : vector<256x128xf32> to vector<256x128xbf16>
    %c0_18 = arith.constant 0 : index
    %c0_19 = arith.constant 0 : index
    %40 = vector.load %arg6[%c0_18, %c0_19] : memref<128x64xbf16, #tpu.memory_space<vmem>>, vector<128x64xbf16>
    %cst_20 = arith.constant dense<0.000000e+00> : vector<256x64xf32>
    %41 = tpu.matmul %39, %40, %cst_20 {dimension_numbers = #tpu.dot_dimension_numbers<[1], [0], [0], [1], [0, 0, 1, 1], [], []>} : vector<256x128xbf16>, vector<128x64xbf16>, vector<256x64xf32> -> vector<256x64xf32>
    %c0_21 = arith.constant 0 : index
    %c0_22 = arith.constant 0 : index
    %42 = vector.load %arg7[%c0_21, %c0_22] : memref<1x64xf32, #tpu.memory_space<vmem>>, vector<1x64xf32>
    %43 = vector.broadcast %42 : vector<1x64xf32> to vector<256x64xf32>
    %44 = arith.addf %41, %43 : vector<256x64xf32>
    %cst_23 = arith.constant 5.000000e-01 : f32
    %45 = vector.broadcast %cst_23 : f32 to vector<256x64xf32>
    %46 = arith.mulf %45, %44 : vector<256x64xf32>
    %cst_24 = arith.constant 4.471500e-02 : f32
    %47 = vector.broadcast %cst_24 : f32 to vector<256x64xf32>
    %48 = arith.mulf %47, %44 : vector<256x64xf32>
    %49 = arith.mulf %48, %44 : vector<256x64xf32>
    %50 = arith.mulf %49, %44 : vector<256x64xf32>
    %51 = arith.addf %44, %50 : vector<256x64xf32>
    %cst_25 = arith.constant 0.797884583 : f32
    %52 = vector.broadcast %cst_25 : f32 to vector<256x64xf32>
    %53 = arith.mulf %52, %51 : vector<256x64xf32>
    %54 = math.tanh %53 : vector<256x64xf32>
    %cst_26 = arith.constant 1.000000e+00 : f32
    %55 = vector.broadcast %cst_26 : f32 to vector<256x64xf32>
    %56 = arith.addf %55, %54 : vector<256x64xf32>
    %57 = arith.mulf %46, %56 : vector<256x64xf32>
    %58 = arith.truncf %57 : vector<256x64xf32> to vector<256x64xbf16>
    %c0_27 = arith.constant 0 : index
    %c0_28 = arith.constant 0 : index
    %59 = vector.load %arg8[%c0_27, %c0_28] : memref<64x16xbf16, #tpu.memory_space<vmem>>, vector<64x16xbf16>
    %cst_29 = arith.constant dense<0.000000e+00> : vector<256x16xf32>
    %60 = tpu.matmul %58, %59, %cst_29 {dimension_numbers = #tpu.dot_dimension_numbers<[1], [0], [0], [1], [0, 0, 1, 1], [], []>} : vector<256x64xbf16>, vector<64x16xbf16>, vector<256x16xf32> -> vector<256x16xf32>
    %c0_30 = arith.constant 0 : index
    %c0_31 = arith.constant 0 : index
    %61 = vector.load %arg9[%c0_30, %c0_31] : memref<1x16xf32, #tpu.memory_space<vmem>>, vector<1x16xf32>
    %62 = vector.broadcast %61 : vector<1x16xf32> to vector<256x16xf32>
    %63 = arith.addf %60, %62 : vector<256x16xf32>
    %cst_32 = arith.constant 5.000000e-01 : f32
    %64 = vector.broadcast %cst_32 : f32 to vector<256x16xf32>
    %65 = arith.mulf %64, %63 : vector<256x16xf32>
    %cst_33 = arith.constant 4.471500e-02 : f32
    %66 = vector.broadcast %cst_33 : f32 to vector<256x16xf32>
    %67 = arith.mulf %66, %63 : vector<256x16xf32>
    %68 = arith.mulf %67, %63 : vector<256x16xf32>
    %69 = arith.mulf %68, %63 : vector<256x16xf32>
    %70 = arith.addf %63, %69 : vector<256x16xf32>
    %cst_34 = arith.constant 0.797884583 : f32
    %71 = vector.broadcast %cst_34 : f32 to vector<256x16xf32>
    %72 = arith.mulf %71, %70 : vector<256x16xf32>
    %73 = math.tanh %72 : vector<256x16xf32>
    %cst_35 = arith.constant 1.000000e+00 : f32
    %74 = vector.broadcast %cst_35 : f32 to vector<256x16xf32>
    %75 = arith.addf %74, %73 : vector<256x16xf32>
    %76 = arith.mulf %65, %75 : vector<256x16xf32>
    %c0_36 = arith.constant 0 : index
    %c0_37 = arith.constant 0 : index
    %77 = vector.load %arg10[%c0_36, %c0_37] : memref<1x16xf32, #tpu.memory_space<vmem>>, vector<1x16xf32>
    %78 = vector.broadcast %77 : vector<1x16xf32> to vector<256x16xf32>
    %79 = arith.mulf %76, %78 : vector<256x16xf32>
    %cst_38 = arith.constant dense<0.000000e+00> : vector<256xf32>
    %80 = vector.multi_reduction <add>, %79, %cst_38 [1] : vector<256x16xf32> to vector<256xf32>
    %81 = vector.shape_cast %80 : vector<256xf32> to vector<256x1xf32>
    %c0_39 = arith.constant 0 : index
    %c0_40 = arith.constant 0 : index
    %82 = vector.load %arg11[%c0_39, %c0_40] : memref<1x1xf32, #tpu.memory_space<vmem>>, vector<1x1xf32>
    %83 = vector.broadcast %82 : vector<1x1xf32> to vector<256x1xf32>
    %84 = arith.addf %81, %83 : vector<256x1xf32>
    %c0_41 = arith.constant 0 : index
    %c0_42 = arith.constant 0 : index
    %85 = vector.load %arg12[%c0_41, %c0_42] : memref<256x1xf32, #tpu.memory_space<vmem>>, vector<256x1xf32>
    tpu.vector_store %arg12[%c0_41, %c0_42], %84 {strides = array<i32>} : memref<256x1xf32, #tpu.memory_space<vmem>>, vector<256x1xf32>,
    return
  }
  func.func @transform_0(%arg0: i32) -> (i32, i32) {
    %c0_i32 = arith.constant 0 : i32
    %c0_i32_0 = arith.constant 0 : i32
    return %arg0, %c0_i32 : i32, i32
  }
  func.func @transform_1(%arg0: i32) -> (i32, i32) {
    %c0_i32 = arith.constant 0 : i32
    %c0_i32_0 = arith.constant 0 : i32
    %c0_i32_1 = arith.constant 0 : i32
    return %c0_i32, %c0_i32_0 : i32, i32
  }
  func.func @transform_2(%arg0: i32) -> (i32, i32) {
    %c0_i32 = arith.constant 0 : i32
    %c0_i32_0 = arith.constant 0 : i32
    %c0_i32_1 = arith.constant 0 : i32
    return %c0_i32, %c0_i32_0 : i32, i32
  }
  func.func @transform_3(%arg0: i32) -> (i32, i32) {
    %c0_i32 = arith.constant 0 : i32
    %c0_i32_0 = arith.constant 0 : i32
    %c0_i32_1 = arith.constant 0 : i32
    return %c0_i32, %c0_i32_0 : i32, i32
  }
  func.func @transform_4(%arg0: i32) -> (i32, i32) {
    %c0_i32 = arith.constant 0 : i32
    %c0_i32_0 = arith.constant 0 : i32
    %c0_i32_1 = arith.constant 0 : i32
    return %c0_i32, %c0_i32_0 : i32, i32
  }
  func.func @transform_5(%arg0: i32) -> (i32, i32) {
    %c0_i32 = arith.constant 0 : i32
    %c0_i32_0 = arith.constant 0 : i32
    %c0_i32_1 = arith.constant 0 : i32
    return %c0_i32, %c0_i32_0 : i32, i32
  }
  func.func @transform_6(%arg0: i32) -> (i32, i32) {
    %c0_i32 = arith.constant 0 : i32
    %c0_i32_0 = arith.constant 0 : i32
    %c0_i32_1 = arith.constant 0 : i32
    return %c0_i32, %c0_i32_0 : i32, i32
  }
  func.func @transform_7(%arg0: i32) -> (i32, i32) {
    %c0_i32 = arith.constant 0 : i32
    %c0_i32_0 = arith.constant 0 : i32
    %c0_i32_1 = arith.constant 0 : i32
    return %c0_i32, %c0_i32_0 : i32, i32
  }
  func.func @transform_8(%arg0: i32) -> (i32, i32) {
    %c0_i32 = arith.constant 0 : i32
    %c0_i32_0 = arith.constant 0 : i32
    %c0_i32_1 = arith.constant 0 : i32
    return %c0_i32, %c0_i32_0 : i32, i32
  }
  func.func @transform_9(%arg0: i32) -> (i32, i32) {
    %c0_i32 = arith.constant 0 : i32
    %c0_i32_0 = arith.constant 0 : i32
    %c0_i32_1 = arith.constant 0 : i32
    return %c0_i32, %c0_i32_0 : i32, i32
  }
  func.func @transform_10(%arg0: i32) -> (i32, i32) {
    %c0_i32 = arith.constant 0 : i32
    %c0_i32_0 = arith.constant 0 : i32
    %c0_i32_1 = arith.constant 0 : i32
    return %c0_i32, %c0_i32_0 : i32, i32
  }
  func.func @transform_11(%arg0: i32) -> (i32, i32) {
    %c0_i32 = arith.constant 0 : i32
    %c0_i32_0 = arith.constant 0 : i32
    return %arg0, %c0_i32 : i32, i32
  }
}

</mosaic_0001>

<llo_original>
// kernel: tpu_custom_call.1
$region0: #{tpu_custom_call.1}
  #allocation0 [shape = 'u32[]', space=smem, size = 0x4, offset = 0x4, fixed_abs, tag = 'smem constant byte address 0x4 - core index']
  #allocation1 [shape = 'u32[72,128]{1,0:T(1,128)}', space=vmem, size = 0x9000, scoped, tag = 'internal scratch']
  #allocation2 [shape = 'f32[1,1]{1,0:T(1,128)S(1)}', space=vmem, size = 0x200, scoped, tag = 'scoped memory for tpu_custom_call.1']
  %s0 = inlined_call_operand.vmem [shape: f32[256,32], index: 0, kind: input, shape index: {}]
  %s1 = inlined_call_operand.vmem [shape: bf16[32,1024], index: 1, kind: input, shape index: {}]
  %s2 = inlined_call_operand.vmem [shape: f32[1,1024], index: 2, kind: input, shape index: {}]
  %s3 = inlined_call_operand.hbm [shape: bf16[1024,128], index: 3, kind: input, shape index: {}]
  %s4 = inlined_call_operand.vmem [shape: f32[1,128], index: 4, kind: input, shape index: {}]
  %s5 = inlined_call_operand.vmem [shape: bf16[128,64], index: 5, kind: input, shape index: {}]
  %s6 = inlined_call_operand.vmem [shape: f32[1,64], index: 6, kind: input, shape index: {}]
  %s7 = inlined_call_operand.vmem [shape: bf16[64,16], index: 7, kind: input, shape index: {}]
  %s8 = inlined_call_operand.vmem [shape: f32[1,16], index: 8, kind: input, shape index: {}]
  %s9 = inlined_call_operand.vmem [shape: f32[1,16], index: 9, kind: input, shape index: {}]
  %s10 = inlined_call_operand.<no memory space> [shape: f32[1,1], index: 10, kind: input, shape index: {}]
  %s11 = inlined_call_operand.vmem [shape: f32[256,1], index: 11, kind: output, shape index: {}]
  %s12 = sld [smem:[#allocation0]]
  $region58: #{tpu_custom_call.1} parent=0
    _
  %s14 = ssub.s32 1, %s12
  %s15 = scalar_select 0, %s14, %s12
  %v16 = vstv %s10
  %17 = vst [vmem:[#allocation2] sm:$0x1] %v16
  $region1: #{tpu_custom_call.1} parent=0
    #allocation3 [shape = 'u8[262144]{0}', space=vmem, size = 0x40000, scoped, tag = 'input window, operand 3, single buffered']
    #allocation4 [shape = 's32[1]{0}', space=sflag, size = 0x4, scoped, tag = 'scoped memory for tpu_custom_call.1']
    %18 = vsyncpa [#allocation4], 0
    // Predicated region
    $region2: #{tpu_custom_call.1} parent=1 // pred_check
      _
    $region3: #{tpu_custom_call.1} parent=1 // pred_check_branch
      %20 = sbr.rel (0) target = $region5
    $region4: #{tpu_custom_call.1} parent=1 // pred_region
      _
    $region5: #{tpu_custom_call.1} parent=1 // pred_fallthru
      _
    // Predicated region
    $region6: #{tpu_custom_call.1} parent=1 // pred_check
      _
    $region7: #{tpu_custom_call.1} parent=1 // pred_check_branch
      %22 = sbr.rel (0) target = $region9
    $region8: #{tpu_custom_call.1} parent=1 // pred_region
      _
    $region9: #{tpu_custom_call.1} parent=1 // pred_fallthru
      _
    // Predicated region
    $region10: #{tpu_custom_call.1} parent=1 // pred_check
      _
    $region11: #{tpu_custom_call.1} parent=1 // pred_check_branch
      %24 = sbr.rel (0) target = $region13
    $region12: #{tpu_custom_call.1} parent=1 // pred_region
      _
    $region13: #{tpu_custom_call.1} parent=1 // pred_fallthru
      _
    // Predicated region
    $region14: #{tpu_custom_call.1} parent=1 // pred_check
      _
    $region15: #{tpu_custom_call.1} parent=1 // pred_check_branch
      %26 = sbr.rel (0) target = $region17
    $region16: #{tpu_custom_call.1} parent=1 // pred_region
      %28 = vsyncadd [#allocation4], 0
      %s29 = sshll.u32 %s3, 4
      %s30 = int_to_ptr.hbm [resolvable:$true] %s29
      %s31 = sshll.u32 [#allocation3], 4
      %s32 = int_to_ptr.vmem [resolvable:$true] %s31
      %37 = dma.hbm_to_vmem [thread:$0]  %s30, 8192, %s32, [#allocation4], 64, 64, 4
    $region17: #{tpu_custom_call.1} parent=1 // pred_fallthru
      _
    // Predicated region
    $region18: #{tpu_custom_call.1} parent=1 // pred_check
      _
    $region19: #{tpu_custom_call.1} parent=1 // pred_check_branch
      %39 = sbr.rel (0) target = $region21
    $region20: #{tpu_custom_call.1} parent=1 // pred_region
      _
    $region21: #{tpu_custom_call.1} parent=1 // pred_fallthru
      _
    // Predicated region
    $region22: #{tpu_custom_call.1} parent=1 // pred_check
      _
    $region23: #{tpu_custom_call.1} parent=1 // pred_check_branch
      %41 = sbr.rel (0) target = $region25
    $region24: #{tpu_custom_call.1} parent=1 // pred_region
      _
    $region25: #{tpu_custom_call.1} parent=1 // pred_fallthru
      _
    // Predicated region
    $region26: #{tpu_custom_call.1} parent=1 // pred_check
      _
    $region27: #{tpu_custom_call.1} parent=1 // pred_check_branch
      %43 = sbr.rel (0) target = $region29
    $region28: #{tpu_custom_call.1} parent=1 // pred_region
      _
    $region29: #{tpu_custom_call.1} parent=1 // pred_fallthru
      _
    // Predicated region
    $region30: #{tpu_custom_call.1} parent=1 // pred_check
      _
    $region31: #{tpu_custom_call.1} parent=1 // pred_check_branch
      %45 = sbr.rel (0) target = $region33
    $region32: #{tpu_custom_call.1} parent=1 // pred_region
      _
    $region33: #{tpu_custom_call.1} parent=1 // pred_fallthru
      _
    // Predicated region
    $region34: #{tpu_custom_call.1} parent=1 // pred_check
      _
    $region35: #{tpu_custom_call.1} parent=1 // pred_check_branch
      %47 = sbr.rel (0) target = $region37
    $region36: #{tpu_custom_call.1} parent=1 // pred_region
      _
    $region37: #{tpu_custom_call.1} parent=1 // pred_fallthru
      _
    // Predicated region
    $region38: #{tpu_custom_call.1} parent=1 // pred_check
      _
    $region39: #{tpu_custom_call.1} parent=1 // pred_check_branch
      %49 = sbr.rel (0) target = $region41
    $region40: #{tpu_custom_call.1} parent=1 // pred_region
      _
    $region41: #{tpu_custom_call.1} parent=1 // pred_fallthru
      _
    // Predicated region
    $region42: #{tpu_custom_call.1} parent=1 // pred_check
      _
    $region43: #{tpu_custom_call.1} parent=1 // pred_check_branch
      %51 = sbr.rel (0) target = $region45
    $region44: #{tpu_custom_call.1} parent=1 // pred_region
      _
    $region45: #{tpu_custom_call.1} parent=1 // pred_fallthru
      _
    // Predicated region
    $region46: #{tpu_custom_call.1} parent=1 // pred_check
      _
    $region47: #{tpu_custom_call.1} parent=1 // pred_check_branch
      %53 = sbr.rel (0) target = $region49
    $region48: #{tpu_custom_call.1} parent=1 // pred_region
      %55 = dma.done [#allocation4], 8192
    $region49: #{tpu_custom_call.1} parent=1 // pred_fallthru
      _
    %v57 = vld [vmem:[%s0] sm:$0xff]
    %v58 = vld [vmem:[%s0 + $0x8] sm:$0xff]
    %v59 = vld [vmem:[%s0 + $0x10] sm:$0xff]
    %v60 = vld [vmem:[%s0 + $0x18] sm:$0xff]
    %v61 = vld [vmem:[%s0 + $0x20] sm:$0xff]
    %v62 = vld [vmem:[%s0 + $0x28] sm:$0xff]
    %v63 = vld [vmem:[%s0 + $0x30] sm:$0xff]
    %v64 = vld [vmem:[%s0 + $0x38] sm:$0xff]
    %v65 = vld [vmem:[%s0 + $0x40] sm:$0xff]
    %v66 = vld [vmem:[%s0 + $0x48] sm:$0xff]
    %v67 = vld [vmem:[%s0 + $0x50] sm:$0xff]
    %v68 = vld [vmem:[%s0 + $0x58] sm:$0xff]
    %v69 = vld [vmem:[%s0 + $0x60] sm:$0xff]
    %v70 = vld [vmem:[%s0 + $0x68] sm:$0xff]
    %v71 = vld [vmem:[%s0 + $0x70] sm:$0xff]
    %v72 = vld [vmem:[%s0 + $0x78] sm:$0xff]
    %v73 = vld [vmem:[%s0 + $0x80] sm:$0xff]
    %v74 = vld [vmem:[%s0 + $0x88] sm:$0xff]
    %v75 = vld [vmem:[%s0 + $0x90] sm:$0xff]
    %v76 = vld [vmem:[%s0 + $0x98] sm:$0xff]
    %v77 = vld [vmem:[%s0 + $0xa0] sm:$0xff]
    %v78 = vld [vmem:[%s0 + $0xa8] sm:$0xff]
    %v79 = vld [vmem:[%s0 + $0xb0] sm:$0xff]
    %v80 = vld [vmem:[%s0 + $0xb8] sm:$0xff]
    %v81 = vld [vmem:[%s0 + $0xc0] sm:$0xff]
    %v82 = vld [vmem:[%s0 + $0xc8] sm:$0xff]
    %v83 = vld [vmem:[%s0 + $0xd0] sm:$0xff]
    %v84 = vld [vmem:[%s0 + $0xd8] sm:$0xff]
    %v85 = vld [vmem:[%s0 + $0xe0] sm:$0xff]
    %v86 = vld [vmem:[%s0 + $0xe8] sm:$0xff]
    %v87 = vld [vmem:[%s0 + $0xf0] sm:$0xff]
    %v88 = vld [vmem:[%s0 + $0xf8] sm:$0xff]
    %v89 = vpack.c.bf16 %v58, %v57
    %v90 = vpack.c.bf16 %v60, %v59
    %v91 = vpack.c.bf16 %v62, %v61
    %v92 = vpack.c.bf16 %v64, %v63
    %v93 = vpack.c.bf16 %v66, %v65
    %v94 = vpack.c.bf16 %v68, %v67
    %v95 = vpack.c.bf16 %v70, %v69
    %v96 = vpack.c.bf16 %v72, %v71
    %v97 = vpack.c.bf16 %v74, %v73
    %v98 = vpack.c.bf16 %v76, %v75
    %v99 = vpack.c.bf16 %v78, %v77
    %v100 = vpack.c.bf16 %v80, %v79
    %v101 = vpack.c.bf16 %v82, %v81
    %v102 = vpack.c.bf16 %v84, %v83
    %v103 = vpack.c.bf16 %v86, %v85
    %v104 = vpack.c.bf16 %v88, %v87
    %v105 = vld [vmem:[%s1] sm:$0xff]
    %v106 = vld [vmem:[%s1 + $0x8] sm:$0xff]
    %v107 = vld [vmem:[%s1 + $0x10] sm:$0xff]
    %v108 = vld [vmem:[%s1 + $0x18] sm:$0xff]
    %v109 = vld [vmem:[%s1 + $0x20] sm:$0xff]
    %v110 = vld [vmem:[%s1 + $0x28] sm:$0xff]
    %v111 = vld [vmem:[%s1 + $0x30] sm:$0xff]
    %v112 = vld [vmem:[%s1 + $0x38] sm:$0xff]
    %v113 = vld [vmem:[%s1 + $0x40] sm:$0xff]
    %v114 = vld [vmem:[%s1 + $0x48] sm:$0xff]
    %v115 = vld [vmem:[%s1 + $0x50] sm:$0xff]
    %v116 = vld [vmem:[%s1 + $0x58] sm:$0xff]
    %v117 = vld [vmem:[%s1 + $0x60] sm:$0xff]
    %v118 = vld [vmem:[%s1 + $0x68] sm:$0xff]
    %v119 = vld [vmem:[%s1 + $0x70] sm:$0xff]
    %v120 = vld [vmem:[%s1 + $0x78] sm:$0xff]
    %v121 = vld [vmem:[%s2] sm:$0xff]
    %v123 = vperm.slane %v121, 0
    %v124 = vperm.slane %v121, 1
    %v125 = vperm.slane %v121, 2
    %v126 = vperm.slane %v121, 3
    %v127 = vperm.slane %v121, 4
    %v128 = vperm.slane %v121, 5
    %v129 = vperm.slane %v121, 6
    %v130 = vperm.slane %v121, 7
    %v155 = vunpack.c.l.b16 %v105
    %v156 = vunpack.c.h.b16 %v105
    %v157 = vunpack.c.l.b16 %v106
    %v158 = vunpack.c.h.b16 %v106
    %v159 = vunpack.c.l.b16 %v107
    %v160 = vunpack.c.h.b16 %v107
    %v161 = vunpack.c.l.b16 %v108
    %v162 = vunpack.c.h.b16 %v108
    %v163 = vunpack.c.l.b16 %v109
    %v164 = vunpack.c.h.b16 %v109
    %v165 = vunpack.c.l.b16 %v110
    %v166 = vunpack.c.h.b16 %v110
    %v167 = vunpack.c.l.b16 %v111
    %v168 = vunpack.c.h.b16 %v111
    %v169 = vunpack.c.l.b16 %v112
    %v170 = vunpack.c.h.b16 %v112
    %v171 = vunpack.c.l.b16 %v113
    %v172 = vunpack.c.h.b16 %v113
    %v173 = vunpack.c.l.b16 %v114
    %v174 = vunpack.c.h.b16 %v114
    %v175 = vunpack.c.l.b16 %v115
    %v176 = vunpack.c.h.b16 %v115
    %v177 = vunpack.c.l.b16 %v116
    %v178 = vunpack.c.h.b16 %v116
    %v179 = vunpack.c.l.b16 %v117
    %v180 = vunpack.c.h.b16 %v117
    %v181 = vunpack.c.l.b16 %v118
    %v182 = vunpack.c.h.b16 %v118
    %v183 = vunpack.c.l.b16 %v119
    %v184 = vunpack.c.h.b16 %v119
    %v185 = vunpack.c.l.b16 %v120
    %v186 = vunpack.c.h.b16 %v120
    %v187 = vpack.c.b16 %v163, %v155
    %v188 = vpack.c.b16 %v164, %v156
    %v189 = vpack.c.b16 %v165, %v157
    %v190 = vpack.c.b16 %v166, %v158
    %v191 = vpack.c.b16 %v167, %v159
    %v192 = vpack.c.b16 %v168, %v160
    %v193 = vpack.c.b16 %v169, %v161
    %v194 = vpack.c.b16 %v170, %v162
    %v195 = vpack.c.b16 %v179, %v171
    %v196 = vpack.c.b16 %v180, %v172
    %v197 = vpack.c.b16 %v181, %v173
    %v198 = vpack.c.b16 %v182, %v174
    %v199 = vpack.c.b16 %v183, %v175
    %v200 = vpack.c.b16 %v184, %v176
    %v201 = vpack.c.b16 %v185, %v177
    %v202 = vpack.c.b16 %v186, %v178
    %vm219 = vcmask 261120
    %v221 = vsel %vm219, %v89, 0
    %v224 = vsel %vm219, %v90, 0
    %v227 = vsel %vm219, %v91, 0
    %v230 = vsel %vm219, %v92, 0
    %v233 = vsel %vm219, %v93, 0
    %v236 = vsel %vm219, %v94, 0
    %v239 = vsel %vm219, %v95, 0
    %v242 = vsel %vm219, %v96, 0
    %v245 = vsel %vm219, %v97, 0
    %v248 = vsel %vm219, %v98, 0
    %v251 = vsel %vm219, %v99, 0
    %v254 = vsel %vm219, %v100, 0
    %v257 = vsel %vm219, %v101, 0
    %v260 = vsel %vm219, %v102, 0
    %v263 = vsel %vm219, %v103, 0
    %v266 = vsel %vm219, %v104, 0
    %268 = vmatpush.bf16.msra.mxu0 0
    %269 = vmatpush.bf16.msra.mxu0 0
    %270 = vmatpush.bf16.msra.mxu0 0
    %271 = vmatpush.bf16.msra.mxu0 0
    %272 = vmatpush.bf16.msra.mxu0 0
    %273 = vmatpush.bf16.msra.mxu0 0
    %274 = vmatpush.bf16.msra.mxu0 %v195
    %275 = vmatpush.bf16.msra.mxu0 %v187
    %276 = vmatmul.bf16.gmra.mxu0 %v221
    %v277 = vpop.f32.mrf.mxu0
    %v278 = vadd.f32 %v123, %v277
    %v279 = vpop.f32.mrf.mxu0
    %v280 = vadd.f32 %v123, %v279
    %281 = vmatmul.bf16.gmra.mxu0 %v224
    %v282 = vpop.f32.mrf.mxu0
    %v283 = vadd.f32 %v123, %v282
    %v284 = vpop.f32.mrf.mxu0
    %v285 = vadd.f32 %v123, %v284
    %286 = vmatmul.bf16.gmra.mxu0 %v227
    %v287 = vpop.f32.mrf.mxu0
    %v288 = vadd.f32 %v123, %v287
    %v289 = vpop.f32.mrf.mxu0
    %v290 = vadd.f32 %v123, %v289
    %291 = vmatmul.bf16.gmra.mxu0 %v230
    %v292 = vpop.f32.mrf.mxu0
    %v293 = vadd.f32 %v123, %v292
    %v294 = vpop.f32.mrf.mxu0
    %v295 = vadd.f32 %v123, %v294
    %296 = vmatmul.bf16.gmra.mxu0 %v233
    %v297 = vpop.f32.mrf.mxu0
    %v298 = vadd.f32 %v123, %v297
    %v299 = vpop.f32.mrf.mxu0
    %v300 = vadd.f32 %v123, %v299
    %301 = vmatmul.bf16.gmra.mxu0 %v236
    %v302 = vpop.f32.mrf.mxu0
    %v303 = vadd.f32 %v123, %v302
    %v304 = vpop.f32.mrf.mxu0
    %v305 = vadd.f32 %v123, %v304
    %306 = vmatmul.bf16.gmra.mxu0 %v239
    %v307 = vpop.f32.mrf.mxu0
    %v308 = vadd.f32 %v123, %v307
    %v309 = vpop.f32.mrf.mxu0
    %v310 = vadd.f32 %v123, %v309
    %311 = vmatmul.bf16.gmra.mxu0 %v242
    %v312 = vpop.f32.mrf.mxu0
    %v313 = vadd.f32 %v123, %v312
    %v314 = vpop.f32.mrf.mxu0
    %v315 = vadd.f32 %v123, %v314
    %316 = vmatmul.bf16.gmra.mxu0 %v245
    %v317 = vpop.f32.mrf.mxu0
    %v318 = vadd.f32 %v123, %v317
    %v319 = vpop.f32.mrf.mxu0
    %v320 = vadd.f32 %v123, %v319
    %321 = vmatmul.bf16.gmra.mxu0 %v248
    %v322 = vpop.f32.mrf.mxu0
    %v323 = vadd.f32 %v123, %v322
    %v324 = vpop.f32.mrf.mxu0
    %v325 = vadd.f32 %v123, %v324
    %326 = vmatmul.bf16.gmra.mxu0 %v251
    %v327 = vpop.f32.mrf.mxu0
    %v328 = vadd.f32 %v123, %v327
    %v329 = vpop.f32.mrf.mxu0
    %v330 = vadd.f32 %v123, %v329
    %331 = vmatmul.bf16.gmra.mxu0 %v254
    %v332 = vpop.f32.mrf.mxu0
    %v333 = vadd.f32 %v123, %v332
    %v334 = vpop.f32.mrf.mxu0
    %v335 = vadd.f32 %v123, %v334
    %336 = vmatmul.bf16.gmra.mxu0 %v257
    %v337 = vpop.f32.mrf.mxu0
    %v338 = vadd.f32 %v123, %v337
    %v339 = vpop.f32.mrf.mxu0
    %v340 = vadd.f32 %v123, %v339
    %341 = vmatmul.bf16.gmra.mxu0 %v260
    %v342 = vpop.f32.mrf.mxu0
    %v343 = vadd.f32 %v123, %v342
    %v344 = vpop.f32.mrf.mxu0
    %v345 = vadd.f32 %v123, %v344
    %346 = vmatmul.bf16.gmra.mxu0 %v263
    %v347 = vpop.f32.mrf.mxu0
    %v348 = vadd.f32 %v123, %v347
    %v349 = vpop.f32.mrf.mxu0
    %v350 = vadd.f32 %v123, %v349
    %351 = vmatmul.bf16.gmra.mxu0 %v266
    %v352 = vpop.f32.mrf.mxu0
    %v353 = vadd.f32 %v123, %v352
    %v354 = vpop.f32.mrf.mxu0
    %v355 = vadd.f32 %v123, %v354
    %356 = vdwg.mxu0
    %357 = vmatpush.bf16.msra.mxu0 0
    %358 = vmatpush.bf16.msra.mxu0 0
    %359 = vmatpush.bf16.msra.mxu0 0
    %360 = vmatpush.bf16.msra.mxu0 0
    %361 = vmatpush.bf16.msra.mxu0 0
    %362 = vmatpush.bf16.msra.mxu0 0
    %363 = vmatpush.bf16.msra.mxu0 %v196
    %364 = vmatpush.bf16.msra.mxu0 %v188
    %365 = vmatmul.bf16.gmra.mxu0 %v221
    %v366 = vpop.f32.mrf.mxu0
    %v367 = vadd.f32 %v124, %v366
    %v368 = vpop.f32.mrf.mxu0
    %v369 = vadd.f32 %v124, %v368
    %370 = vmatmul.bf16.gmra.mxu0 %v224
    %v371 = vpop.f32.mrf.mxu0
    %v372 = vadd.f32 %v124, %v371
    %v373 = vpop.f32.mrf.mxu0
    %v374 = vadd.f32 %v124, %v373
    %375 = vmatmul.bf16.gmra.mxu0 %v227
    %v376 = vpop.f32.mrf.mxu0
    %v377 = vadd.f32 %v124, %v376
    %v378 = vpop.f32.mrf.mxu0
    %v379 = vadd.f32 %v124, %v378
    %380 = vmatmul.bf16.gmra.mxu0 %v230
    %v381 = vpop.f32.mrf.mxu0
    %v382 = vadd.f32 %v124, %v381
    %v383 = vpop.f32.mrf.mxu0
    %v384 = vadd.f32 %v124, %v383
    %385 = vmatmul.bf16.gmra.mxu0 %v233
    %v386 = vpop.f32.mrf.mxu0
    %v387 = vadd.f32 %v124, %v386
    %v388 = vpop.f32.mrf.mxu0
    %v389 = vadd.f32 %v124, %v388
    %390 = vmatmul.bf16.gmra.mxu0 %v236
    %v391 = vpop.f32.mrf.mxu0
    %v392 = vadd.f32 %v124, %v391
    %v393 = vpop.f32.mrf.mxu0
    %v394 = vadd.f32 %v124, %v393
    %395 = vmatmul.bf16.gmra.mxu0 %v239
    %v396 = vpop.f32.mrf.mxu0
    %v397 = vadd.f32 %v124, %v396
    %v398 = vpop.f32.mrf.mxu0
    %v399 = vadd.f32 %v124, %v398
    %400 = vmatmul.bf16.gmra.mxu0 %v242
    %v401 = vpop.f32.mrf.mxu0
    %v402 = vadd.f32 %v124, %v401
    %v403 = vpop.f32.mrf.mxu0
    %v404 = vadd.f32 %v124, %v403
    %405 = vmatmul.bf16.gmra.mxu0 %v245
    %v406 = vpop.f32.mrf.mxu0
    %v407 = vadd.f32 %v124, %v406
    %v408 = vpop.f32.mrf.mxu0
    %v409 = vadd.f32 %v124, %v408
    %410 = vmatmul.bf16.gmra.mxu0 %v248
    %v411 = vpop.f32.mrf.mxu0
    %v412 = vadd.f32 %v124, %v411
    %v413 = vpop.f32.mrf.mxu0
    %v414 = vadd.f32 %v124, %v413
    %415 = vmatmul.bf16.gmra.mxu0 %v251
    %v416 = vpop.f32.mrf.mxu0
    %v417 = vadd.f32 %v124, %v416
    %v418 = vpop.f32.mrf.mxu0
    %v419 = vadd.f32 %v124, %v418
    %420 = vmatmul.bf16.gmra.mxu0 %v254
    %v421 = vpop.f32.mrf.mxu0
    %v422 = vadd.f32 %v124, %v421
    %v423 = vpop.f32.mrf.mxu0
    %v424 = vadd.f32 %v124, %v423
    %425 = vmatmul.bf16.gmra.mxu0 %v257
    %v426 = vpop.f32.mrf.mxu0
    %v427 = vadd.f32 %v124, %v426
    %v428 = vpop.f32.mrf.mxu0
    %v429 = vadd.f32 %v124, %v428
    %430 = vmatmul.bf16.gmra.mxu0 %v260
    %v431 = vpop.f32.mrf.mxu0
    %v432 = vadd.f32 %v124, %v431
    %v433 = vpop.f32.mrf.mxu0
    %v434 = vadd.f32 %v124, %v433
    %435 = vmatmul.bf16.gmra.mxu0 %v263
    %v436 = vpop.f32.mrf.mxu0
    %v437 = vadd.f32 %v124, %v436
    %v438 = vpop.f32.mrf.mxu0
    %v439 = vadd.f32 %v124, %v438
    %440 = vmatmul.bf16.gmra.mxu0 %v266
    %v441 = vpop.f32.mrf.mxu0
    %v442 = vadd.f32 %v124, %v441
    %v443 = vpop.f32.mrf.mxu0
    %v444 = vadd.f32 %v124, %v443
    %445 = vdwg.mxu0
    %446 = vmatpush.bf16.msra.mxu0 0
    %447 = vmatpush.bf16.msra.mxu0 0
    %448 = vmatpush.bf16.msra.mxu0 0
    %449 = vmatpush.bf16.msra.mxu0 0
    %450 = vmatpush.bf16.msra.mxu0 0
    %451 = vmatpush.bf16.msra.mxu0 0
    %452 = vmatpush.bf16.msra.mxu0 %v197
    %453 = vmatpush.bf16.msra.mxu0 %v189
    %454 = vmatmul.bf16.gmra.mxu0 %v221
    %v455 = vpop.f32.mrf.mxu0
    %v456 = vadd.f32 %v125, %v455
    %v457 = vpop.f32.mrf.mxu0
    %v458 = vadd.f32 %v125, %v457
    %459 = vmatmul.bf16.gmra.mxu0 %v224
    %v460 = vpop.f32.mrf.mxu0
    %v461 = vadd.f32 %v125, %v460
    %v462 = vpop.f32.mrf.mxu0
    %v463 = vadd.f32 %v125, %v462
    %464 = vmatmul.bf16.gmra.mxu0 %v227
    %v465 = vpop.f32.mrf.mxu0
    %v466 = vadd.f32 %v125, %v465
    %v467 = vpop.f32.mrf.mxu0
    %v468 = vadd.f32 %v125, %v467
    %469 = vmatmul.bf16.gmra.mxu0 %v230
    %v470 = vpop.f32.mrf.mxu0
    %v471 = vadd.f32 %v125, %v470
    %v472 = vpop.f32.mrf.mxu0
    %v473 = vadd.f32 %v125, %v472
    %474 = vmatmul.bf16.gmra.mxu0 %v233
    %v475 = vpop.f32.mrf.mxu0
    %v476 = vadd.f32 %v125, %v475
    %v477 = vpop.f32.mrf.mxu0
    %v478 = vadd.f32 %v125, %v477
    %479 = vmatmul.bf16.gmra.mxu0 %v236
    %v480 = vpop.f32.mrf.mxu0
    %v481 = vadd.f32 %v125, %v480
    %v482 = vpop.f32.mrf.mxu0
    %v483 = vadd.f32 %v125, %v482
    %484 = vmatmul.bf16.gmra.mxu0 %v239
    %v485 = vpop.f32.mrf.mxu0
    %v486 = vadd.f32 %v125, %v485
    %v487 = vpop.f32.mrf.mxu0
    %v488 = vadd.f32 %v125, %v487
    %489 = vmatmul.bf16.gmra.mxu0 %v242
    %v490 = vpop.f32.mrf.mxu0
    %v491 = vadd.f32 %v125, %v490
    %v492 = vpop.f32.mrf.mxu0
    %v493 = vadd.f32 %v125, %v492
    %494 = vmatmul.bf16.gmra.mxu0 %v245
    %v495 = vpop.f32.mrf.mxu0
    %v496 = vadd.f32 %v125, %v495
    %v497 = vpop.f32.mrf.mxu0
    %v498 = vadd.f32 %v125, %v497
    %499 = vmatmul.bf16.gmra.mxu0 %v248
    %v500 = vpop.f32.mrf.mxu0
    %v501 = vadd.f32 %v125, %v500
    %v502 = vpop.f32.mrf.mxu0
    %v503 = vadd.f32 %v125, %v502
    %504 = vmatmul.bf16.gmra.mxu0 %v251
    %v505 = vpop.f32.mrf.mxu0
    %v506 = vadd.f32 %v125, %v505
    %v507 = vpop.f32.mrf.mxu0
    %v508 = vadd.f32 %v125, %v507
    %509 = vmatmul.bf16.gmra.mxu0 %v254
    %v510 = vpop.f32.mrf.mxu0
    %v511 = vadd.f32 %v125, %v510
    %v512 = vpop.f32.mrf.mxu0
    %v513 = vadd.f32 %v125, %v512
    %514 = vmatmul.bf16.gmra.mxu0 %v257
    %v515 = vpop.f32.mrf.mxu0
    %v516 = vadd.f32 %v125, %v515
    %v517 = vpop.f32.mrf.mxu0
    %v518 = vadd.f32 %v125, %v517
    %519 = vmatmul.bf16.gmra.mxu0 %v260
    %v520 = vpop.f32.mrf.mxu0
    %v521 = vadd.f32 %v125, %v520
    %v522 = vpop.f32.mrf.mxu0
    %v523 = vadd.f32 %v125, %v522
    %524 = vmatmul.bf16.gmra.mxu0 %v263
    %v525 = vpop.f32.mrf.mxu0
    %v526 = vadd.f32 %v125, %v525
    %v527 = vpop.f32.mrf.mxu0
    %v528 = vadd.f32 %v125, %v527
    %529 = vmatmul.bf16.gmra.mxu0 %v266
    %v530 = vpop.f32.mrf.mxu0
    %v531 = vadd.f32 %v125, %v530
    %v532 = vpop.f32.mrf.mxu0
    %v533 = vadd.f32 %v125, %v532
    %534 = vdwg.mxu0
    %535 = vmatpush.bf16.msra.mxu0 0
    %536 = vmatpush.bf16.msra.mxu0 0
    %537 = vmatpush.bf16.msra.mxu0 0
    %538 = vmatpush.bf16.msra.mxu0 0
    %539 = vmatpush.bf16.msra.mxu0 0
    %540 = vmatpush.bf16.msra.mxu0 0
    %541 = vmatpush.bf16.msra.mxu0 %v198
    %542 = vmatpush.bf16.msra.mxu0 %v190
    %543 = vmatmul.bf16.gmra.mxu0 %v221
    %v544 = vpop.f32.mrf.mxu0
    %v545 = vadd.f32 %v126, %v544
    %v546 = vpop.f32.mrf.mxu0
    %v547 = vadd.f32 %v126, %v546
    %548 = vmatmul.bf16.gmra.mxu0 %v224
    %v549 = vpop.f32.mrf.mxu0
    %v550 = vadd.f32 %v126, %v549
    %v551 = vpop.f32.mrf.mxu0
    %v552 = vadd.f32 %v126, %v551
    %553 = vmatmul.bf16.gmra.mxu0 %v227
    %v554 = vpop.f32.mrf.mxu0
    %v555 = vadd.f32 %v126, %v554
    %v556 = vpop.f32.mrf.mxu0
    %v557 = vadd.f32 %v126, %v556
    %558 = vmatmul.bf16.gmra.mxu0 %v230
    %v559 = vpop.f32.mrf.mxu0
    %v560 = vadd.f32 %v126, %v559
    %v561 = vpop.f32.mrf.mxu0
    %v562 = vadd.f32 %v126, %v561
    %563 = vmatmul.bf16.gmra.mxu0 %v233
    %v564 = vpop.f32.mrf.mxu0
    %v565 = vadd.f32 %v126, %v564
    %v566 = vpop.f32.mrf.mxu0
    %v567 = vadd.f32 %v126, %v566
    %568 = vmatmul.bf16.gmra.mxu0 %v236
    %v569 = vpop.f32.mrf.mxu0
    %v570 = vadd.f32 %v126, %v569
    %v571 = vpop.f32.mrf.mxu0
    %v572 = vadd.f32 %v126, %v571
    %573 = vmatmul.bf16.gmra.mxu0 %v239
    %v574 = vpop.f32.mrf.mxu0
    %v575 = vadd.f32 %v126, %v574
    %v576 = vpop.f32.mrf.mxu0
    %v577 = vadd.f32 %v126, %v576
    %578 = vmatmul.bf16.gmra.mxu0 %v242
    %v579 = vpop.f32.mrf.mxu0
    %v580 = vadd.f32 %v126, %v579
    %v581 = vpop.f32.mrf.mxu0
    %v582 = vadd.f32 %v126, %v581
    %583 = vmatmul.bf16.gmra.mxu0 %v245
    %v584 = vpop.f32.mrf.mxu0
    %v585 = vadd.f32 %v126, %v584
    %v586 = vpop.f32.mrf.mxu0
    %v587 = vadd.f32 %v126, %v586
    %588 = vmatmul.bf16.gmra.mxu0 %v248
    %v589 = vpop.f32.mrf.mxu0
    %v590 = vadd.f32 %v126, %v589
    %v591 = vpop.f32.mrf.mxu0
    %v592 = vadd.f32 %v126, %v591
    %593 = vmatmul.bf16.gmra.mxu0 %v251
    %v594 = vpop.f32.mrf.mxu0
    %v595 = vadd.f32 %v126, %v594
    %v596 = vpop.f32.mrf.mxu0
    %v597 = vadd.f32 %v126, %v596
    %598 = vmatmul.bf16.gmra.mxu0 %v254
    %v599 = vpop.f32.mrf.mxu0
    %v600 = vadd.f32 %v126, %v599
    %v601 = vpop.f32.mrf.mxu0
    %v602 = vadd.f32 %v126, %v601
    %603 = vmatmul.bf16.gmra.mxu0 %v257
    %v604 = vpop.f32.mrf.mxu0
    %v605 = vadd.f32 %v126, %v604
    %v606 = vpop.f32.mrf.mxu0
    %v607 = vadd.f32 %v126, %v606
    %608 = vmatmul.bf16.gmra.mxu0 %v260
    %v609 = vpop.f32.mrf.mxu0
    %v610 = vadd.f32 %v126, %v609
    %v611 = vpop.f32.mrf.mxu0
    %v612 = vadd.f32 %v126, %v611
    %613 = vmatmul.bf16.gmra.mxu0 %v263
    %v614 = vpop.f32.mrf.mxu0
    %v615 = vadd.f32 %v126, %v614
    %v616 = vpop.f32.mrf.mxu0
    %v617 = vadd.f32 %v126, %v616
    %618 = vmatmul.bf16.gmra.mxu0 %v266
    %v619 = vpop.f32.mrf.mxu0
    %v620 = vadd.f32 %v126, %v619
    %v621 = vpop.f32.mrf.mxu0
    %v622 = vadd.f32 %v126, %v621
    %623 = vdwg.mxu0
    %624 = vmatpush.bf16.msra.mxu0 0
    %625 = vmatpush.bf16.msra.mxu0 0
    %626 = vmatpush.bf16.msra.mxu0 0
    %627 = vmatpush.bf16.msra.mxu0 0
    %628 = vmatpush.bf16.msra.mxu0 0
    %629 = vmatpush.bf16.msra.mxu0 0
    %630 = vmatpush.bf16.msra.mxu0 %v199
    %631 = vmatpush.bf16.msra.mxu0 %v191
    %632 = vmatmul.bf16.gmra.mxu0 %v221
    %v633 = vpop.f32.mrf.mxu0
    %v634 = vadd.f32 %v127, %v633
    %v635 = vpop.f32.mrf.mxu0
    %v636 = vadd.f32 %v127, %v635
    %637 = vmatmul.bf16.gmra.mxu0 %v224
    %v638 = vpop.f32.mrf.mxu0
    %v639 = vadd.f32 %v127, %v638
    %v640 = vpop.f32.mrf.mxu0
    %v641 = vadd.f32 %v127, %v640
    %642 = vmatmul.bf16.gmra.mxu0 %v227
    %v643 = vpop.f32.mrf.mxu0
    %v644 = vadd.f32 %v127, %v643
    %v645 = vpop.f32.mrf.mxu0
    %v646 = vadd.f32 %v127, %v645
    %647 = vmatmul.bf16.gmra.mxu0 %v230
    %v648 = vpop.f32.mrf.mxu0
    %v649 = vadd.f32 %v127, %v648
    %v650 = vpop.f32.mrf.mxu0
    %v651 = vadd.f32 %v127, %v650
    %652 = vmatmul.bf16.gmra.mxu0 %v233
    %v653 = vpop.f32.mrf.mxu0
    %v654 = vadd.f32 %v127, %v653
    %v655 = vpop.f32.mrf.mxu0
    %v656 = vadd.f32 %v127, %v655
    %657 = vmatmul.bf16.gmra.mxu0 %v236
    %v658 = vpop.f32.mrf.mxu0
    %v659 = vadd.f32 %v127, %v658
    %v660 = vpop.f32.mrf.mxu0
    %v661 = vadd.f32 %v127, %v660
    %662 = vmatmul.bf16.gmra.mxu0 %v239
    %v663 = vpop.f32.mrf.mxu0
    %v664 = vadd.f32 %v127, %v663
    %v665 = vpop.f32.mrf.mxu0
    %v666 = vadd.f32 %v127, %v665
    %667 = vmatmul.bf16.gmra.mxu0 %v242
    %v668 = vpop.f32.mrf.mxu0
    %v669 = vadd.f32 %v127, %v668
    %v670 = vpop.f32.mrf.mxu0
    %v671 = vadd.f32 %v127, %v670
    %672 = vmatmul.bf16.gmra.mxu0 %v245
    %v673 = vpop.f32.mrf.mxu0
    %v674 = vadd.f32 %v127, %v673
    %v675 = vpop.f32.mrf.mxu0
    %v676 = vadd.f32 %v127, %v675
    %677 = vmatmul.bf16.gmra.mxu0 %v248
    %v678 = vpop.f32.mrf.mxu0
    %v679 = vadd.f32 %v127, %v678
    %v680 = vpop.f32.mrf.mxu0
    %v681 = vadd.f32 %v127, %v680
    %682 = vmatmul.bf16.gmra.mxu0 %v251
    %v683 = vpop.f32.mrf.mxu0
    %v684 = vadd.f32 %v127, %v683
    %v685 = vpop.f32.mrf.mxu0
    %v686 = vadd.f32 %v127, %v685
    %687 = vmatmul.bf16.gmra.mxu0 %v254
    %v688 = vpop.f32.mrf.mxu0
    %v689 = vadd.f32 %v127, %v688
    %v690 = vpop.f32.mrf.mxu0
    %v691 = vadd.f32 %v127, %v690
    %692 = vmatmul.bf16.gmra.mxu0 %v257
    %v693 = vpop.f32.mrf.mxu0
    %v694 = vadd.f32 %v127, %v693
    %v695 = vpop.f32.mrf.mxu0
    %v696 = vadd.f32 %v127, %v695
    %697 = vmatmul.bf16.gmra.mxu0 %v260
    %v698 = vpop.f32.mrf.mxu0
    %v699 = vadd.f32 %v127, %v698
    %v700 = vpop.f32.mrf.mxu0
    %v701 = vadd.f32 %v127, %v700
    %702 = vmatmul.bf16.gmra.mxu0 %v263
    %v703 = vpop.f32.mrf.mxu0
    %v704 = vadd.f32 %v127, %v703
    %v705 = vpop.f32.mrf.mxu0
    %v706 = vadd.f32 %v127, %v705
    %707 = vmatmul.bf16.gmra.mxu0 %v266
    %v708 = vpop.f32.mrf.mxu0
    %v709 = vadd.f32 %v127, %v708
    %v710 = vpop.f32.mrf.mxu0
    %v711 = vadd.f32 %v127, %v710
    %712 = vdwg.mxu0
    %713 = vmatpush.bf16.msra.mxu0 0
    %714 = vmatpush.bf16.msra.mxu0 0
    %715 = vmatpush.bf16.msra.mxu0 0
    %716 = vmatpush.bf16.msra.mxu0 0
    %717 = vmatpush.bf16.msra.mxu0 0
    %718 = vmatpush.bf16.msra.mxu0 0
    %719 = vmatpush.bf16.msra.mxu0 %v200
    %720 = vmatpush.bf16.msra.mxu0 %v192
    %721 = vmatmul.bf16.gmra.mxu0 %v221
    %v722 = vpop.f32.mrf.mxu0
    %v723 = vadd.f32 %v128, %v722
    %v724 = vpop.f32.mrf.mxu0
    %v725 = vadd.f32 %v128, %v724
    %726 = vmatmul.bf16.gmra.mxu0 %v224
    %v727 = vpop.f32.mrf.mxu0
    %v728 = vadd.f32 %v128, %v727
    %v729 = vpop.f32.mrf.mxu0
    %v730 = vadd.f32 %v128, %v729
    %731 = vmatmul.bf16.gmra.mxu0 %v227
    %v732 = vpop.f32.mrf.mxu0
    %v733 = vadd.f32 %v128, %v732
    %v734 = vpop.f32.mrf.mxu0
    %v735 = vadd.f32 %v128, %v734
    %736 = vmatmul.bf16.gmra.mxu0 %v230
    %v737 = vpop.f32.mrf.mxu0
    %v738 = vadd.f32 %v128, %v737
    %v739 = vpop.f32.mrf.mxu0
    %v740 = vadd.f32 %v128, %v739
    %741 = vmatmul.bf16.gmra.mxu0 %v233
    %v742 = vpop.f32.mrf.mxu0
    %v743 = vadd.f32 %v128, %v742
    %v744 = vpop.f32.mrf.mxu0
    %v745 = vadd.f32 %v128, %v744
    %746 = vmatmul.bf16.gmra.mxu0 %v236
    %v747 = vpop.f32.mrf.mxu0
    %v748 = vadd.f32 %v128, %v747
    %v749 = vpop.f32.mrf.mxu0
    %v750 = vadd.f32 %v128, %v749
    %751 = vmatmul.bf16.gmra.mxu0 %v239
    %v752 = vpop.f32.mrf.mxu0
    %v753 = vadd.f32 %v128, %v752
    %v754 = vpop.f32.mrf.mxu0
    %v755 = vadd.f32 %v128, %v754
    %756 = vmatmul.bf16.gmra.mxu0 %v242
    %v757 = vpop.f32.mrf.mxu0
    %v758 = vadd.f32 %v128, %v757
    %v759 = vpop.f32.mrf.mxu0
    %v760 = vadd.f32 %v128, %v759
    %761 = vmatmul.bf16.gmra.mxu0 %v245
    %v762 = vpop.f32.mrf.mxu0
    %v763 = vadd.f32 %v128, %v762
    %v764 = vpop.f32.mrf.mxu0
    %v765 = vadd.f32 %v128, %v764
    %766 = vmatmul.bf16.gmra.mxu0 %v248
    %v767 = vpop.f32.mrf.mxu0
    %v768 = vadd.f32 %v128, %v767
    %v769 = vpop.f32.mrf.mxu0
    %v770 = vadd.f32 %v128, %v769
    %771 = vmatmul.bf16.gmra.mxu0 %v251
    %v772 = vpop.f32.mrf.mxu0
    %v773 = vadd.f32 %v128, %v772
    %v774 = vpop.f32.mrf.mxu0
    %v775 = vadd.f32 %v128, %v774
    %776 = vmatmul.bf16.gmra.mxu0 %v254
    %v777 = vpop.f32.mrf.mxu0
    %v778 = vadd.f32 %v128, %v777
    %v779 = vpop.f32.mrf.mxu0
    %v780 = vadd.f32 %v128, %v779
    %781 = vmatmul.bf16.gmra.mxu0 %v257
    %v782 = vpop.f32.mrf.mxu0
    %v783 = vadd.f32 %v128, %v782
    %v784 = vpop.f32.mrf.mxu0
    %v785 = vadd.f32 %v128, %v784
    %786 = vmatmul.bf16.gmra.mxu0 %v260
    %v787 = vpop.f32.mrf.mxu0
    %v788 = vadd.f32 %v128, %v787
    %v789 = vpop.f32.mrf.mxu0
    %v790 = vadd.f32 %v128, %v789
    %791 = vmatmul.bf16.gmra.mxu0 %v263
    %v792 = vpop.f32.mrf.mxu0
    %v793 = vadd.f32 %v128, %v792
    %v794 = vpop.f32.mrf.mxu0
    %v795 = vadd.f32 %v128, %v794
    %796 = vmatmul.bf16.gmra.mxu0 %v266
    %v797 = vpop.f32.mrf.mxu0
    %v798 = vadd.f32 %v128, %v797
    %v799 = vpop.f32.mrf.mxu0
    %v800 = vadd.f32 %v128, %v799
    %801 = vdwg.mxu0
    %802 = vmatpush.bf16.msra.mxu0 0
    %803 = vmatpush.bf16.msra.mxu0 0
    %804 = vmatpush.bf16.msra.mxu0 0
    %805 = vmatpush.bf16.msra.mxu0 0
    %806 = vmatpush.bf16.msra.mxu0 0
    %807 = vmatpush.bf16.msra.mxu0 0
    %808 = vmatpush.bf16.msra.mxu0 %v201
    %809 = vmatpush.bf16.msra.mxu0 %v193
    %810 = vmatmul.bf16.gmra.mxu0 %v221
    %v811 = vpop.f32.mrf.mxu0
    %v812 = vadd.f32 %v129, %v811
    %v813 = vpop.f32.mrf.mxu0
    %v814 = vadd.f32 %v129, %v813
    %815 = vmatmul.bf16.gmra.mxu0 %v224
    %v816 = vpop.f32.mrf.mxu0
    %v817 = vadd.f32 %v129, %v816
    %v818 = vpop.f32.mrf.mxu0
    %v819 = vadd.f32 %v129, %v818
    %820 = vmatmul.bf16.gmra.mxu0 %v227
    %v821 = vpop.f32.mrf.mxu0
    %v822 = vadd.f32 %v129, %v821
    %v823 = vpop.f32.mrf.mxu0
    %v824 = vadd.f32 %v129, %v823
    %825 = vmatmul.bf16.gmra.mxu0 %v230
    %v826 = vpop.f32.mrf.mxu0
    %v827 = vadd.f32 %v129, %v826
    %v828 = vpop.f32.mrf.mxu0
    %v829 = vadd.f32 %v129, %v828
    %830 = vmatmul.bf16.gmra.mxu0 %v233
    %v831 = vpop.f32.mrf.mxu0
    %v832 = vadd.f32 %v129, %v831
    %v833 = vpop.f32.mrf.mxu0
    %v834 = vadd.f32 %v129, %v833
    %835 = vmatmul.bf16.gmra.mxu0 %v236
    %v836 = vpop.f32.mrf.mxu0
    %v837 = vadd.f32 %v129, %v836
    %v838 = vpop.f32.mrf.mxu0
    %v839 = vadd.f32 %v129, %v838
    %840 = vmatmul.bf16.gmra.mxu0 %v239
    %v841 = vpop.f32.mrf.mxu0
    %v842 = vadd.f32 %v129, %v841
    %v843 = vpop.f32.mrf.mxu0
    %v844 = vadd.f32 %v129, %v843
    %845 = vmatmul.bf16.gmra.mxu0 %v242
    %v846 = vpop.f32.mrf.mxu0
    %v847 = vadd.f32 %v129, %v846
    %v848 = vpop.f32.mrf.mxu0
    %v849 = vadd.f32 %v129, %v848
    %850 = vmatmul.bf16.gmra.mxu0 %v245
    %v851 = vpop.f32.mrf.mxu0
    %v852 = vadd.f32 %v129, %v851
    %v853 = vpop.f32.mrf.mxu0
    %v854 = vadd.f32 %v129, %v853
    %855 = vmatmul.bf16.gmra.mxu0 %v248
    %v856 = vpop.f32.mrf.mxu0
    %v857 = vadd.f32 %v129, %v856
    %v858 = vpop.f32.mrf.mxu0
    %v859 = vadd.f32 %v129, %v858
    %860 = vmatmul.bf16.gmra.mxu0 %v251
    %v861 = vpop.f32.mrf.mxu0
    %v862 = vadd.f32 %v129, %v861
    %v863 = vpop.f32.mrf.mxu0
    %v864 = vadd.f32 %v129, %v863
    %865 = vmatmul.bf16.gmra.mxu0 %v254
    %v866 = vpop.f32.mrf.mxu0
    %v867 = vadd.f32 %v129, %v866
    %v868 = vpop.f32.mrf.mxu0
    %v869 = vadd.f32 %v129, %v868
    %870 = vmatmul.bf16.gmra.mxu0 %v257
    %v871 = vpop.f32.mrf.mxu0
    %v872 = vadd.f32 %v129, %v871
    %v873 = vpop.f32.mrf.mxu0
    %v874 = vadd.f32 %v129, %v873
    %875 = vmatmul.bf16.gmra.mxu0 %v260
    %v876 = vpop.f32.mrf.mxu0
    %v877 = vadd.f32 %v129, %v876
    %v878 = vpop.f32.mrf.mxu0
    %v879 = vadd.f32 %v129, %v878
    %880 = vmatmul.bf16.gmra.mxu0 %v263
    %v881 = vpop.f32.mrf.mxu0
    %v882 = vadd.f32 %v129, %v881
    %v883 = vpop.f32.mrf.mxu0
    %v884 = vadd.f32 %v129, %v883
    %885 = vmatmul.bf16.gmra.mxu0 %v266
    %v886 = vpop.f32.mrf.mxu0
    %v887 = vadd.f32 %v129, %v886
    %v888 = vpop.f32.mrf.mxu0
    %v889 = vadd.f32 %v129, %v888
    %890 = vdwg.mxu0
    %891 = vmatpush.bf16.msra.mxu0 0
    %892 = vmatpush.bf16.msra.mxu0 0
    %893 = vmatpush.bf16.msra.mxu0 0
    %894 = vmatpush.bf16.msra.mxu0 0
    %895 = vmatpush.bf16.msra.mxu0 0
    %896 = vmatpush.bf16.msra.mxu0 0
    %897 = vmatpush.bf16.msra.mxu0 %v202
    %898 = vmatpush.bf16.msra.mxu0 %v194
    %899 = vmatmul.bf16.gmra.mxu0 %v221
    %v900 = vpop.f32.mrf.mxu0
    %v901 = vadd.f32 %v130, %v900
    %v902 = vpop.f32.mrf.mxu0
    %v903 = vadd.f32 %v130, %v902
    %904 = vmatmul.bf16.gmra.mxu0 %v224
    %v905 = vpop.f32.mrf.mxu0
    %v906 = vadd.f32 %v130, %v905
    %v907 = vpop.f32.mrf.mxu0
    %v908 = vadd.f32 %v130, %v907
    %909 = vmatmul.bf16.gmra.mxu0 %v227
    %v910 = vpop.f32.mrf.mxu0
    %v911 = vadd.f32 %v130, %v910
    %v912 = vpop.f32.mrf.mxu0
    %v913 = vadd.f32 %v130, %v912
    %914 = vmatmul.bf16.gmra.mxu0 %v230
    %v915 = vpop.f32.mrf.mxu0
    %v916 = vadd.f32 %v130, %v915
    %v917 = vpop.f32.mrf.mxu0
    %v918 = vadd.f32 %v130, %v917
    %919 = vmatmul.bf16.gmra.mxu0 %v233
    %v920 = vpop.f32.mrf.mxu0
    %v921 = vadd.f32 %v130, %v920
    %v922 = vpop.f32.mrf.mxu0
    %v923 = vadd.f32 %v130, %v922
    %924 = vmatmul.bf16.gmra.mxu0 %v236
    %v925 = vpop.f32.mrf.mxu0
    %v926 = vadd.f32 %v130, %v925
    %v927 = vpop.f32.mrf.mxu0
    %v928 = vadd.f32 %v130, %v927
    %929 = vmatmul.bf16.gmra.mxu0 %v239
    %v930 = vpop.f32.mrf.mxu0
    %v931 = vadd.f32 %v130, %v930
    %v932 = vpop.f32.mrf.mxu0
    %v933 = vadd.f32 %v130, %v932
    %934 = vmatmul.bf16.gmra.mxu0 %v242
    %v935 = vpop.f32.mrf.mxu0
    %v936 = vadd.f32 %v130, %v935
    %v937 = vpop.f32.mrf.mxu0
    %v938 = vadd.f32 %v130, %v937
    %939 = vmatmul.bf16.gmra.mxu0 %v245
    %v940 = vpop.f32.mrf.mxu0
    %v941 = vadd.f32 %v130, %v940
    %v942 = vpop.f32.mrf.mxu0
    %v943 = vadd.f32 %v130, %v942
    %944 = vmatmul.bf16.gmra.mxu0 %v248
    %v945 = vpop.f32.mrf.mxu0
    %v946 = vadd.f32 %v130, %v945
    %v947 = vpop.f32.mrf.mxu0
    %v948 = vadd.f32 %v130, %v947
    %949 = vmatmul.bf16.gmra.mxu0 %v251
    %v950 = vpop.f32.mrf.mxu0
    %v951 = vadd.f32 %v130, %v950
    %v952 = vpop.f32.mrf.mxu0
    %v953 = vadd.f32 %v130, %v952
    %954 = vmatmul.bf16.gmra.mxu0 %v254
    %v955 = vpop.f32.mrf.mxu0
    %v956 = vadd.f32 %v130, %v955
    %v957 = vpop.f32.mrf.mxu0
    %v958 = vadd.f32 %v130, %v957
    %959 = vmatmul.bf16.gmra.mxu0 %v257
    %v960 = vpop.f32.mrf.mxu0
    %v961 = vadd.f32 %v130, %v960
    %v962 = vpop.f32.mrf.mxu0
    %v963 = vadd.f32 %v130, %v962
    %964 = vmatmul.bf16.gmra.mxu0 %v260
    %v965 = vpop.f32.mrf.mxu0
    %v966 = vadd.f32 %v130, %v965
    %v967 = vpop.f32.mrf.mxu0
    %v968 = vadd.f32 %v130, %v967
    %969 = vmatmul.bf16.gmra.mxu0 %v263
    %v970 = vpop.f32.mrf.mxu0
    %v971 = vadd.f32 %v130, %v970
    %v972 = vpop.f32.mrf.mxu0
    %v973 = vadd.f32 %v130, %v972
    %974 = vmatmul.bf16.gmra.mxu0 %v266
    %v975 = vpop.f32.mrf.mxu0
    %v976 = vadd.f32 %v130, %v975
    %v977 = vpop.f32.mrf.mxu0
    %v978 = vadd.f32 %v130, %v977
    %979 = vdwg.mxu0
    %v980 = vmul.f32 %v278, 0.5
    %v981 = vmul.f32 %v367, 0.5
    %v982 = vmul.f32 %v456, 0.5
    %v983 = vmul.f32 %v545, 0.5
    %v984 = vmul.f32 %v634, 0.5
    %v985 = vmul.f32 %v723, 0.5
    %v986 = vmul.f32 %v812, 0.5
    %v987 = vmul.f32 %v901, 0.5
    %v988 = vmul.f32 %v280, 0.5
    %v989 = vmul.f32 %v369, 0.5
    %v990 = vmul.f32 %v458, 0.5
    %v991 = vmul.f32 %v547, 0.5
    %v992 = vmul.f32 %v636, 0.5
    %v993 = vmul.f32 %v725, 0.5
    %v994 = vmul.f32 %v814, 0.5
    %v995 = vmul.f32 %v903, 0.5
    %v996 = vmul.f32 %v283, 0.5
    %v997 = vmul.f32 %v372, 0.5
    %v998 = vmul.f32 %v461, 0.5
    %v999 = vmul.f32 %v550, 0.5
    %v1000 = vmul.f32 %v639, 0.5
    %v1001 = vmul.f32 %v728, 0.5
    %v1002 = vmul.f32 %v817, 0.5
    %v1003 = vmul.f32 %v906, 0.5
    %v1004 = vmul.f32 %v285, 0.5
    %v1005 = vmul.f32 %v374, 0.5
    %v1006 = vmul.f32 %v463, 0.5
    %v1007 = vmul.f32 %v552, 0.5
    %v1008 = vmul.f32 %v641, 0.5
    %v1009 = vmul.f32 %v730, 0.5
    %v1010 = vmul.f32 %v819, 0.5
    %v1011 = vmul.f32 %v908, 0.5
    %v1012 = vmul.f32 %v288, 0.5
    %v1013 = vmul.f32 %v377, 0.5
    %v1014 = vmul.f32 %v466, 0.5
    %v1015 = vmul.f32 %v555, 0.5
    %v1016 = vmul.f32 %v644, 0.5
    %v1017 = vmul.f32 %v733, 0.5
    %v1018 = vmul.f32 %v822, 0.5
    %v1019 = vmul.f32 %v911, 0.5
    %v1020 = vmul.f32 %v290, 0.5
    %v1021 = vmul.f32 %v379, 0.5
    %v1022 = vmul.f32 %v468, 0.5
    %v1023 = vmul.f32 %v557, 0.5
    %v1024 = vmul.f32 %v646, 0.5
    %v1025 = vmul.f32 %v735, 0.5
    %v1026 = vmul.f32 %v824, 0.5
    %v1027 = vmul.f32 %v913, 0.5
    %v1028 = vmul.f32 %v293, 0.5
    %v1029 = vmul.f32 %v382, 0.5
    %v1030 = vmul.f32 %v471, 0.5
    %v1031 = vmul.f32 %v560, 0.5
    %v1032 = vmul.f32 %v649, 0.5
    %v1033 = vmul.f32 %v738, 0.5
    %v1034 = vmul.f32 %v827, 0.5
    %v1035 = vmul.f32 %v916, 0.5
    %v1036 = vmul.f32 %v295, 0.5
    %v1037 = vmul.f32 %v384, 0.5
    %v1038 = vmul.f32 %v473, 0.5
    %v1039 = vmul.f32 %v562, 0.5
    %v1040 = vmul.f32 %v651, 0.5
    %v1041 = vmul.f32 %v740, 0.5
    %v1042 = vmul.f32 %v829, 0.5
    %v1043 = vmul.f32 %v918, 0.5
    %v1044 = vmul.f32 %v298, 0.5
    %v1045 = vmul.f32 %v387, 0.5
    %v1046 = vmul.f32 %v476, 0.5
    %v1047 = vmul.f32 %v565, 0.5
    %v1048 = vmul.f32 %v654, 0.5
    %v1049 = vmul.f32 %v743, 0.5
    %v1050 = vmul.f32 %v832, 0.5
    %v1051 = vmul.f32 %v921, 0.5
    %v1052 = vmul.f32 %v300, 0.5
    %v1053 = vmul.f32 %v389, 0.5
    %v1054 = vmul.f32 %v478, 0.5
    %v1055 = vmul.f32 %v567, 0.5
    %v1056 = vmul.f32 %v656, 0.5
    %v1057 = vmul.f32 %v745, 0.5
    %v1058 = vmul.f32 %v834, 0.5
    %v1059 = vmul.f32 %v923, 0.5
    %v1060 = vmul.f32 %v303, 0.5
    %v1061 = vmul.f32 %v392, 0.5
    %v1062 = vmul.f32 %v481, 0.5
    %v1063 = vmul.f32 %v570, 0.5
    %v1064 = vmul.f32 %v659, 0.5
    %v1065 = vmul.f32 %v748, 0.5
    %v1066 = vmul.f32 %v837, 0.5
    %v1067 = vmul.f32 %v926, 0.5
    %v1068 = vmul.f32 %v305, 0.5
    %v1069 = vmul.f32 %v394, 0.5
    %v1070 = vmul.f32 %v483, 0.5
    %v1071 = vmul.f32 %v572, 0.5
    %v1072 = vmul.f32 %v661, 0.5
    %v1073 = vmul.f32 %v750, 0.5
    %v1074 = vmul.f32 %v839, 0.5
    %v1075 = vmul.f32 %v928, 0.5
    %v1076 = vmul.f32 %v308, 0.5
    %v1077 = vmul.f32 %v397, 0.5
    %v1078 = vmul.f32 %v486, 0.5
    %v1079 = vmul.f32 %v575, 0.5
    %v1080 = vmul.f32 %v664, 0.5
    %v1081 = vmul.f32 %v753, 0.5
    %v1082 = vmul.f32 %v842, 0.5
    %v1083 = vmul.f32 %v931, 0.5
    %v1084 = vmul.f32 %v310, 0.5
    %v1085 = vmul.f32 %v399, 0.5
    %v1086 = vmul.f32 %v488, 0.5
    %v1087 = vmul.f32 %v577, 0.5
    %v1088 = vmul.f32 %v666, 0.5
    %v1089 = vmul.f32 %v755, 0.5
    %v1090 = vmul.f32 %v844, 0.5
    %v1091 = vmul.f32 %v933, 0.5
    %v1092 = vmul.f32 %v313, 0.5
    %v1093 = vmul.f32 %v402, 0.5
    %v1094 = vmul.f32 %v491, 0.5
    %v1095 = vmul.f32 %v580, 0.5
    %v1096 = vmul.f32 %v669, 0.5
    %v1097 = vmul.f32 %v758, 0.5
    %v1098 = vmul.f32 %v847, 0.5
    %v1099 = vmul.f32 %v936, 0.5
    %v1100 = vmul.f32 %v315, 0.5
    %v1101 = vmul.f32 %v404, 0.5
    %v1102 = vmul.f32 %v493, 0.5
    %v1103 = vmul.f32 %v582, 0.5
    %v1104 = vmul.f32 %v671, 0.5
    %v1105 = vmul.f32 %v760, 0.5
    %v1106 = vmul.f32 %v849, 0.5
    %v1107 = vmul.f32 %v938, 0.5
    %v1108 = vmul.f32 %v318, 0.5
    %v1109 = vmul.f32 %v407, 0.5
    %v1110 = vmul.f32 %v496, 0.5
    %v1111 = vmul.f32 %v585, 0.5
    %v1112 = vmul.f32 %v674, 0.5
    %v1113 = vmul.f32 %v763, 0.5
    %v1114 = vmul.f32 %v852, 0.5
    %v1115 = vmul.f32 %v941, 0.5
    %v1116 = vmul.f32 %v320, 0.5
    %v1117 = vmul.f32 %v409, 0.5
    %v1118 = vmul.f32 %v498, 0.5
    %v1119 = vmul.f32 %v587, 0.5
    %v1120 = vmul.f32 %v676, 0.5
    %v1121 = vmul.f32 %v765, 0.5
    %v1122 = vmul.f32 %v854, 0.5
    %v1123 = vmul.f32 %v943, 0.5
    %v1124 = vmul.f32 %v323, 0.5
    %v1125 = vmul.f32 %v412, 0.5
    %v1126 = vmul.f32 %v501, 0.5
    %v1127 = vmul.f32 %v590, 0.5
    %v1128 = vmul.f32 %v679, 0.5
    %v1129 = vmul.f32 %v768, 0.5
    %v1130 = vmul.f32 %v857, 0.5
    %v1131 = vmul.f32 %v946, 0.5
    %v1132 = vmul.f32 %v325, 0.5
    %v1133 = vmul.f32 %v414, 0.5
    %v1134 = vmul.f32 %v503, 0.5
    %v1135 = vmul.f32 %v592, 0.5
    %v1136 = vmul.f32 %v681, 0.5
    %v1137 = vmul.f32 %v770, 0.5
    %v1138 = vmul.f32 %v859, 0.5
    %v1139 = vmul.f32 %v948, 0.5
    %v1140 = vmul.f32 %v328, 0.5
    %v1141 = vmul.f32 %v417, 0.5
    %v1142 = vmul.f32 %v506, 0.5
    %v1143 = vmul.f32 %v595, 0.5
    %v1144 = vmul.f32 %v684, 0.5
    %v1145 = vmul.f32 %v773, 0.5
    %v1146 = vmul.f32 %v862, 0.5
    %v1147 = vmul.f32 %v951, 0.5
    %v1148 = vmul.f32 %v330, 0.5
    %v1149 = vmul.f32 %v419, 0.5
    %v1150 = vmul.f32 %v508, 0.5
    %v1151 = vmul.f32 %v597, 0.5
    %v1152 = vmul.f32 %v686, 0.5
    %v1153 = vmul.f32 %v775, 0.5
    %v1154 = vmul.f32 %v864, 0.5
    %v1155 = vmul.f32 %v953, 0.5
    %v1156 = vmul.f32 %v333, 0.5
    %v1157 = vmul.f32 %v422, 0.5
    %v1158 = vmul.f32 %v511, 0.5
    %v1159 = vmul.f32 %v600, 0.5
    %v1160 = vmul.f32 %v689, 0.5
    %v1161 = vmul.f32 %v778, 0.5
    %v1162 = vmul.f32 %v867, 0.5
    %v1163 = vmul.f32 %v956, 0.5
    %v1164 = vmul.f32 %v335, 0.5
    %v1165 = vmul.f32 %v424, 0.5
    %v1166 = vmul.f32 %v513, 0.5
    %v1167 = vmul.f32 %v602, 0.5
    %v1168 = vmul.f32 %v691, 0.5
    %v1169 = vmul.f32 %v780, 0.5
    %v1170 = vmul.f32 %v869, 0.5
    %v1171 = vmul.f32 %v958, 0.5
    %v1172 = vmul.f32 %v338, 0.5
    %v1173 = vmul.f32 %v427, 0.5
    %v1174 = vmul.f32 %v516, 0.5
    %v1175 = vmul.f32 %v605, 0.5
    %v1176 = vmul.f32 %v694, 0.5
    %v1177 = vmul.f32 %v783, 0.5
    %v1178 = vmul.f32 %v872, 0.5
    %v1179 = vmul.f32 %v961, 0.5
    %v1180 = vmul.f32 %v340, 0.5
    %v1181 = vmul.f32 %v429, 0.5
    %v1182 = vmul.f32 %v518, 0.5
    %v1183 = vmul.f32 %v607, 0.5
    %v1184 = vmul.f32 %v696, 0.5
    %v1185 = vmul.f32 %v785, 0.5
    %v1186 = vmul.f32 %v874, 0.5
    %v1187 = vmul.f32 %v963, 0.5
    %v1188 = vmul.f32 %v343, 0.5
    %v1189 = vmul.f32 %v432, 0.5
    %v1190 = vmul.f32 %v521, 0.5
    %v1191 = vmul.f32 %v610, 0.5
    %v1192 = vmul.f32 %v699, 0.5
    %v1193 = vmul.f32 %v788, 0.5
    %v1194 = vmul.f32 %v877, 0.5
    %v1195 = vmul.f32 %v966, 0.5
    %v1196 = vmul.f32 %v345, 0.5
    %v1197 = vmul.f32 %v434, 0.5
    %v1198 = vmul.f32 %v523, 0.5
    %v1199 = vmul.f32 %v612, 0.5
    %v1200 = vmul.f32 %v701, 0.5
    %v1201 = vmul.f32 %v790, 0.5
    %v1202 = vmul.f32 %v879, 0.5
    %v1203 = vmul.f32 %v968, 0.5
    %v1204 = vmul.f32 %v348, 0.5
    %v1205 = vmul.f32 %v437, 0.5
    %v1206 = vmul.f32 %v526, 0.5
    %v1207 = vmul.f32 %v615, 0.5
    %v1208 = vmul.f32 %v704, 0.5
    %v1209 = vmul.f32 %v793, 0.5
    %v1210 = vmul.f32 %v882, 0.5
    %v1211 = vmul.f32 %v971, 0.5
    %v1212 = vmul.f32 %v350, 0.5
    %v1213 = vmul.f32 %v439, 0.5
    %v1214 = vmul.f32 %v528, 0.5
    %v1215 = vmul.f32 %v617, 0.5
    %v1216 = vmul.f32 %v706, 0.5
    %v1217 = vmul.f32 %v795, 0.5
    %v1218 = vmul.f32 %v884, 0.5
    %v1219 = vmul.f32 %v973, 0.5
    %v1220 = vmul.f32 %v353, 0.5
    %v1221 = vmul.f32 %v442, 0.5
    %v1222 = vmul.f32 %v531, 0.5
    %v1223 = vmul.f32 %v620, 0.5
    %v1224 = vmul.f32 %v709, 0.5
    %v1225 = vmul.f32 %v798, 0.5
    %v1226 = vmul.f32 %v887, 0.5
    %v1227 = vmul.f32 %v976, 0.5
    %v1228 = vmul.f32 %v355, 0.5
    %v1229 = vmul.f32 %v444, 0.5
    %v1230 = vmul.f32 %v533, 0.5
    %v1231 = vmul.f32 %v622, 0.5
    %v1232 = vmul.f32 %v711, 0.5
    %v1233 = vmul.f32 %v800, 0.5
    %v1234 = vmul.f32 %v889, 0.5
    %v1235 = vmul.f32 %v978, 0.5
    %v1236 = vmul.f32 %v278, 0.044715
    %v1237 = vmul.f32 %v367, 0.044715
    %v1238 = vmul.f32 %v456, 0.044715
    %v1239 = vmul.f32 %v545, 0.044715
    %v1240 = vmul.f32 %v634, 0.044715
    %v1241 = vmul.f32 %v723, 0.044715
    %v1242 = vmul.f32 %v812, 0.044715
    %v1243 = vmul.f32 %v901, 0.044715
    %v1244 = vmul.f32 %v280, 0.044715
    %v1245 = vmul.f32 %v369, 0.044715
    %v1246 = vmul.f32 %v458, 0.044715
    %v1247 = vmul.f32 %v547, 0.044715
    %v1248 = vmul.f32 %v636, 0.044715
    %v1249 = vmul.f32 %v725, 0.044715
    %v1250 = vmul.f32 %v814, 0.044715
    %v1251 = vmul.f32 %v903, 0.044715
    %v1252 = vmul.f32 %v283, 0.044715
    %v1253 = vmul.f32 %v372, 0.044715
    %v1254 = vmul.f32 %v461, 0.044715
    %v1255 = vmul.f32 %v550, 0.044715
    %v1256 = vmul.f32 %v639, 0.044715
    %v1257 = vmul.f32 %v728, 0.044715
    %v1258 = vmul.f32 %v817, 0.044715
    %v1259 = vmul.f32 %v906, 0.044715
    %v1260 = vmul.f32 %v285, 0.044715
    %v1261 = vmul.f32 %v374, 0.044715
    %v1262 = vmul.f32 %v463, 0.044715
    %v1263 = vmul.f32 %v552, 0.044715
    %v1264 = vmul.f32 %v641, 0.044715
    %v1265 = vmul.f32 %v730, 0.044715
    %v1266 = vmul.f32 %v819, 0.044715
    %v1267 = vmul.f32 %v908, 0.044715
    %v1268 = vmul.f32 %v288, 0.044715
    %v1269 = vmul.f32 %v377, 0.044715
    %v1270 = vmul.f32 %v466, 0.044715
    %v1271 = vmul.f32 %v555, 0.044715
    %v1272 = vmul.f32 %v644, 0.044715
    %v1273 = vmul.f32 %v733, 0.044715
    %v1274 = vmul.f32 %v822, 0.044715
    %v1275 = vmul.f32 %v911, 0.044715
    %v1276 = vmul.f32 %v290, 0.044715
    %v1277 = vmul.f32 %v379, 0.044715
    %v1278 = vmul.f32 %v468, 0.044715
    %v1279 = vmul.f32 %v557, 0.044715
    %v1280 = vmul.f32 %v646, 0.044715
    %v1281 = vmul.f32 %v735, 0.044715
    %v1282 = vmul.f32 %v824, 0.044715
    %v1283 = vmul.f32 %v913, 0.044715
    %v1284 = vmul.f32 %v293, 0.044715
    %v1285 = vmul.f32 %v382, 0.044715
    %v1286 = vmul.f32 %v471, 0.044715
    %v1287 = vmul.f32 %v560, 0.044715
    %v1288 = vmul.f32 %v649, 0.044715
    %v1289 = vmul.f32 %v738, 0.044715
    %v1290 = vmul.f32 %v827, 0.044715
    %v1291 = vmul.f32 %v916, 0.044715
    %v1292 = vmul.f32 %v295, 0.044715
    %v1293 = vmul.f32 %v384, 0.044715
    %v1294 = vmul.f32 %v473, 0.044715
    %v1295 = vmul.f32 %v562, 0.044715
    %v1296 = vmul.f32 %v651, 0.044715
    %v1297 = vmul.f32 %v740, 0.044715
    %v1298 = vmul.f32 %v829, 0.044715
    %v1299 = vmul.f32 %v918, 0.044715
    %v1300 = vmul.f32 %v298, 0.044715
    %v1301 = vmul.f32 %v387, 0.044715
    %v1302 = vmul.f32 %v476, 0.044715
    %v1303 = vmul.f32 %v565, 0.044715
    %v1304 = vmul.f32 %v654, 0.044715
    %v1305 = vmul.f32 %v743, 0.044715
    %v1306 = vmul.f32 %v832, 0.044715
    %v1307 = vmul.f32 %v921, 0.044715
    %v1308 = vmul.f32 %v300, 0.044715
    %v1309 = vmul.f32 %v389, 0.044715
    %v1310 = vmul.f32 %v478, 0.044715
    %v1311 = vmul.f32 %v567, 0.044715
    %v1312 = vmul.f32 %v656, 0.044715
    %v1313 = vmul.f32 %v745, 0.044715
    %v1314 = vmul.f32 %v834, 0.044715
    %v1315 = vmul.f32 %v923, 0.044715
    %v1316 = vmul.f32 %v303, 0.044715
    %v1317 = vmul.f32 %v392, 0.044715
    %v1318 = vmul.f32 %v481, 0.044715
    %v1319 = vmul.f32 %v570, 0.044715
    %v1320 = vmul.f32 %v659, 0.044715
    %v1321 = vmul.f32 %v748, 0.044715
    %v1322 = vmul.f32 %v837, 0.044715
    %v1323 = vmul.f32 %v926, 0.044715
    %v1324 = vmul.f32 %v305, 0.044715
    %v1325 = vmul.f32 %v394, 0.044715
    %v1326 = vmul.f32 %v483, 0.044715
    %v1327 = vmul.f32 %v572, 0.044715
    %v1328 = vmul.f32 %v661, 0.044715
    %v1329 = vmul.f32 %v750, 0.044715
    %v1330 = vmul.f32 %v839, 0.044715
    %v1331 = vmul.f32 %v928, 0.044715
    %v1332 = vmul.f32 %v308, 0.044715
    %v1333 = vmul.f32 %v397, 0.044715
    %v1334 = vmul.f32 %v486, 0.044715
    %v1335 = vmul.f32 %v575, 0.044715
    %v1336 = vmul.f32 %v664, 0.044715
    %v1337 = vmul.f32 %v753, 0.044715
    %v1338 = vmul.f32 %v842, 0.044715
    %v1339 = vmul.f32 %v931, 0.044715
    %v1340 = vmul.f32 %v310, 0.044715
    %v1341 = vmul.f32 %v399, 0.044715
    %v1342 = vmul.f32 %v488, 0.044715
    %v1343 = vmul.f32 %v577, 0.044715
    %v1344 = vmul.f32 %v666, 0.044715
    %v1345 = vmul.f32 %v755, 0.044715
    %v1346 = vmul.f32 %v844, 0.044715
    %v1347 = vmul.f32 %v933, 0.044715
    %v1348 = vmul.f32 %v313, 0.044715
    %v1349 = vmul.f32 %v402, 0.044715
    %v1350 = vmul.f32 %v491, 0.044715
    %v1351 = vmul.f32 %v580, 0.044715
    %v1352 = vmul.f32 %v669, 0.044715
    %v1353 = vmul.f32 %v758, 0.044715
    %v1354 = vmul.f32 %v847, 0.044715
    %v1355 = vmul.f32 %v936, 0.044715
    %v1356 = vmul.f32 %v315, 0.044715
    %v1357 = vmul.f32 %v404, 0.044715
    %v1358 = vmul.f32 %v493, 0.044715
    %v1359 = vmul.f32 %v582, 0.044715
    %v1360 = vmul.f32 %v671, 0.044715
    %v1361 = vmul.f32 %v760, 0.044715
    %v1362 = vmul.f32 %v849, 0.044715
    %v1363 = vmul.f32 %v938, 0.044715
    %v1364 = vmul.f32 %v318, 0.044715
    %v1365 = vmul.f32 %v407, 0.044715
    %v1366 = vmul.f32 %v496, 0.044715
    %v1367 = vmul.f32 %v585, 0.044715
    %v1368 = vmul.f32 %v674, 0.044715
    %v1369 = vmul.f32 %v763, 0.044715
    %v1370 = vmul.f32 %v852, 0.044715
    %v1371 = vmul.f32 %v941, 0.044715
    %v1372 = vmul.f32 %v320, 0.044715
    %v1373 = vmul.f32 %v409, 0.044715
    %v1374 = vmul.f32 %v498, 0.044715
    %v1375 = vmul.f32 %v587, 0.044715
    %v1376 = vmul.f32 %v676, 0.044715
    %v1377 = vmul.f32 %v765, 0.044715
    %v1378 = vmul.f32 %v854, 0.044715
    %v1379 = vmul.f32 %v943, 0.044715
    %v1380 = vmul.f32 %v323, 0.044715
    %v1381 = vmul.f32 %v412, 0.044715
    %v1382 = vmul.f32 %v501, 0.044715
    %v1383 = vmul.f32 %v590, 0.044715
    %v1384 = vmul.f32 %v679, 0.044715
    %v1385 = vmul.f32 %v768, 0.044715
    %v1386 = vmul.f32 %v857, 0.044715
    %v1387 = vmul.f32 %v946, 0.044715
    %v1388 = vmul.f32 %v325, 0.044715
    %v1389 = vmul.f32 %v414, 0.044715
    %v1390 = vmul.f32 %v503, 0.044715
    %v1391 = vmul.f32 %v592, 0.044715
    %v1392 = vmul.f32 %v681, 0.044715
    %v1393 = vmul.f32 %v770, 0.044715
    %v1394 = vmul.f32 %v859, 0.044715
    %v1395 = vmul.f32 %v948, 0.044715
    %v1396 = vmul.f32 %v328, 0.044715
    %v1397 = vmul.f32 %v417, 0.044715
    %v1398 = vmul.f32 %v506, 0.044715
    %v1399 = vmul.f32 %v595, 0.044715
    %v1400 = vmul.f32 %v684, 0.044715
    %v1401 = vmul.f32 %v773, 0.044715
    %v1402 = vmul.f32 %v862, 0.044715
    %v1403 = vmul.f32 %v951, 0.044715
    %v1404 = vmul.f32 %v330, 0.044715
    %v1405 = vmul.f32 %v419, 0.044715
    %v1406 = vmul.f32 %v508, 0.044715
    %v1407 = vmul.f32 %v597, 0.044715
    %v1408 = vmul.f32 %v686, 0.044715
    %v1409 = vmul.f32 %v775, 0.044715
    %v1410 = vmul.f32 %v864, 0.044715
    %v1411 = vmul.f32 %v953, 0.044715
    %v1412 = vmul.f32 %v333, 0.044715
    %v1413 = vmul.f32 %v422, 0.044715
    %v1414 = vmul.f32 %v511, 0.044715
    %v1415 = vmul.f32 %v600, 0.044715
    %v1416 = vmul.f32 %v689, 0.044715
    %v1417 = vmul.f32 %v778, 0.044715
    %v1418 = vmul.f32 %v867, 0.044715
    %v1419 = vmul.f32 %v956, 0.044715
    %v1420 = vmul.f32 %v335, 0.044715
    %v1421 = vmul.f32 %v424, 0.044715
    %v1422 = vmul.f32 %v513, 0.044715
    %v1423 = vmul.f32 %v602, 0.044715
    %v1424 = vmul.f32 %v691, 0.044715
    %v1425 = vmul.f32 %v780, 0.044715
    %v1426 = vmul.f32 %v869, 0.044715
    %v1427 = vmul.f32 %v958, 0.044715
    %v1428 = vmul.f32 %v338, 0.044715
    %v1429 = vmul.f32 %v427, 0.044715
    %v1430 = vmul.f32 %v516, 0.044715
    %v1431 = vmul.f32 %v605, 0.044715
    %v1432 = vmul.f32 %v694, 0.044715
    %v1433 = vmul.f32 %v783, 0.044715
    %v1434 = vmul.f32 %v872, 0.044715
    %v1435 = vmul.f32 %v961, 0.044715
    %v1436 = vmul.f32 %v340, 0.044715
    %v1437 = vmul.f32 %v429, 0.044715
    %v1438 = vmul.f32 %v518, 0.044715
    %v1439 = vmul.f32 %v607, 0.044715
    %v1440 = vmul.f32 %v696, 0.044715
    %v1441 = vmul.f32 %v785, 0.044715
    %v1442 = vmul.f32 %v874, 0.044715
    %v1443 = vmul.f32 %v963, 0.044715
    %v1444 = vmul.f32 %v343, 0.044715
    %v1445 = vmul.f32 %v432, 0.044715
    %v1446 = vmul.f32 %v521, 0.044715
    %v1447 = vmul.f32 %v610, 0.044715
    %v1448 = vmul.f32 %v699, 0.044715
    %v1449 = vmul.f32 %v788, 0.044715
    %v1450 = vmul.f32 %v877, 0.044715
    %v1451 = vmul.f32 %v966, 0.044715
    %v1452 = vmul.f32 %v345, 0.044715
    %v1453 = vmul.f32 %v434, 0.044715
    %v1454 = vmul.f32 %v523, 0.044715
    %v1455 = vmul.f32 %v612, 0.044715
    %v1456 = vmul.f32 %v701, 0.044715
    %v1457 = vmul.f32 %v790, 0.044715
    %v1458 = vmul.f32 %v879, 0.044715
    %v1459 = vmul.f32 %v968, 0.044715
    %v1460 = vmul.f32 %v348, 0.044715
    %v1461 = vmul.f32 %v437, 0.044715
    %v1462 = vmul.f32 %v526, 0.044715
    %v1463 = vmul.f32 %v615, 0.044715
    %v1464 = vmul.f32 %v704, 0.044715
    %v1465 = vmul.f32 %v793, 0.044715
    %v1466 = vmul.f32 %v882, 0.044715
    %v1467 = vmul.f32 %v971, 0.044715
    %v1468 = vmul.f32 %v350, 0.044715
    %v1469 = vmul.f32 %v439, 0.044715
    %v1470 = vmul.f32 %v528, 0.044715
    %v1471 = vmul.f32 %v617, 0.044715
    %v1472 = vmul.f32 %v706, 0.044715
    %v1473 = vmul.f32 %v795, 0.044715
    %v1474 = vmul.f32 %v884, 0.044715
    %v1475 = vmul.f32 %v973, 0.044715
    %v1476 = vmul.f32 %v353, 0.044715
    %v1477 = vmul.f32 %v442, 0.044715
    %v1478 = vmul.f32 %v531, 0.044715
    %v1479 = vmul.f32 %v620, 0.044715
    %v1480 = vmul.f32 %v709, 0.044715
    %v1481 = vmul.f32 %v798, 0.044715
    %v1482 = vmul.f32 %v887, 0.044715
    %v1483 = vmul.f32 %v976, 0.044715
    %v1484 = vmul.f32 %v355, 0.044715
    %v1485 = vmul.f32 %v444, 0.044715
    %v1486 = vmul.f32 %v533, 0.044715
    %v1487 = vmul.f32 %v622, 0.044715
    %v1488 = vmul.f32 %v711, 0.044715
    %v1489 = vmul.f32 %v800, 0.044715
    %v1490 = vmul.f32 %v889, 0.044715
    %v1491 = vmul.f32 %v978, 0.044715
    %v1492 = vmul.f32 %v1236, %v278
    %v1493 = vmul.f32 %v1237, %v367
    %v1494 = vmul.f32 %v1238, %v456
    %v1495 = vmul.f32 %v1239, %v545
    %v1496 = vmul.f32 %v1240, %v634
    %v1497 = vmul.f32 %v1241, %v723
    %v1498 = vmul.f32 %v1242, %v812
    %v1499 = vmul.f32 %v1243, %v901
    %v1500 = vmul.f32 %v1244, %v280
    %v1501 = vmul.f32 %v1245, %v369
    %v1502 = vmul.f32 %v1246, %v458
    %v1503 = vmul.f32 %v1247, %v547
    %v1504 = vmul.f32 %v1248, %v636
    %v1505 = vmul.f32 %v1249, %v725
    %v1506 = vmul.f32 %v1250, %v814
    %v1507 = vmul.f32 %v1251, %v903
    %v1508 = vmul.f32 %v1252, %v283
    %v1509 = vmul.f32 %v1253, %v372
    %v1510 = vmul.f32 %v1254, %v461
    %v1511 = vmul.f32 %v1255, %v550
    %v1512 = vmul.f32 %v1256, %v639
    %v1513 = vmul.f32 %v1257, %v728
    %v1514 = vmul.f32 %v1258, %v817
    %v1515 = vmul.f32 %v1259, %v906
    %v1516 = vmul.f32 %v1260, %v285
    %v1517 = vmul.f32 %v1261, %v374
    %v1518 = vmul.f32 %v1262, %v463
    %v1519 = vmul.f32 %v1263, %v552
    %v1520 = vmul.f32 %v1264, %v641
    %v1521 = vmul.f32 %v1265, %v730
    %v1522 = vmul.f32 %v1266, %v819
    %v1523 = vmul.f32 %v1267, %v908
    %v1524 = vmul.f32 %v1268, %v288
    %v1525 = vmul.f32 %v1269, %v377
    %v1526 = vmul.f32 %v1270, %v466
    %v1527 = vmul.f32 %v1271, %v555
    %v1528 = vmul.f32 %v1272, %v644
    %v1529 = vmul.f32 %v1273, %v733
    %v1530 = vmul.f32 %v1274, %v822
    %v1531 = vmul.f32 %v1275, %v911
    %v1532 = vmul.f32 %v1276, %v290
    %v1533 = vmul.f32 %v1277, %v379
    %v1534 = vmul.f32 %v1278, %v468
    %v1535 = vmul.f32 %v1279, %v557
    %v1536 = vmul.f32 %v1280, %v646
    %v1537 = vmul.f32 %v1281, %v735
    %v1538 = vmul.f32 %v1282, %v824
    %v1539 = vmul.f32 %v1283, %v913
    %v1540 = vmul.f32 %v1284, %v293
    %v1541 = vmul.f32 %v1285, %v382
    %v1542 = vmul.f32 %v1286, %v471
    %v1543 = vmul.f32 %v1287, %v560
    %v1544 = vmul.f32 %v1288, %v649
    %v1545 = vmul.f32 %v1289, %v738
    %v1546 = vmul.f32 %v1290, %v827
    %v1547 = vmul.f32 %v1291, %v916
    %v1548 = vmul.f32 %v1292, %v295
    %v1549 = vmul.f32 %v1293, %v384
    %v1550 = vmul.f32 %v1294, %v473
    %v1551 = vmul.f32 %v1295, %v562
    %v1552 = vmul.f32 %v1296, %v651
    %v1553 = vmul.f32 %v1297, %v740
    %v1554 = vmul.f32 %v1298, %v829
    %v1555 = vmul.f32 %v1299, %v918
    %v1556 = vmul.f32 %v1300, %v298
    %v1557 = vmul.f32 %v1301, %v387
    %v1558 = vmul.f32 %v1302, %v476
    %v1559 = vmul.f32 %v1303, %v565
    %v1560 = vmul.f32 %v1304, %v654
    %v1561 = vmul.f32 %v1305, %v743
    %v1562 = vmul.f32 %v1306, %v832
    %v1563 = vmul.f32 %v1307, %v921
    %v1564 = vmul.f32 %v1308, %v300
    %v1565 = vmul.f32 %v1309, %v389
    %v1566 = vmul.f32 %v1310, %v478
    %v1567 = vmul.f32 %v1311, %v567
    %v1568 = vmul.f32 %v1312, %v656
    %v1569 = vmul.f32 %v1313, %v745
    %v1570 = vmul.f32 %v1314, %v834
    %v1571 = vmul.f32 %v1315, %v923
    %v1572 = vmul.f32 %v1316, %v303
    %v1573 = vmul.f32 %v1317, %v392
    %v1574 = vmul.f32 %v1318, %v481
    %v1575 = vmul.f32 %v1319, %v570
    %v1576 = vmul.f32 %v1320, %v659
    %v1577 = vmul.f32 %v1321, %v748
    %v1578 = vmul.f32 %v1322, %v837
    %v1579 = vmul.f32 %v1323, %v926
    %v1580 = vmul.f32 %v1324, %v305
    %v1581 = vmul.f32 %v1325, %v394
    %v1582 = vmul.f32 %v1326, %v483
    %v1583 = vmul.f32 %v1327, %v572
    %v1584 = vmul.f32 %v1328, %v661
    %v1585 = vmul.f32 %v1329, %v750
    %v1586 = vmul.f32 %v1330, %v839
    %v1587 = vmul.f32 %v1331, %v928
    %v1588 = vmul.f32 %v1332, %v308
    %v1589 = vmul.f32 %v1333, %v397
    %v1590 = vmul.f32 %v1334, %v486
    %v1591 = vmul.f32 %v1335, %v575
    %v1592 = vmul.f32 %v1336, %v664
    %v1593 = vmul.f32 %v1337, %v753
    %v1594 = vmul.f32 %v1338, %v842
    %v1595 = vmul.f32 %v1339, %v931
    %v1596 = vmul.f32 %v1340, %v310
    %v1597 = vmul.f32 %v1341, %v399
    %v1598 = vmul.f32 %v1342, %v488
    %v1599 = vmul.f32 %v1343, %v577
    %v1600 = vmul.f32 %v1344, %v666
    %v1601 = vmul.f32 %v1345, %v755
    %v1602 = vmul.f32 %v1346, %v844
    %v1603 = vmul.f32 %v1347, %v933
    %v1604 = vmul.f32 %v1348, %v313
    %v1605 = vmul.f32 %v1349, %v402
    %v1606 = vmul.f32 %v1350, %v491
    %v1607 = vmul.f32 %v1351, %v580
    %v1608 = vmul.f32 %v1352, %v669
    %v1609 = vmul.f32 %v1353, %v758
    %v1610 = vmul.f32 %v1354, %v847
    %v1611 = vmul.f32 %v1355, %v936
    %v1612 = vmul.f32 %v1356, %v315
    %v1613 = vmul.f32 %v1357, %v404
    %v1614 = vmul.f32 %v1358, %v493
    %v1615 = vmul.f32 %v1359, %v582
    %v1616 = vmul.f32 %v1360, %v671
    %v1617 = vmul.f32 %v1361, %v760
    %v1618 = vmul.f32 %v1362, %v849
    %v1619 = vmul.f32 %v1363, %v938
    %v1620 = vmul.f32 %v1364, %v318
    %v1621 = vmul.f32 %v1365, %v407
    %v1622 = vmul.f32 %v1366, %v496
    %v1623 = vmul.f32 %v1367, %v585
    %v1624 = vmul.f32 %v1368, %v674
    %v1625 = vmul.f32 %v1369, %v763
    %v1626 = vmul.f32 %v1370, %v852
    %v1627 = vmul.f32 %v1371, %v941
    %v1628 = vmul.f32 %v1372, %v320
    %v1629 = vmul.f32 %v1373, %v409
    %v1630 = vmul.f32 %v1374, %v498
    %v1631 = vmul.f32 %v1375, %v587
    %v1632 = vmul.f32 %v1376, %v676
    %v1633 = vmul.f32 %v1377, %v765
    %v1634 = vmul.f32 %v1378, %v854
    %v1635 = vmul.f32 %v1379, %v943
    %v1636 = vmul.f32 %v1380, %v323
    %v1637 = vmul.f32 %v1381, %v412
    %v1638 = vmul.f32 %v1382, %v501
    %v1639 = vmul.f32 %v1383, %v590
    %v1640 = vmul.f32 %v1384, %v679
    %v1641 = vmul.f32 %v1385, %v768
    %v1642 = vmul.f32 %v1386, %v857
    %v1643 = vmul.f32 %v1387, %v946
    %v1644 = vmul.f32 %v1388, %v325
    %v1645 = vmul.f32 %v1389, %v414
    %v1646 = vmul.f32 %v1390, %v503
    %v1647 = vmul.f32 %v1391, %v592
    %v1648 = vmul.f32 %v1392, %v681
    %v1649 = vmul.f32 %v1393, %v770
    %v1650 = vmul.f32 %v1394, %v859
    %v1651 = vmul.f32 %v1395, %v948
    %v1652 = vmul.f32 %v1396, %v328
    %v1653 = vmul.f32 %v1397, %v417
    %v1654 = vmul.f32 %v1398, %v506
    %v1655 = vmul.f32 %v1399, %v595
    %v1656 = vmul.f32 %v1400, %v684
    %v1657 = vmul.f32 %v1401, %v773
    %v1658 = vmul.f32 %v1402, %v862
    %v1659 = vmul.f32 %v1403, %v951
    %v1660 = vmul.f32 %v1404, %v330
    %v1661 = vmul.f32 %v1405, %v419
    %v1662 = vmul.f32 %v1406, %v508
    %v1663 = vmul.f32 %v1407, %v597
    %v1664 = vmul.f32 %v1408, %v686
    %v1665 = vmul.f32 %v1409, %v775
    %v1666 = vmul.f32 %v1410, %v864
    %v1667 = vmul.f32 %v1411, %v953
    %v1668 = vmul.f32 %v1412, %v333
    %v1669 = vmul.f32 %v1413, %v422
    %v1670 = vmul.f32 %v1414, %v511
    %v1671 = vmul.f32 %v1415, %v600
    %v1672 = vmul.f32 %v1416, %v689
    %v1673 = vmul.f32 %v1417, %v778
    %v1674 = vmul.f32 %v1418, %v867
    %v1675 = vmul.f32 %v1419, %v956
    %v1676 = vmul.f32 %v1420, %v335
    %v1677 = vmul.f32 %v1421, %v424
    %v1678 = vmul.f32 %v1422, %v513
    %v1679 = vmul.f32 %v1423, %v602
    %v1680 = vmul.f32 %v1424, %v691
    %v1681 = vmul.f32 %v1425, %v780
    %v1682 = vmul.f32 %v1426, %v869
    %v1683 = vmul.f32 %v1427, %v958
    %v1684 = vmul.f32 %v1428, %v338
    %v1685 = vmul.f32 %v1429, %v427
    %v1686 = vmul.f32 %v1430, %v516
    %v1687 = vmul.f32 %v1431, %v605
    %v1688 = vmul.f32 %v1432, %v694
    %v1689 = vmul.f32 %v1433, %v783
    %v1690 = vmul.f32 %v1434, %v872
    %v1691 = vmul.f32 %v1435, %v961
    %v1692 = vmul.f32 %v1436, %v340
    %v1693 = vmul.f32 %v1437, %v429
    %v1694 = vmul.f32 %v1438, %v518
    %v1695 = vmul.f32 %v1439, %v607
    %v1696 = vmul.f32 %v1440, %v696
    %v1697 = vmul.f32 %v1441, %v785
    %v1698 = vmul.f32 %v1442, %v874
    %v1699 = vmul.f32 %v1443, %v963
    %v1700 = vmul.f32 %v1444, %v343
    %v1701 = vmul.f32 %v1445, %v432
    %v1702 = vmul.f32 %v1446, %v521
    %v1703 = vmul.f32 %v1447, %v610
    %v1704 = vmul.f32 %v1448, %v699
    %v1705 = vmul.f32 %v1449, %v788
    %v1706 = vmul.f32 %v1450, %v877
    %v1707 = vmul.f32 %v1451, %v966
    %v1708 = vmul.f32 %v1452, %v345
    %v1709 = vmul.f32 %v1453, %v434
    %v1710 = vmul.f32 %v1454, %v523
    %v1711 = vmul.f32 %v1455, %v612
    %v1712 = vmul.f32 %v1456, %v701
    %v1713 = vmul.f32 %v1457, %v790
    %v1714 = vmul.f32 %v1458, %v879
    %v1715 = vmul.f32 %v1459, %v968
    %v1716 = vmul.f32 %v1460, %v348
    %v1717 = vmul.f32 %v1461, %v437
    %v1718 = vmul.f32 %v1462, %v526
    %v1719 = vmul.f32 %v1463, %v615
    %v1720 = vmul.f32 %v1464, %v704
    %v1721 = vmul.f32 %v1465, %v793
    %v1722 = vmul.f32 %v1466, %v882
    %v1723 = vmul.f32 %v1467, %v971
    %v1724 = vmul.f32 %v1468, %v350
    %v1725 = vmul.f32 %v1469, %v439
    %v1726 = vmul.f32 %v1470, %v528
    %v1727 = vmul.f32 %v1471, %v617
    %v1728 = vmul.f32 %v1472, %v706
    %v1729 = vmul.f32 %v1473, %v795
    %v1730 = vmul.f32 %v1474, %v884
    %v1731 = vmul.f32 %v1475, %v973
    %v1732 = vmul.f32 %v1476, %v353
    %v1733 = vmul.f32 %v1477, %v442
    %v1734 = vmul.f32 %v1478, %v531
    %v1735 = vmul.f32 %v1479, %v620
    %v1736 = vmul.f32 %v1480, %v709
    %v1737 = vmul.f32 %v1481, %v798
    %v1738 = vmul.f32 %v1482, %v887
    %v1739 = vmul.f32 %v1483, %v976
    %v1740 = vmul.f32 %v1484, %v355
    %v1741 = vmul.f32 %v1485, %v444
    %v1742 = vmul.f32 %v1486, %v533
    %v1743 = vmul.f32 %v1487, %v622
    %v1744 = vmul.f32 %v1488, %v711
    %v1745 = vmul.f32 %v1489, %v800
    %v1746 = vmul.f32 %v1490, %v889
    %v1747 = vmul.f32 %v1491, %v978
    %v1748 = vmul.f32 %v1492, %v278
    %v1749 = vmul.f32 %v1493, %v367
    %v1750 = vmul.f32 %v1494, %v456
    %v1751 = vmul.f32 %v1495, %v545
    %v1752 = vmul.f32 %v1496, %v634
    %v1753 = vmul.f32 %v1497, %v723
    %v1754 = vmul.f32 %v1498, %v812
    %v1755 = vmul.f32 %v1499, %v901
    %v1756 = vmul.f32 %v1500, %v280
    %v1757 = vmul.f32 %v1501, %v369
    %v1758 = vmul.f32 %v1502, %v458
    %v1759 = vmul.f32 %v1503, %v547
    %v1760 = vmul.f32 %v1504, %v636
    %v1761 = vmul.f32 %v1505, %v725
    %v1762 = vmul.f32 %v1506, %v814
    %v1763 = vmul.f32 %v1507, %v903
    %v1764 = vmul.f32 %v1508, %v283
    %v1765 = vmul.f32 %v1509, %v372
    %v1766 = vmul.f32 %v1510, %v461
    %v1767 = vmul.f32 %v1511, %v550
    %v1768 = vmul.f32 %v1512, %v639
    %v1769 = vmul.f32 %v1513, %v728
    %v1770 = vmul.f32 %v1514, %v817
    %v1771 = vmul.f32 %v1515, %v906
    %v1772 = vmul.f32 %v1516, %v285
    %v1773 = vmul.f32 %v1517, %v374
    %v1774 = vmul.f32 %v1518, %v463
    %v1775 = vmul.f32 %v1519, %v552
    %v1776 = vmul.f32 %v1520, %v641
    %v1777 = vmul.f32 %v1521, %v730
    %v1778 = vmul.f32 %v1522, %v819
    %v1779 = vmul.f32 %v1523, %v908
    %v1780 = vmul.f32 %v1524, %v288
    %v1781 = vmul.f32 %v1525, %v377
    %v1782 = vmul.f32 %v1526, %v466
    %v1783 = vmul.f32 %v1527, %v555
    %v1784 = vmul.f32 %v1528, %v644
    %v1785 = vmul.f32 %v1529, %v733
    %v1786 = vmul.f32 %v1530, %v822
    %v1787 = vmul.f32 %v1531, %v911
    %v1788 = vmul.f32 %v1532, %v290
    %v1789 = vmul.f32 %v1533, %v379
    %v1790 = vmul.f32 %v1534, %v468
    %v1791 = vmul.f32 %v1535, %v557
    %v1792 = vmul.f32 %v1536, %v646
    %v1793 = vmul.f32 %v1537, %v735
    %v1794 = vmul.f32 %v1538, %v824
    %v1795 = vmul.f32 %v1539, %v913
    %v1796 = vmul.f32 %v1540, %v293
    %v1797 = vmul.f32 %v1541, %v382
    %v1798 = vmul.f32 %v1542, %v471
    %v1799 = vmul.f32 %v1543, %v560
    %v1800 = vmul.f32 %v1544, %v649
    %v1801 = vmul.f32 %v1545, %v738
    %v1802 = vmul.f32 %v1546, %v827
    %v1803 = vmul.f32 %v1547, %v916
    %v1804 = vmul.f32 %v1548, %v295
    %v1805 = vmul.f32 %v1549, %v384
    %v1806 = vmul.f32 %v1550, %v473
    %v1807 = vmul.f32 %v1551, %v562
    %v1808 = vmul.f32 %v1552, %v651
    %v1809 = vmul.f32 %v1553, %v740
    %v1810 = vmul.f32 %v1554, %v829
    %v1811 = vmul.f32 %v1555, %v918
    %v1812 = vmul.f32 %v1556, %v298
    %v1813 = vmul.f32 %v1557, %v387
    %v1814 = vmul.f32 %v1558, %v476
    %v1815 = vmul.f32 %v1559, %v565
    %v1816 = vmul.f32 %v1560, %v654
    %v1817 = vmul.f32 %v1561, %v743
    %v1818 = vmul.f32 %v1562, %v832
    %v1819 = vmul.f32 %v1563, %v921
    %v1820 = vmul.f32 %v1564, %v300
    %v1821 = vmul.f32 %v1565, %v389
    %v1822 = vmul.f32 %v1566, %v478
    %v1823 = vmul.f32 %v1567, %v567
    %v1824 = vmul.f32 %v1568, %v656
    %v1825 = vmul.f32 %v1569, %v745
    %v1826 = vmul.f32 %v1570, %v834
    %v1827 = vmul.f32 %v1571, %v923
    %v1828 = vmul.f32 %v1572, %v303
    %v1829 = vmul.f32 %v1573, %v392
    %v1830 = vmul.f32 %v1574, %v481
    %v1831 = vmul.f32 %v1575, %v570
    %v1832 = vmul.f32 %v1576, %v659
    %v1833 = vmul.f32 %v1577, %v748
    %v1834 = vmul.f32 %v1578, %v837
    %v1835 = vmul.f32 %v1579, %v926
    %v1836 = vmul.f32 %v1580, %v305
    %v1837 = vmul.f32 %v1581, %v394
    %v1838 = vmul.f32 %v1582, %v483
    %v1839 = vmul.f32 %v1583, %v572
    %v1840 = vmul.f32 %v1584, %v661
    %v1841 = vmul.f32 %v1585, %v750
    %v1842 = vmul.f32 %v1586, %v839
    %v1843 = vmul.f32 %v1587, %v928
    %v1844 = vmul.f32 %v1588, %v308
    %v1845 = vmul.f32 %v1589, %v397
    %v1846 = vmul.f32 %v1590, %v486
    %v1847 = vmul.f32 %v1591, %v575
    %v1848 = vmul.f32 %v1592, %v664
    %v1849 = vmul.f32 %v1593, %v753
    %v1850 = vmul.f32 %v1594, %v842
    %v1851 = vmul.f32 %v1595, %v931
    %v1852 = vmul.f32 %v1596, %v310
    %v1853 = vmul.f32 %v1597, %v399
    %v1854 = vmul.f32 %v1598, %v488
    %v1855 = vmul.f32 %v1599, %v577
    %v1856 = vmul.f32 %v1600, %v666
    %v1857 = vmul.f32 %v1601, %v755
    %v1858 = vmul.f32 %v1602, %v844
    %v1859 = vmul.f32 %v1603, %v933
    %v1860 = vmul.f32 %v1604, %v313
    %v1861 = vmul.f32 %v1605, %v402
    %v1862 = vmul.f32 %v1606, %v491
    %v1863 = vmul.f32 %v1607, %v580
    %v1864 = vmul.f32 %v1608, %v669
    %v1865 = vmul.f32 %v1609, %v758
    %v1866 = vmul.f32 %v1610, %v847
    %v1867 = vmul.f32 %v1611, %v936
    %v1868 = vmul.f32 %v1612, %v315
    %v1869 = vmul.f32 %v1613, %v404
    %v1870 = vmul.f32 %v1614, %v493
    %v1871 = vmul.f32 %v1615, %v582
    %v1872 = vmul.f32 %v1616, %v671
    %v1873 = vmul.f32 %v1617, %v760
    %v1874 = vmul.f32 %v1618, %v849
    %v1875 = vmul.f32 %v1619, %v938
    %v1876 = vmul.f32 %v1620, %v318
    %v1877 = vmul.f32 %v1621, %v407
    %v1878 = vmul.f32 %v1622, %v496
    %v1879 = vmul.f32 %v1623, %v585
    %v1880 = vmul.f32 %v1624, %v674
    %v1881 = vmul.f32 %v1625, %v763
    %v1882 = vmul.f32 %v1626, %v852
    %v1883 = vmul.f32 %v1627, %v941
    %v1884 = vmul.f32 %v1628, %v320
    %v1885 = vmul.f32 %v1629, %v409
    %v1886 = vmul.f32 %v1630, %v498
    %v1887 = vmul.f32 %v1631, %v587
    %v1888 = vmul.f32 %v1632, %v676
    %v1889 = vmul.f32 %v1633, %v765
    %v1890 = vmul.f32 %v1634, %v854
    %v1891 = vmul.f32 %v1635, %v943
    %v1892 = vmul.f32 %v1636, %v323
    %v1893 = vmul.f32 %v1637, %v412
    %v1894 = vmul.f32 %v1638, %v501
    %v1895 = vmul.f32 %v1639, %v590
    %v1896 = vmul.f32 %v1640, %v679
    %v1897 = vmul.f32 %v1641, %v768
    %v1898 = vmul.f32 %v1642, %v857
    %v1899 = vmul.f32 %v1643, %v946
    %v1900 = vmul.f32 %v1644, %v325
    %v1901 = vmul.f32 %v1645, %v414
    %v1902 = vmul.f32 %v1646, %v503
    %v1903 = vmul.f32 %v1647, %v592
    %v1904 = vmul.f32 %v1648, %v681
    %v1905 = vmul.f32 %v1649, %v770
    %v1906 = vmul.f32 %v1650, %v859
    %v1907 = vmul.f32 %v1651, %v948
    %v1908 = vmul.f32 %v1652, %v328
    %v1909 = vmul.f32 %v1653, %v417
    %v1910 = vmul.f32 %v1654, %v506
    %v1911 = vmul.f32 %v1655, %v595
    %v1912 = vmul.f32 %v1656, %v684
    %v1913 = vmul.f32 %v1657, %v773
    %v1914 = vmul.f32 %v1658, %v862
    %v1915 = vmul.f32 %v1659, %v951
    %v1916 = vmul.f32 %v1660, %v330
    %v1917 = vmul.f32 %v1661, %v419
    %v1918 = vmul.f32 %v1662, %v508
    %v1919 = vmul.f32 %v1663, %v597
    %v1920 = vmul.f32 %v1664, %v686
    %v1921 = vmul.f32 %v1665, %v775
    %v1922 = vmul.f32 %v1666, %v864
    %v1923 = vmul.f32 %v1667, %v953
    %v1924 = vmul.f32 %v1668, %v333
    %v1925 = vmul.f32 %v1669, %v422
    %v1926 = vmul.f32 %v1670, %v511
    %v1927 = vmul.f32 %v1671, %v600
    %v1928 = vmul.f32 %v1672, %v689
    %v1929 = vmul.f32 %v1673, %v778
    %v1930 = vmul.f32 %v1674, %v867
    %v1931 = vmul.f32 %v1675, %v956
    %v1932 = vmul.f32 %v1676, %v335
    %v1933 = vmul.f32 %v1677, %v424
    %v1934 = vmul.f32 %v1678, %v513
    %v1935 = vmul.f32 %v1679, %v602
    %v1936 = vmul.f32 %v1680, %v691
    %v1937 = vmul.f32 %v1681, %v780
    %v1938 = vmul.f32 %v1682, %v869
    %v1939 = vmul.f32 %v1683, %v958
    %v1940 = vmul.f32 %v1684, %v338
    %v1941 = vmul.f32 %v1685, %v427
    %v1942 = vmul.f32 %v1686, %v516
    %v1943 = vmul.f32 %v1687, %v605
    %v1944 = vmul.f32 %v1688, %v694
    %v1945 = vmul.f32 %v1689, %v783
    %v1946 = vmul.f32 %v1690, %v872
    %v1947 = vmul.f32 %v1691, %v961
    %v1948 = vmul.f32 %v1692, %v340
    %v1949 = vmul.f32 %v1693, %v429
    %v1950 = vmul.f32 %v1694, %v518
    %v1951 = vmul.f32 %v1695, %v607
    %v1952 = vmul.f32 %v1696, %v696
    %v1953 = vmul.f32 %v1697, %v785
    %v1954 = vmul.f32 %v1698, %v874
    %v1955 = vmul.f32 %v1699, %v963
    %v1956 = vmul.f32 %v1700, %v343
    %v1957 = vmul.f32 %v1701, %v432
    %v1958 = vmul.f32 %v1702, %v521
    %v1959 = vmul.f32 %v1703, %v610
    %v1960 = vmul.f32 %v1704, %v699
    %v1961 = vmul.f32 %v1705, %v788
    %v1962 = vmul.f32 %v1706, %v877
    %v1963 = vmul.f32 %v1707, %v966
    %v1964 = vmul.f32 %v1708, %v345
    %v1965 = vmul.f32 %v1709, %v434
    %v1966 = vmul.f32 %v1710, %v523
    %v1967 = vmul.f32 %v1711, %v612
    %v1968 = vmul.f32 %v1712, %v701
    %v1969 = vmul.f32 %v1713, %v790
    %v1970 = vmul.f32 %v1714, %v879
    %v1971 = vmul.f32 %v1715, %v968
    %v1972 = vmul.f32 %v1716, %v348
    %v1973 = vmul.f32 %v1717, %v437
    %v1974 = vmul.f32 %v1718, %v526
    %v1975 = vmul.f32 %v1719, %v615
    %v1976 = vmul.f32 %v1720, %v704
    %v1977 = vmul.f32 %v1721, %v793
    %v1978 = vmul.f32 %v1722, %v882
    %v1979 = vmul.f32 %v1723, %v971
    %v1980 = vmul.f32 %v1724, %v350
    %v1981 = vmul.f32 %v1725, %v439
    %v1982 = vmul.f32 %v1726, %v528
    %v1983 = vmul.f32 %v1727, %v617
    %v1984 = vmul.f32 %v1728, %v706
    %v1985 = vmul.f32 %v1729, %v795
    %v1986 = vmul.f32 %v1730, %v884
    %v1987 = vmul.f32 %v1731, %v973
    %v1988 = vmul.f32 %v1732, %v353
    %v1989 = vmul.f32 %v1733, %v442
    %v1990 = vmul.f32 %v1734, %v531
    %v1991 = vmul.f32 %v1735, %v620
    %v1992 = vmul.f32 %v1736, %v709
    %v1993 = vmul.f32 %v1737, %v798
    %v1994 = vmul.f32 %v1738, %v887
    %v1995 = vmul.f32 %v1739, %v976
    %v1996 = vmul.f32 %v1740, %v355
    %v1997 = vmul.f32 %v1741, %v444
    %v1998 = vmul.f32 %v1742, %v533
    %v1999 = vmul.f32 %v1743, %v622
    %v2000 = vmul.f32 %v1744, %v711
    %v2001 = vmul.f32 %v1745, %v800
    %v2002 = vmul.f32 %v1746, %v889
    %v2003 = vmul.f32 %v1747, %v978
    %v2004 = vadd.f32 %v278, %v1748
    %v2005 = vadd.f32 %v367, %v1749
    %v2006 = vadd.f32 %v456, %v1750
    %v2007 = vadd.f32 %v545, %v1751
    %v2008 = vadd.f32 %v634, %v1752
    %v2009 = vadd.f32 %v723, %v1753
    %v2010 = vadd.f32 %v812, %v1754
    %v2011 = vadd.f32 %v901, %v1755
    %v2012 = vadd.f32 %v280, %v1756
    %v2013 = vadd.f32 %v369, %v1757
    %v2014 = vadd.f32 %v458, %v1758
    %v2015 = vadd.f32 %v547, %v1759
    %v2016 = vadd.f32 %v636, %v1760
    %v2017 = vadd.f32 %v725, %v1761
    %v2018 = vadd.f32 %v814, %v1762
    %v2019 = vadd.f32 %v903, %v1763
    %v2020 = vadd.f32 %v283, %v1764
    %v2021 = vadd.f32 %v372, %v1765
    %v2022 = vadd.f32 %v461, %v1766
    %v2023 = vadd.f32 %v550, %v1767
    %v2024 = vadd.f32 %v639, %v1768
    %v2025 = vadd.f32 %v728, %v1769
    %v2026 = vadd.f32 %v817, %v1770
    %v2027 = vadd.f32 %v906, %v1771
    %v2028 = vadd.f32 %v285, %v1772
    %v2029 = vadd.f32 %v374, %v1773
    %v2030 = vadd.f32 %v463, %v1774
    %v2031 = vadd.f32 %v552, %v1775
    %v2032 = vadd.f32 %v641, %v1776
    %v2033 = vadd.f32 %v730, %v1777
    %v2034 = vadd.f32 %v819, %v1778
    %v2035 = vadd.f32 %v908, %v1779
    %v2036 = vadd.f32 %v288, %v1780
    %v2037 = vadd.f32 %v377, %v1781
    %v2038 = vadd.f32 %v466, %v1782
    %v2039 = vadd.f32 %v555, %v1783
    %v2040 = vadd.f32 %v644, %v1784
    %v2041 = vadd.f32 %v733, %v1785
    %v2042 = vadd.f32 %v822, %v1786
    %v2043 = vadd.f32 %v911, %v1787
    %v2044 = vadd.f32 %v290, %v1788
    %v2045 = vadd.f32 %v379, %v1789
    %v2046 = vadd.f32 %v468, %v1790
    %v2047 = vadd.f32 %v557, %v1791
    %v2048 = vadd.f32 %v646, %v1792
    %v2049 = vadd.f32 %v735, %v1793
    %v2050 = vadd.f32 %v824, %v1794
    %v2051 = vadd.f32 %v913, %v1795
    %v2052 = vadd.f32 %v293, %v1796
    %v2053 = vadd.f32 %v382, %v1797
    %v2054 = vadd.f32 %v471, %v1798
    %v2055 = vadd.f32 %v560, %v1799
    %v2056 = vadd.f32 %v649, %v1800
    %v2057 = vadd.f32 %v738, %v1801
    %v2058 = vadd.f32 %v827, %v1802
    %v2059 = vadd.f32 %v916, %v1803
    %v2060 = vadd.f32 %v295, %v1804
    %v2061 = vadd.f32 %v384, %v1805
    %v2062 = vadd.f32 %v473, %v1806
    %v2063 = vadd.f32 %v562, %v1807
    %v2064 = vadd.f32 %v651, %v1808
    %v2065 = vadd.f32 %v740, %v1809
    %v2066 = vadd.f32 %v829, %v1810
    %v2067 = vadd.f32 %v918, %v1811
    %v2068 = vadd.f32 %v298, %v1812
    %v2069 = vadd.f32 %v387, %v1813
    %v2070 = vadd.f32 %v476, %v1814
    %v2071 = vadd.f32 %v565, %v1815
    %v2072 = vadd.f32 %v654, %v1816
    %v2073 = vadd.f32 %v743, %v1817
    %v2074 = vadd.f32 %v832, %v1818
    %v2075 = vadd.f32 %v921, %v1819
    %v2076 = vadd.f32 %v300, %v1820
    %v2077 = vadd.f32 %v389, %v1821
    %v2078 = vadd.f32 %v478, %v1822
    %v2079 = vadd.f32 %v567, %v1823
    %v2080 = vadd.f32 %v656, %v1824
    %v2081 = vadd.f32 %v745, %v1825
    %v2082 = vadd.f32 %v834, %v1826
    %v2083 = vadd.f32 %v923, %v1827
    %v2084 = vadd.f32 %v303, %v1828
    %v2085 = vadd.f32 %v392, %v1829
    %v2086 = vadd.f32 %v481, %v1830
    %v2087 = vadd.f32 %v570, %v1831
    %v2088 = vadd.f32 %v659, %v1832
    %v2089 = vadd.f32 %v748, %v1833
    %v2090 = vadd.f32 %v837, %v1834
    %v2091 = vadd.f32 %v926, %v1835
    %v2092 = vadd.f32 %v305, %v1836
    %v2093 = vadd.f32 %v394, %v1837
    %v2094 = vadd.f32 %v483, %v1838
    %v2095 = vadd.f32 %v572, %v1839
    %v2096 = vadd.f32 %v661, %v1840
    %v2097 = vadd.f32 %v750, %v1841
    %v2098 = vadd.f32 %v839, %v1842
    %v2099 = vadd.f32 %v928, %v1843
    %v2100 = vadd.f32 %v308, %v1844
    %v2101 = vadd.f32 %v397, %v1845
    %v2102 = vadd.f32 %v486, %v1846
    %v2103 = vadd.f32 %v575, %v1847
    %v2104 = vadd.f32 %v664, %v1848
    %v2105 = vadd.f32 %v753, %v1849
    %v2106 = vadd.f32 %v842, %v1850
    %v2107 = vadd.f32 %v931, %v1851
    %v2108 = vadd.f32 %v310, %v1852
    %v2109 = vadd.f32 %v399, %v1853
    %v2110 = vadd.f32 %v488, %v1854
    %v2111 = vadd.f32 %v577, %v1855
    %v2112 = vadd.f32 %v666, %v1856
    %v2113 = vadd.f32 %v755, %v1857
    %v2114 = vadd.f32 %v844, %v1858
    %v2115 = vadd.f32 %v933, %v1859
    %v2116 = vadd.f32 %v313, %v1860
    %v2117 = vadd.f32 %v402, %v1861
    %v2118 = vadd.f32 %v491, %v1862
    %v2119 = vadd.f32 %v580, %v1863
    %v2120 = vadd.f32 %v669, %v1864
    %v2121 = vadd.f32 %v758, %v1865
    %v2122 = vadd.f32 %v847, %v1866
    %v2123 = vadd.f32 %v936, %v1867
    %v2124 = vadd.f32 %v315, %v1868
    %v2125 = vadd.f32 %v404, %v1869
    %v2126 = vadd.f32 %v493, %v1870
    %v2127 = vadd.f32 %v582, %v1871
    %v2128 = vadd.f32 %v671, %v1872
    %v2129 = vadd.f32 %v760, %v1873
    %v2130 = vadd.f32 %v849, %v1874
    %v2131 = vadd.f32 %v938, %v1875
    %v2132 = vadd.f32 %v318, %v1876
    %v2133 = vadd.f32 %v407, %v1877
    %v2134 = vadd.f32 %v496, %v1878
    %v2135 = vadd.f32 %v585, %v1879
    %v2136 = vadd.f32 %v674, %v1880
    %v2137 = vadd.f32 %v763, %v1881
    %v2138 = vadd.f32 %v852, %v1882
    %v2139 = vadd.f32 %v941, %v1883
    %v2140 = vadd.f32 %v320, %v1884
    %v2141 = vadd.f32 %v409, %v1885
    %v2142 = vadd.f32 %v498, %v1886
    %v2143 = vadd.f32 %v587, %v1887
    %v2144 = vadd.f32 %v676, %v1888
    %v2145 = vadd.f32 %v765, %v1889
    %v2146 = vadd.f32 %v854, %v1890
    %v2147 = vadd.f32 %v943, %v1891
    %v2148 = vadd.f32 %v323, %v1892
    %v2149 = vadd.f32 %v412, %v1893
    %v2150 = vadd.f32 %v501, %v1894
    %v2151 = vadd.f32 %v590, %v1895
    %v2152 = vadd.f32 %v679, %v1896
    %v2153 = vadd.f32 %v768, %v1897
    %v2154 = vadd.f32 %v857, %v1898
    %v2155 = vadd.f32 %v946, %v1899
    %v2156 = vadd.f32 %v325, %v1900
    %v2157 = vadd.f32 %v414, %v1901
    %v2158 = vadd.f32 %v503, %v1902
    %v2159 = vadd.f32 %v592, %v1903
    %v2160 = vadd.f32 %v681, %v1904
    %v2161 = vadd.f32 %v770, %v1905
    %v2162 = vadd.f32 %v859, %v1906
    %v2163 = vadd.f32 %v948, %v1907
    %v2164 = vadd.f32 %v328, %v1908
    %v2165 = vadd.f32 %v417, %v1909
    %v2166 = vadd.f32 %v506, %v1910
    %v2167 = vadd.f32 %v595, %v1911
    %v2168 = vadd.f32 %v684, %v1912
    %v2169 = vadd.f32 %v773, %v1913
    %v2170 = vadd.f32 %v862, %v1914
    %v2171 = vadd.f32 %v951, %v1915
    %v2172 = vadd.f32 %v330, %v1916
    %v2173 = vadd.f32 %v419, %v1917
    %v2174 = vadd.f32 %v508, %v1918
    %v2175 = vadd.f32 %v597, %v1919
    %v2176 = vadd.f32 %v686, %v1920
    %v2177 = vadd.f32 %v775, %v1921
    %v2178 = vadd.f32 %v864, %v1922
    %v2179 = vadd.f32 %v953, %v1923
    %v2180 = vadd.f32 %v333, %v1924
    %v2181 = vadd.f32 %v422, %v1925
    %v2182 = vadd.f32 %v511, %v1926
    %v2183 = vadd.f32 %v600, %v1927
    %v2184 = vadd.f32 %v689, %v1928
    %v2185 = vadd.f32 %v778, %v1929
    %v2186 = vadd.f32 %v867, %v1930
    %v2187 = vadd.f32 %v956, %v1931
    %v2188 = vadd.f32 %v335, %v1932
    %v2189 = vadd.f32 %v424, %v1933
    %v2190 = vadd.f32 %v513, %v1934
    %v2191 = vadd.f32 %v602, %v1935
    %v2192 = vadd.f32 %v691, %v1936
    %v2193 = vadd.f32 %v780, %v1937
    %v2194 = vadd.f32 %v869, %v1938
    %v2195 = vadd.f32 %v958, %v1939
    %v2196 = vadd.f32 %v338, %v1940
    %v2197 = vadd.f32 %v427, %v1941
    %v2198 = vadd.f32 %v516, %v1942
    %v2199 = vadd.f32 %v605, %v1943
    %v2200 = vadd.f32 %v694, %v1944
    %v2201 = vadd.f32 %v783, %v1945
    %v2202 = vadd.f32 %v872, %v1946
    %v2203 = vadd.f32 %v961, %v1947
    %v2204 = vadd.f32 %v340, %v1948
    %v2205 = vadd.f32 %v429, %v1949
    %v2206 = vadd.f32 %v518, %v1950
    %v2207 = vadd.f32 %v607, %v1951
    %v2208 = vadd.f32 %v696, %v1952
    %v2209 = vadd.f32 %v785, %v1953
    %v2210 = vadd.f32 %v874, %v1954
    %v2211 = vadd.f32 %v963, %v1955
    %v2212 = vadd.f32 %v343, %v1956
    %v2213 = vadd.f32 %v432, %v1957
    %v2214 = vadd.f32 %v521, %v1958
    %v2215 = vadd.f32 %v610, %v1959
    %v2216 = vadd.f32 %v699, %v1960
    %v2217 = vadd.f32 %v788, %v1961
    %v2218 = vadd.f32 %v877, %v1962
    %v2219 = vadd.f32 %v966, %v1963
    %v2220 = vadd.f32 %v345, %v1964
    %v2221 = vadd.f32 %v434, %v1965
    %v2222 = vadd.f32 %v523, %v1966
    %v2223 = vadd.f32 %v612, %v1967
    %v2224 = vadd.f32 %v701, %v1968
    %v2225 = vadd.f32 %v790, %v1969
    %v2226 = vadd.f32 %v879, %v1970
    %v2227 = vadd.f32 %v968, %v1971
    %v2228 = vadd.f32 %v348, %v1972
    %v2229 = vadd.f32 %v437, %v1973
    %v2230 = vadd.f32 %v526, %v1974
    %v2231 = vadd.f32 %v615, %v1975
    %v2232 = vadd.f32 %v704, %v1976
    %v2233 = vadd.f32 %v793, %v1977
    %v2234 = vadd.f32 %v882, %v1978
    %v2235 = vadd.f32 %v971, %v1979
    %v2236 = vadd.f32 %v350, %v1980
    %v2237 = vadd.f32 %v439, %v1981
    %v2238 = vadd.f32 %v528, %v1982
    %v2239 = vadd.f32 %v617, %v1983
    %v2240 = vadd.f32 %v706, %v1984
    %v2241 = vadd.f32 %v795, %v1985
    %v2242 = vadd.f32 %v884, %v1986
    %v2243 = vadd.f32 %v973, %v1987
    %v2244 = vadd.f32 %v353, %v1988
    %v2245 = vadd.f32 %v442, %v1989
    %v2246 = vadd.f32 %v531, %v1990
    %v2247 = vadd.f32 %v620, %v1991
    %v2248 = vadd.f32 %v709, %v1992
    %v2249 = vadd.f32 %v798, %v1993
    %v2250 = vadd.f32 %v887, %v1994
    %v2251 = vadd.f32 %v976, %v1995
    %v2252 = vadd.f32 %v355, %v1996
    %v2253 = vadd.f32 %v444, %v1997
    %v2254 = vadd.f32 %v533, %v1998
    %v2255 = vadd.f32 %v622, %v1999
    %v2256 = vadd.f32 %v711, %v2000
    %v2257 = vadd.f32 %v800, %v2001
    %v2258 = vadd.f32 %v889, %v2002
    %v2259 = vadd.f32 %v978, %v2003
    %v2260 = vmul.f32 %v2004, 0.7978846
    %v2261 = vmul.f32 %v2005, 0.7978846
    %v2262 = vmul.f32 %v2006, 0.7978846
    %v2263 = vmul.f32 %v2007, 0.7978846
    %v2264 = vmul.f32 %v2008, 0.7978846
    %v2265 = vmul.f32 %v2009, 0.7978846
    %v2266 = vmul.f32 %v2010, 0.7978846
    %v2267 = vmul.f32 %v2011, 0.7978846
    %v2268 = vmul.f32 %v2012, 0.7978846
    %v2269 = vmul.f32 %v2013, 0.7978846
    %v2270 = vmul.f32 %v2014, 0.7978846
    %v2271 = vmul.f32 %v2015, 0.7978846
    %v2272 = vmul.f32 %v2016, 0.7978846
    %v2273 = vmul.f32 %v2017, 0.7978846
    %v2274 = vmul.f32 %v2018, 0.7978846
    %v2275 = vmul.f32 %v2019, 0.7978846
    %v2276 = vmul.f32 %v2020, 0.7978846
    %v2277 = vmul.f32 %v2021, 0.7978846
    %v2278 = vmul.f32 %v2022, 0.7978846
    %v2279 = vmul.f32 %v2023, 0.7978846
    %v2280 = vmul.f32 %v2024, 0.7978846
    %v2281 = vmul.f32 %v2025, 0.7978846
    %v2282 = vmul.f32 %v2026, 0.7978846
    %v2283 = vmul.f32 %v2027, 0.7978846
    %v2284 = vmul.f32 %v2028, 0.7978846
    %v2285 = vmul.f32 %v2029, 0.7978846
    %v2286 = vmul.f32 %v2030, 0.7978846
    %v2287 = vmul.f32 %v2031, 0.7978846
    %v2288 = vmul.f32 %v2032, 0.7978846
    %v2289 = vmul.f32 %v2033, 0.7978846
    %v2290 = vmul.f32 %v2034, 0.7978846
    %v2291 = vmul.f32 %v2035, 0.7978846
    %v2292 = vmul.f32 %v2036, 0.7978846
    %v2293 = vmul.f32 %v2037, 0.7978846
    %v2294 = vmul.f32 %v2038, 0.7978846
    %v2295 = vmul.f32 %v2039, 0.7978846
    %v2296 = vmul.f32 %v2040, 0.7978846
    %v2297 = vmul.f32 %v2041, 0.7978846
    %v2298 = vmul.f32 %v2042, 0.7978846
    %v2299 = vmul.f32 %v2043, 0.7978846
    %v2300 = vmul.f32 %v2044, 0.7978846
    %v2301 = vmul.f32 %v2045, 0.7978846
    %v2302 = vmul.f32 %v2046, 0.7978846
    %v2303 = vmul.f32 %v2047, 0.7978846
    %v2304 = vmul.f32 %v2048, 0.7978846
    %v2305 = vmul.f32 %v2049, 0.7978846
    %v2306 = vmul.f32 %v2050, 0.7978846
    %v2307 = vmul.f32 %v2051, 0.7978846
    %v2308 = vmul.f32 %v2052, 0.7978846
    %v2309 = vmul.f32 %v2053, 0.7978846
    %v2310 = vmul.f32 %v2054, 0.7978846
    %v2311 = vmul.f32 %v2055, 0.7978846
    %v2312 = vmul.f32 %v2056, 0.7978846
    %v2313 = vmul.f32 %v2057, 0.7978846
    %v2314 = vmul.f32 %v2058, 0.7978846
    %v2315 = vmul.f32 %v2059, 0.7978846
    %v2316 = vmul.f32 %v2060, 0.7978846
    %v2317 = vmul.f32 %v2061, 0.7978846
    %v2318 = vmul.f32 %v2062, 0.7978846
    %v2319 = vmul.f32 %v2063, 0.7978846
    %v2320 = vmul.f32 %v2064, 0.7978846
    %v2321 = vmul.f32 %v2065, 0.7978846
    %v2322 = vmul.f32 %v2066, 0.7978846
    %v2323 = vmul.f32 %v2067, 0.7978846
    %v2324 = vmul.f32 %v2068, 0.7978846
    %v2325 = vmul.f32 %v2069, 0.7978846
    %v2326 = vmul.f32 %v2070, 0.7978846
    %v2327 = vmul.f32 %v2071, 0.7978846
    %v2328 = vmul.f32 %v2072, 0.7978846
    %v2329 = vmul.f32 %v2073, 0.7978846
    %v2330 = vmul.f32 %v2074, 0.7978846
    %v2331 = vmul.f32 %v2075, 0.7978846
    %v2332 = vmul.f32 %v2076, 0.7978846
    %v2333 = vmul.f32 %v2077, 0.7978846
    %v2334 = vmul.f32 %v2078, 0.7978846
    %v2335 = vmul.f32 %v2079, 0.7978846
    %v2336 = vmul.f32 %v2080, 0.7978846
    %v2337 = vmul.f32 %v2081, 0.7978846
    %v2338 = vmul.f32 %v2082, 0.7978846
    %v2339 = vmul.f32 %v2083, 0.7978846
    %v2340 = vmul.f32 %v2084, 0.7978846
    %v2341 = vmul.f32 %v2085, 0.7978846
    %v2342 = vmul.f32 %v2086, 0.7978846
    %v2343 = vmul.f32 %v2087, 0.7978846
    %v2344 = vmul.f32 %v2088, 0.7978846
    %v2345 = vmul.f32 %v2089, 0.7978846
    %v2346 = vmul.f32 %v2090, 0.7978846
    %v2347 = vmul.f32 %v2091, 0.7978846
    %v2348 = vmul.f32 %v2092, 0.7978846
    %v2349 = vmul.f32 %v2093, 0.7978846
    %v2350 = vmul.f32 %v2094, 0.7978846
    %v2351 = vmul.f32 %v2095, 0.7978846
    %v2352 = vmul.f32 %v2096, 0.7978846
    %v2353 = vmul.f32 %v2097, 0.7978846
    %v2354 = vmul.f32 %v2098, 0.7978846
    %v2355 = vmul.f32 %v2099, 0.7978846
    %v2356 = vmul.f32 %v2100, 0.7978846
    %v2357 = vmul.f32 %v2101, 0.7978846
    %v2358 = vmul.f32 %v2102, 0.7978846
    %v2359 = vmul.f32 %v2103, 0.7978846
    %v2360 = vmul.f32 %v2104, 0.7978846
    %v2361 = vmul.f32 %v2105, 0.7978846
    %v2362 = vmul.f32 %v2106, 0.7978846
    %v2363 = vmul.f32 %v2107, 0.7978846
    %v2364 = vmul.f32 %v2108, 0.7978846
    %v2365 = vmul.f32 %v2109, 0.7978846
    %v2366 = vmul.f32 %v2110, 0.7978846
    %v2367 = vmul.f32 %v2111, 0.7978846
    %v2368 = vmul.f32 %v2112, 0.7978846
    %v2369 = vmul.f32 %v2113, 0.7978846
    %v2370 = vmul.f32 %v2114, 0.7978846
    %v2371 = vmul.f32 %v2115, 0.7978846
    %v2372 = vmul.f32 %v2116, 0.7978846
    %v2373 = vmul.f32 %v2117, 0.7978846
    %v2374 = vmul.f32 %v2118, 0.7978846
    %v2375 = vmul.f32 %v2119, 0.7978846
    %v2376 = vmul.f32 %v2120, 0.7978846
    %v2377 = vmul.f32 %v2121, 0.7978846
    %v2378 = vmul.f32 %v2122, 0.7978846
    %v2379 = vmul.f32 %v2123, 0.7978846
    %v2380 = vmul.f32 %v2124, 0.7978846
    %v2381 = vmul.f32 %v2125, 0.7978846
    %v2382 = vmul.f32 %v2126, 0.7978846
    %v2383 = vmul.f32 %v2127, 0.7978846
    %v2384 = vmul.f32 %v2128, 0.7978846
    %v2385 = vmul.f32 %v2129, 0.7978846
    %v2386 = vmul.f32 %v2130, 0.7978846
    %v2387 = vmul.f32 %v2131, 0.7978846
    %v2388 = vmul.f32 %v2132, 0.7978846
    %v2389 = vmul.f32 %v2133, 0.7978846
    %v2390 = vmul.f32 %v2134, 0.7978846
    %v2391 = vmul.f32 %v2135, 0.7978846
    %v2392 = vmul.f32 %v2136, 0.7978846
    %v2393 = vmul.f32 %v2137, 0.7978846
    %v2394 = vmul.f32 %v2138, 0.7978846
    %v2395 = vmul.f32 %v2139, 0.7978846
    %v2396 = vmul.f32 %v2140, 0.7978846
    %v2397 = vmul.f32 %v2141, 0.7978846
    %v2398 = vmul.f32 %v2142, 0.7978846
    %v2399 = vmul.f32 %v2143, 0.7978846
    %v2400 = vmul.f32 %v2144, 0.7978846
    %v2401 = vmul.f32 %v2145, 0.7978846
    %v2402 = vmul.f32 %v2146, 0.7978846
    %v2403 = vmul.f32 %v2147, 0.7978846
    %v2404 = vmul.f32 %v2148, 0.7978846
    %v2405 = vmul.f32 %v2149, 0.7978846
    %v2406 = vmul.f32 %v2150, 0.7978846
    %v2407 = vmul.f32 %v2151, 0.7978846
    %v2408 = vmul.f32 %v2152, 0.7978846
    %v2409 = vmul.f32 %v2153, 0.7978846
    %v2410 = vmul.f32 %v2154, 0.7978846
    %v2411 = vmul.f32 %v2155, 0.7978846
    %v2412 = vmul.f32 %v2156, 0.7978846
    %v2413 = vmul.f32 %v2157, 0.7978846
    %v2414 = vmul.f32 %v2158, 0.7978846
    %v2415 = vmul.f32 %v2159, 0.7978846
    %v2416 = vmul.f32 %v2160, 0.7978846
    %v2417 = vmul.f32 %v2161, 0.7978846
    %v2418 = vmul.f32 %v2162, 0.7978846
    %v2419 = vmul.f32 %v2163, 0.7978846
    %v2420 = vmul.f32 %v2164, 0.7978846
    %v2421 = vmul.f32 %v2165, 0.7978846
    %v2422 = vmul.f32 %v2166, 0.7978846
    %v2423 = vmul.f32 %v2167, 0.7978846
    %v2424 = vmul.f32 %v2168, 0.7978846
    %v2425 = vmul.f32 %v2169, 0.7978846
    %v2426 = vmul.f32 %v2170, 0.7978846
    %v2427 = vmul.f32 %v2171, 0.7978846
    %v2428 = vmul.f32 %v2172, 0.7978846
    %v2429 = vmul.f32 %v2173, 0.7978846
    %v2430 = vmul.f32 %v2174, 0.7978846
    %v2431 = vmul.f32 %v2175, 0.7978846
    %v2432 = vmul.f32 %v2176, 0.7978846
    %v2433 = vmul.f32 %v2177, 0.7978846
    %v2434 = vmul.f32 %v2178, 0.7978846
    %v2435 = vmul.f32 %v2179, 0.7978846
    %v2436 = vmul.f32 %v2180, 0.7978846
    %v2437 = vmul.f32 %v2181, 0.7978846
    %v2438 = vmul.f32 %v2182, 0.7978846
    %v2439 = vmul.f32 %v2183, 0.7978846
    %v2440 = vmul.f32 %v2184, 0.7978846
    %v2441 = vmul.f32 %v2185, 0.7978846
    %v2442 = vmul.f32 %v2186, 0.7978846
    %v2443 = vmul.f32 %v2187, 0.7978846
    %v2444 = vmul.f32 %v2188, 0.7978846
    %v2445 = vmul.f32 %v2189, 0.7978846
    %v2446 = vmul.f32 %v2190, 0.7978846
    %v2447 = vmul.f32 %v2191, 0.7978846
    %v2448 = vmul.f32 %v2192, 0.7978846
    %v2449 = vmul.f32 %v2193, 0.7978846
    %v2450 = vmul.f32 %v2194, 0.7978846
    %v2451 = vmul.f32 %v2195, 0.7978846
    %v2452 = vmul.f32 %v2196, 0.7978846
    %v2453 = vmul.f32 %v2197, 0.7978846
    %v2454 = vmul.f32 %v2198, 0.7978846
    %v2455 = vmul.f32 %v2199, 0.7978846
    %v2456 = vmul.f32 %v2200, 0.7978846
    %v2457 = vmul.f32 %v2201, 0.7978846
    %v2458 = vmul.f32 %v2202, 0.7978846
    %v2459 = vmul.f32 %v2203, 0.7978846
    %v2460 = vmul.f32 %v2204, 0.7978846
    %v2461 = vmul.f32 %v2205, 0.7978846
    %v2462 = vmul.f32 %v2206, 0.7978846
    %v2463 = vmul.f32 %v2207, 0.7978846
    %v2464 = vmul.f32 %v2208, 0.7978846
    %v2465 = vmul.f32 %v2209, 0.7978846
    %v2466 = vmul.f32 %v2210, 0.7978846
    %v2467 = vmul.f32 %v2211, 0.7978846
    %v2468 = vmul.f32 %v2212, 0.7978846
    %v2469 = vmul.f32 %v2213, 0.7978846
    %v2470 = vmul.f32 %v2214, 0.7978846
    %v2471 = vmul.f32 %v2215, 0.7978846
    %v2472 = vmul.f32 %v2216, 0.7978846
    %v2473 = vmul.f32 %v2217, 0.7978846
    %v2474 = vmul.f32 %v2218, 0.7978846
    %v2475 = vmul.f32 %v2219, 0.7978846
    %v2476 = vmul.f32 %v2220, 0.7978846
    %v2477 = vmul.f32 %v2221, 0.7978846
    %v2478 = vmul.f32 %v2222, 0.7978846
    %v2479 = vmul.f32 %v2223, 0.7978846
    %v2480 = vmul.f32 %v2224, 0.7978846
    %v2481 = vmul.f32 %v2225, 0.7978846
    %v2482 = vmul.f32 %v2226, 0.7978846
    %v2483 = vmul.f32 %v2227, 0.7978846
    %v2484 = vmul.f32 %v2228, 0.7978846
    %v2485 = vmul.f32 %v2229, 0.7978846
    %v2486 = vmul.f32 %v2230, 0.7978846
    %v2487 = vmul.f32 %v2231, 0.7978846
    %v2488 = vmul.f32 %v2232, 0.7978846
    %v2489 = vmul.f32 %v2233, 0.7978846
    %v2490 = vmul.f32 %v2234, 0.7978846
    %v2491 = vmul.f32 %v2235, 0.7978846
    %v2492 = vmul.f32 %v2236, 0.7978846
    %v2493 = vmul.f32 %v2237, 0.7978846
    %v2494 = vmul.f32 %v2238, 0.7978846
    %v2495 = vmul.f32 %v2239, 0.7978846
    %v2496 = vmul.f32 %v2240, 0.7978846
    %v2497 = vmul.f32 %v2241, 0.7978846
    %v2498 = vmul.f32 %v2242, 0.7978846
    %v2499 = vmul.f32 %v2243, 0.7978846
    %v2500 = vmul.f32 %v2244, 0.7978846
    %v2501 = vmul.f32 %v2245, 0.7978846
    %v2502 = vmul.f32 %v2246, 0.7978846
    %v2503 = vmul.f32 %v2247, 0.7978846
    %v2504 = vmul.f32 %v2248, 0.7978846
    %v2505 = vmul.f32 %v2249, 0.7978846
    %v2506 = vmul.f32 %v2250, 0.7978846
    %v2507 = vmul.f32 %v2251, 0.7978846
    %v2508 = vmul.f32 %v2252, 0.7978846
    %v2509 = vmul.f32 %v2253, 0.7978846
    %v2510 = vmul.f32 %v2254, 0.7978846
    %v2511 = vmul.f32 %v2255, 0.7978846
    %v2512 = vmul.f32 %v2256, 0.7978846
    %v2513 = vmul.f32 %v2257, 0.7978846
    %v2514 = vmul.f32 %v2258, 0.7978846
    %v2515 = vmul.f32 %v2259, 0.7978846
    %v2516 = vtanh.pop %v2260
    %v2517 = vtanh.pop %v2261
    %v2518 = vtanh.pop %v2262
    %v2519 = vtanh.pop %v2263
    %v2520 = vtanh.pop %v2264
    %v2521 = vtanh.pop %v2265
    %v2522 = vtanh.pop %v2266
    %v2523 = vtanh.pop %v2267
    %v2524 = vtanh.pop %v2268
    %v2525 = vtanh.pop %v2269
    %v2526 = vtanh.pop %v2270
    %v2527 = vtanh.pop %v2271
    %v2528 = vtanh.pop %v2272
    %v2529 = vtanh.pop %v2273
    %v2530 = vtanh.pop %v2274
    %v2531 = vtanh.pop %v2275
    %v2532 = vtanh.pop %v2276
    %v2533 = vtanh.pop %v2277
    %v2534 = vtanh.pop %v2278
    %v2535 = vtanh.pop %v2279
    %v2536 = vtanh.pop %v2280
    %v2537 = vtanh.pop %v2281
    %v2538 = vtanh.pop %v2282
    %v2539 = vtanh.pop %v2283
    %v2540 = vtanh.pop %v2284
    %v2541 = vtanh.pop %v2285
    %v2542 = vtanh.pop %v2286
    %v2543 = vtanh.pop %v2287
    %v2544 = vtanh.pop %v2288
    %v2545 = vtanh.pop %v2289
    %v2546 = vtanh.pop %v2290
    %v2547 = vtanh.pop %v2291
    %v2548 = vtanh.pop %v2292
    %v2549 = vtanh.pop %v2293
    %v2550 = vtanh.pop %v2294
    %v2551 = vtanh.pop %v2295
    %v2552 = vtanh.pop %v2296
    %v2553 = vtanh.pop %v2297
    %v2554 = vtanh.pop %v2298
    %v2555 = vtanh.pop %v2299
    %v2556 = vtanh.pop %v2300
    %v2557 = vtanh.pop %v2301
    %v2558 = vtanh.pop %v2302
    %v2559 = vtanh.pop %v2303
    %v2560 = vtanh.pop %v2304
    %v2561 = vtanh.pop %v2305
    %v2562 = vtanh.pop %v2306
    %v2563 = vtanh.pop %v2307
    %v2564 = vtanh.pop %v2308
    %v2565 = vtanh.pop %v2309
    %v2566 = vtanh.pop %v2310
    %v2567 = vtanh.pop %v2311
    %v2568 = vtanh.pop %v2312
    %v2569 = vtanh.pop %v2313
    %v2570 = vtanh.pop %v2314
    %v2571 = vtanh.pop %v2315
    %v2572 = vtanh.pop %v2316
    %v2573 = vtanh.pop %v2317
    %v2574 = vtanh.pop %v2318
    %v2575 = vtanh.pop %v2319
    %v2576 = vtanh.pop %v2320
    %v2577 = vtanh.pop %v2321
    %v2578 = vtanh.pop %v2322
    %v2579 = vtanh.pop %v2323
    %v2580 = vtanh.pop %v2324
    %v2581 = vtanh.pop %v2325
    %v2582 = vtanh.pop %v2326
    %v2583 = vtanh.pop %v2327
    %v2584 = vtanh.pop %v2328
    %v2585 = vtanh.pop %v2329
    %v2586 = vtanh.pop %v2330
    %v2587 = vtanh.pop %v2331
    %v2588 = vtanh.pop %v2332
    %v2589 = vtanh.pop %v2333
    %v2590 = vtanh.pop %v2334
    %v2591 = vtanh.pop %v2335
    %v2592 = vtanh.pop %v2336
    %v2593 = vtanh.pop %v2337
    %v2594 = vtanh.pop %v2338
    %v2595 = vtanh.pop %v2339
    %v2596 = vtanh.pop %v2340
    %v2597 = vtanh.pop %v2341
    %v2598 = vtanh.pop %v2342
    %v2599 = vtanh.pop %v2343
    %v2600 = vtanh.pop %v2344
    %v2601 = vtanh.pop %v2345
    %v2602 = vtanh.pop %v2346
    %v2603 = vtanh.pop %v2347
    %v2604 = vtanh.pop %v2348
    %v2605 = vtanh.pop %v2349
    %v2606 = vtanh.pop %v2350
    %v2607 = vtanh.pop %v2351
    %v2608 = vtanh.pop %v2352
    %v2609 = vtanh.pop %v2353
    %v2610 = vtanh.pop %v2354
    %v2611 = vtanh.pop %v2355
    %v2612 = vtanh.pop %v2356
    %v2613 = vtanh.pop %v2357
    %v2614 = vtanh.pop %v2358
    %v2615 = vtanh.pop %v2359
    %v2616 = vtanh.pop %v2360
    %v2617 = vtanh.pop %v2361
    %v2618 = vtanh.pop %v2362
    %v2619 = vtanh.pop %v2363
    %v2620 = vtanh.pop %v2364
    %v2621 = vtanh.pop %v2365
    %v2622 = vtanh.pop %v2366
    %v2623 = vtanh.pop %v2367
    %v2624 = vtanh.pop %v2368
    %v2625 = vtanh.pop %v2369
    %v2626 = vtanh.pop %v2370
    %v2627 = vtanh.pop %v2371
    %v2628 = vtanh.pop %v2372
    %v2629 = vtanh.pop %v2373
    %v2630 = vtanh.pop %v2374
    %v2631 = vtanh.pop %v2375
    %v2632 = vtanh.pop %v2376
    %v2633 = vtanh.pop %v2377
    %v2634 = vtanh.pop %v2378
    %v2635 = vtanh.pop %v2379
    %v2636 = vtanh.pop %v2380
    %v2637 = vtanh.pop %v2381
    %v2638 = vtanh.pop %v2382
    %v2639 = vtanh.pop %v2383
    %v2640 = vtanh.pop %v2384
    %v2641 = vtanh.pop %v2385
    %v2642 = vtanh.pop %v2386
    %v2643 = vtanh.pop %v2387
    %v2644 = vtanh.pop %v2388
    %v2645 = vtanh.pop %v2389
    %v2646 = vtanh.pop %v2390
    %v2647 = vtanh.pop %v2391
    %v2648 = vtanh.pop %v2392
    %v2649 = vtanh.pop %v2393
    %v2650 = vtanh.pop %v2394
    %v2651 = vtanh.pop %v2395
    %v2652 = vtanh.pop %v2396
    %v2653 = vtanh.pop %v2397
    %v2654 = vtanh.pop %v2398
    %v2655 = vtanh.pop %v2399
    %v2656 = vtanh.pop %v2400
    %v2657 = vtanh.pop %v2401
    %v2658 = vtanh.pop %v2402
    %v2659 = vtanh.pop %v2403
    %v2660 = vtanh.pop %v2404
    %v2661 = vtanh.pop %v2405
    %v2662 = vtanh.pop %v2406
    %v2663 = vtanh.pop %v2407
    %v2664 = vtanh.pop %v2408
    %v2665 = vtanh.pop %v2409
    %v2666 = vtanh.pop %v2410
    %v2667 = vtanh.pop %v2411
    %v2668 = vtanh.pop %v2412
    %v2669 = vtanh.pop %v2413
    %v2670 = vtanh.pop %v2414
    %v2671 = vtanh.pop %v2415
    %v2672 = vtanh.pop %v2416
    %v2673 = vtanh.pop %v2417
    %v2674 = vtanh.pop %v2418
    %v2675 = vtanh.pop %v2419
    %v2676 = vtanh.pop %v2420
    %v2677 = vtanh.pop %v2421
    %v2678 = vtanh.pop %v2422
    %v2679 = vtanh.pop %v2423
    %v2680 = vtanh.pop %v2424
    %v2681 = vtanh.pop %v2425
    %v2682 = vtanh.pop %v2426
    %v2683 = vtanh.pop %v2427
    %v2684 = vtanh.pop %v2428
    %v2685 = vtanh.pop %v2429
    %v2686 = vtanh.pop %v2430
    %v2687 = vtanh.pop %v2431
    %v2688 = vtanh.pop %v2432
    %v2689 = vtanh.pop %v2433
    %v2690 = vtanh.pop %v2434
    %v2691 = vtanh.pop %v2435
    %v2692 = vtanh.pop %v2436
    %v2693 = vtanh.pop %v2437
    %v2694 = vtanh.pop %v2438
    %v2695 = vtanh.pop %v2439
    %v2696 = vtanh.pop %v2440
    %v2697 = vtanh.pop %v2441
    %v2698 = vtanh.pop %v2442
    %v2699 = vtanh.pop %v2443
    %v2700 = vtanh.pop %v2444
    %v2701 = vtanh.pop %v2445
    %v2702 = vtanh.pop %v2446
    %v2703 = vtanh.pop %v2447
    %v2704 = vtanh.pop %v2448
    %v2705 = vtanh.pop %v2449
    %v2706 = vtanh.pop %v2450
    %v2707 = vtanh.pop %v2451
    %v2708 = vtanh.pop %v2452
    %v2709 = vtanh.pop %v2453
    %v2710 = vtanh.pop %v2454
    %v2711 = vtanh.pop %v2455
    %v2712 = vtanh.pop %v2456
    %v2713 = vtanh.pop %v2457
    %v2714 = vtanh.pop %v2458
    %v2715 = vtanh.pop %v2459
    %v2716 = vtanh.pop %v2460
    %v2717 = vtanh.pop %v2461
    %v2718 = vtanh.pop %v2462
    %v2719 = vtanh.pop %v2463
    %v2720 = vtanh.pop %v2464
    %v2721 = vtanh.pop %v2465
    %v2722 = vtanh.pop %v2466
    %v2723 = vtanh.pop %v2467
    %v2724 = vtanh.pop %v2468
    %v2725 = vtanh.pop %v2469
    %v2726 = vtanh.pop %v2470
    %v2727 = vtanh.pop %v2471
    %v2728 = vtanh.pop %v2472
    %v2729 = vtanh.pop %v2473
    %v2730 = vtanh.pop %v2474
    %v2731 = vtanh.pop %v2475
    %v2732 = vtanh.pop %v2476
    %v2733 = vtanh.pop %v2477
    %v2734 = vtanh.pop %v2478
    %v2735 = vtanh.pop %v2479
    %v2736 = vtanh.pop %v2480
    %v2737 = vtanh.pop %v2481
    %v2738 = vtanh.pop %v2482
    %v2739 = vtanh.pop %v2483
    %v2740 = vtanh.pop %v2484
    %v2741 = vtanh.pop %v2485
    %v2742 = vtanh.pop %v2486
    %v2743 = vtanh.pop %v2487
    %v2744 = vtanh.pop %v2488
    %v2745 = vtanh.pop %v2489
    %v2746 = vtanh.pop %v2490
    %v2747 = vtanh.pop %v2491
    %v2748 = vtanh.pop %v2492
    %v2749 = vtanh.pop %v2493
    %v2750 = vtanh.pop %v2494
    %v2751 = vtanh.pop %v2495
    %v2752 = vtanh.pop %v2496
    %v2753 = vtanh.pop %v2497
    %v2754 = vtanh.pop %v2498
    %v2755 = vtanh.pop %v2499
    %v2756 = vtanh.pop %v2500
    %v2757 = vtanh.pop %v2501
    %v2758 = vtanh.pop %v2502
    %v2759 = vtanh.pop %v2503
    %v2760 = vtanh.pop %v2504
    %v2761 = vtanh.pop %v2505
    %v2762 = vtanh.pop %v2506
    %v2763 = vtanh.pop %v2507
    %v2764 = vtanh.pop %v2508
    %v2765 = vtanh.pop %v2509
    %v2766 = vtanh.pop %v2510
    %v2767 = vtanh.pop %v2511
    %v2768 = vtanh.pop %v2512
    %v2769 = vtanh.pop %v2513
    %v2770 = vtanh.pop %v2514
    %v2771 = vtanh.pop %v2515
    %v2772 = vadd.f32 %v2516, 1.0
    %v2773 = vadd.f32 %v2517, 1.0
    %v2774 = vadd.f32 %v2518, 1.0
    %v2775 = vadd.f32 %v2519, 1.0
    %v2776 = vadd.f32 %v2520, 1.0
    %v2777 = vadd.f32 %v2521, 1.0
    %v2778 = vadd.f32 %v2522, 1.0
    %v2779 = vadd.f32 %v2523, 1.0
    %v2780 = vadd.f32 %v2524, 1.0
    %v2781 = vadd.f32 %v2525, 1.0
    %v2782 = vadd.f32 %v2526, 1.0
    %v2783 = vadd.f32 %v2527, 1.0
    %v2784 = vadd.f32 %v2528, 1.0
    %v2785 = vadd.f32 %v2529, 1.0
    %v2786 = vadd.f32 %v2530, 1.0
    %v2787 = vadd.f32 %v2531, 1.0
    %v2788 = vadd.f32 %v2532, 1.0
    %v2789 = vadd.f32 %v2533, 1.0
    %v2790 = vadd.f32 %v2534, 1.0
    %v2791 = vadd.f32 %v2535, 1.0
    %v2792 = vadd.f32 %v2536, 1.0
    %v2793 = vadd.f32 %v2537, 1.0
    %v2794 = vadd.f32 %v2538, 1.0
    %v2795 = vadd.f32 %v2539, 1.0
    %v2796 = vadd.f32 %v2540, 1.0
    %v2797 = vadd.f32 %v2541, 1.0
    %v2798 = vadd.f32 %v2542, 1.0
    %v2799 = vadd.f32 %v2543, 1.0
    %v2800 = vadd.f32 %v2544, 1.0
    %v2801 = vadd.f32 %v2545, 1.0
    %v2802 = vadd.f32 %v2546, 1.0
    %v2803 = vadd.f32 %v2547, 1.0
    %v2804 = vadd.f32 %v2548, 1.0
    %v2805 = vadd.f32 %v2549, 1.0
    %v2806 = vadd.f32 %v2550, 1.0
    %v2807 = vadd.f32 %v2551, 1.0
    %v2808 = vadd.f32 %v2552, 1.0
    %v2809 = vadd.f32 %v2553, 1.0
    %v2810 = vadd.f32 %v2554, 1.0
    %v2811 = vadd.f32 %v2555, 1.0
    %v2812 = vadd.f32 %v2556, 1.0
    %v2813 = vadd.f32 %v2557, 1.0
    %v2814 = vadd.f32 %v2558, 1.0
    %v2815 = vadd.f32 %v2559, 1.0
    %v2816 = vadd.f32 %v2560, 1.0
    %v2817 = vadd.f32 %v2561, 1.0
    %v2818 = vadd.f32 %v2562, 1.0
    %v2819 = vadd.f32 %v2563, 1.0
    %v2820 = vadd.f32 %v2564, 1.0
    %v2821 = vadd.f32 %v2565, 1.0
    %v2822 = vadd.f32 %v2566, 1.0
    %v2823 = vadd.f32 %v2567, 1.0
    %v2824 = vadd.f32 %v2568, 1.0
    %v2825 = vadd.f32 %v2569, 1.0
    %v2826 = vadd.f32 %v2570, 1.0
    %v2827 = vadd.f32 %v2571, 1.0
    %v2828 = vadd.f32 %v2572, 1.0
    %v2829 = vadd.f32 %v2573, 1.0
    %v2830 = vadd.f32 %v2574, 1.0
    %v2831 = vadd.f32 %v2575, 1.0
    %v2832 = vadd.f32 %v2576, 1.0
    %v2833 = vadd.f32 %v2577, 1.0
    %v2834 = vadd.f32 %v2578, 1.0
    %v2835 = vadd.f32 %v2579, 1.0
    %v2836 = vadd.f32 %v2580, 1.0
    %v2837 = vadd.f32 %v2581, 1.0
    %v2838 = vadd.f32 %v2582, 1.0
    %v2839 = vadd.f32 %v2583, 1.0
    %v2840 = vadd.f32 %v2584, 1.0
    %v2841 = vadd.f32 %v2585, 1.0
    %v2842 = vadd.f32 %v2586, 1.0
    %v2843 = vadd.f32 %v2587, 1.0
    %v2844 = vadd.f32 %v2588, 1.0
    %v2845 = vadd.f32 %v2589, 1.0
    %v2846 = vadd.f32 %v2590, 1.0
    %v2847 = vadd.f32 %v2591, 1.0
    %v2848 = vadd.f32 %v2592, 1.0
    %v2849 = vadd.f32 %v2593, 1.0
    %v2850 = vadd.f32 %v2594, 1.0
    %v2851 = vadd.f32 %v2595, 1.0
    %v2852 = vadd.f32 %v2596, 1.0
    %v2853 = vadd.f32 %v2597, 1.0
    %v2854 = vadd.f32 %v2598, 1.0
    %v2855 = vadd.f32 %v2599, 1.0
    %v2856 = vadd.f32 %v2600, 1.0
    %v2857 = vadd.f32 %v2601, 1.0
    %v2858 = vadd.f32 %v2602, 1.0
    %v2859 = vadd.f32 %v2603, 1.0
    %v2860 = vadd.f32 %v2604, 1.0
    %v2861 = vadd.f32 %v2605, 1.0
    %v2862 = vadd.f32 %v2606, 1.0
    %v2863 = vadd.f32 %v2607, 1.0
    %v2864 = vadd.f32 %v2608, 1.0
    %v2865 = vadd.f32 %v2609, 1.0
    %v2866 = vadd.f32 %v2610, 1.0
    %v2867 = vadd.f32 %v2611, 1.0
    %v2868 = vadd.f32 %v2612, 1.0
    %v2869 = vadd.f32 %v2613, 1.0
    %v2870 = vadd.f32 %v2614, 1.0
    %v2871 = vadd.f32 %v2615, 1.0
    %v2872 = vadd.f32 %v2616, 1.0
    %v2873 = vadd.f32 %v2617, 1.0
    %v2874 = vadd.f32 %v2618, 1.0
    %v2875 = vadd.f32 %v2619, 1.0
    %v2876 = vadd.f32 %v2620, 1.0
    %v2877 = vadd.f32 %v2621, 1.0
    %v2878 = vadd.f32 %v2622, 1.0
    %v2879 = vadd.f32 %v2623, 1.0
    %v2880 = vadd.f32 %v2624, 1.0
    %v2881 = vadd.f32 %v2625, 1.0
    %v2882 = vadd.f32 %v2626, 1.0
    %v2883 = vadd.f32 %v2627, 1.0
    %v2884 = vadd.f32 %v2628, 1.0
    %v2885 = vadd.f32 %v2629, 1.0
    %v2886 = vadd.f32 %v2630, 1.0
    %v2887 = vadd.f32 %v2631, 1.0
    %v2888 = vadd.f32 %v2632, 1.0
    %v2889 = vadd.f32 %v2633, 1.0
    %v2890 = vadd.f32 %v2634, 1.0
    %v2891 = vadd.f32 %v2635, 1.0
    %v2892 = vadd.f32 %v2636, 1.0
    %v2893 = vadd.f32 %v2637, 1.0
    %v2894 = vadd.f32 %v2638, 1.0
    %v2895 = vadd.f32 %v2639, 1.0
    %v2896 = vadd.f32 %v2640, 1.0
    %v2897 = vadd.f32 %v2641, 1.0
    %v2898 = vadd.f32 %v2642, 1.0
    %v2899 = vadd.f32 %v2643, 1.0
    %v2900 = vadd.f32 %v2644, 1.0
    %v2901 = vadd.f32 %v2645, 1.0
    %v2902 = vadd.f32 %v2646, 1.0
    %v2903 = vadd.f32 %v2647, 1.0
    %v2904 = vadd.f32 %v2648, 1.0
    %v2905 = vadd.f32 %v2649, 1.0
    %v2906 = vadd.f32 %v2650, 1.0
    %v2907 = vadd.f32 %v2651, 1.0
    %v2908 = vadd.f32 %v2652, 1.0
    %v2909 = vadd.f32 %v2653, 1.0
    %v2910 = vadd.f32 %v2654, 1.0
    %v2911 = vadd.f32 %v2655, 1.0
    %v2912 = vadd.f32 %v2656, 1.0
    %v2913 = vadd.f32 %v2657, 1.0
    %v2914 = vadd.f32 %v2658, 1.0
    %v2915 = vadd.f32 %v2659, 1.0
    %v2916 = vadd.f32 %v2660, 1.0
    %v2917 = vadd.f32 %v2661, 1.0
    %v2918 = vadd.f32 %v2662, 1.0
    %v2919 = vadd.f32 %v2663, 1.0
    %v2920 = vadd.f32 %v2664, 1.0
    %v2921 = vadd.f32 %v2665, 1.0
    %v2922 = vadd.f32 %v2666, 1.0
    %v2923 = vadd.f32 %v2667, 1.0
    %v2924 = vadd.f32 %v2668, 1.0
    %v2925 = vadd.f32 %v2669, 1.0
    %v2926 = vadd.f32 %v2670, 1.0
    %v2927 = vadd.f32 %v2671, 1.0
    %v2928 = vadd.f32 %v2672, 1.0
    %v2929 = vadd.f32 %v2673, 1.0
    %v2930 = vadd.f32 %v2674, 1.0
    %v2931 = vadd.f32 %v2675, 1.0
    %v2932 = vadd.f32 %v2676, 1.0
    %v2933 = vadd.f32 %v2677, 1.0
    %v2934 = vadd.f32 %v2678, 1.0
    %v2935 = vadd.f32 %v2679, 1.0
    %v2936 = vadd.f32 %v2680, 1.0
    %v2937 = vadd.f32 %v2681, 1.0
    %v2938 = vadd.f32 %v2682, 1.0
    %v2939 = vadd.f32 %v2683, 1.0
    %v2940 = vadd.f32 %v2684, 1.0
    %v2941 = vadd.f32 %v2685, 1.0
    %v2942 = vadd.f32 %v2686, 1.0
    %v2943 = vadd.f32 %v2687, 1.0
    %v2944 = vadd.f32 %v2688, 1.0
    %v2945 = vadd.f32 %v2689, 1.0
    %v2946 = vadd.f32 %v2690, 1.0
    %v2947 = vadd.f32 %v2691, 1.0
    %v2948 = vadd.f32 %v2692, 1.0
    %v2949 = vadd.f32 %v2693, 1.0
    %v2950 = vadd.f32 %v2694, 1.0
    %v2951 = vadd.f32 %v2695, 1.0
    %v2952 = vadd.f32 %v2696, 1.0
    %v2953 = vadd.f32 %v2697, 1.0
    %v2954 = vadd.f32 %v2698, 1.0
    %v2955 = vadd.f32 %v2699, 1.0
    %v2956 = vadd.f32 %v2700, 1.0
    %v2957 = vadd.f32 %v2701, 1.0
    %v2958 = vadd.f32 %v2702, 1.0
    %v2959 = vadd.f32 %v2703, 1.0
    %v2960 = vadd.f32 %v2704, 1.0
    %v2961 = vadd.f32 %v2705, 1.0
    %v2962 = vadd.f32 %v2706, 1.0
    %v2963 = vadd.f32 %v2707, 1.0
    %v2964 = vadd.f32 %v2708, 1.0
    %v2965 = vadd.f32 %v2709, 1.0
    %v2966 = vadd.f32 %v2710, 1.0
    %v2967 = vadd.f32 %v2711, 1.0
    %v2968 = vadd.f32 %v2712, 1.0
    %v2969 = vadd.f32 %v2713, 1.0
    %v2970 = vadd.f32 %v2714, 1.0
    %v2971 = vadd.f32 %v2715, 1.0
    %v2972 = vadd.f32 %v2716, 1.0
    %v2973 = vadd.f32 %v2717, 1.0
    %v2974 = vadd.f32 %v2718, 1.0
    %v2975 = vadd.f32 %v2719, 1.0
    %v2976 = vadd.f32 %v2720, 1.0
    %v2977 = vadd.f32 %v2721, 1.0
    %v2978 = vadd.f32 %v2722, 1.0
    %v2979 = vadd.f32 %v2723, 1.0
    %v2980 = vadd.f32 %v2724, 1.0
    %v2981 = vadd.f32 %v2725, 1.0
    %v2982 = vadd.f32 %v2726, 1.0
    %v2983 = vadd.f32 %v2727, 1.0
    %v2984 = vadd.f32 %v2728, 1.0
    %v2985 = vadd.f32 %v2729, 1.0
    %v2986 = vadd.f32 %v2730, 1.0
    %v2987 = vadd.f32 %v2731, 1.0
    %v2988 = vadd.f32 %v2732, 1.0
    %v2989 = vadd.f32 %v2733, 1.0
    %v2990 = vadd.f32 %v2734, 1.0
    %v2991 = vadd.f32 %v2735, 1.0
    %v2992 = vadd.f32 %v2736, 1.0
    %v2993 = vadd.f32 %v2737, 1.0
    %v2994 = vadd.f32 %v2738, 1.0
    %v2995 = vadd.f32 %v2739, 1.0
    %v2996 = vadd.f32 %v2740, 1.0
    %v2997 = vadd.f32 %v2741, 1.0
    %v2998 = vadd.f32 %v2742, 1.0
    %v2999 = vadd.f32 %v2743, 1.0
    %v3000 = vadd.f32 %v2744, 1.0
    %v3001 = vadd.f32 %v2745, 1.0
    %v3002 = vadd.f32 %v2746, 1.0
    %v3003 = vadd.f32 %v2747, 1.0
    %v3004 = vadd.f32 %v2748, 1.0
    %v3005 = vadd.f32 %v2749, 1.0
    %v3006 = vadd.f32 %v2750, 1.0
    %v3007 = vadd.f32 %v2751, 1.0
    %v3008 = vadd.f32 %v2752, 1.0
    %v3009 = vadd.f32 %v2753, 1.0
    %v3010 = vadd.f32 %v2754, 1.0
    %v3011 = vadd.f32 %v2755, 1.0
    %v3012 = vadd.f32 %v2756, 1.0
    %v3013 = vadd.f32 %v2757, 1.0
    %v3014 = vadd.f32 %v2758, 1.0
    %v3015 = vadd.f32 %v2759, 1.0
    %v3016 = vadd.f32 %v2760, 1.0
    %v3017 = vadd.f32 %v2761, 1.0
    %v3018 = vadd.f32 %v2762, 1.0
    %v3019 = vadd.f32 %v2763, 1.0
    %v3020 = vadd.f32 %v2764, 1.0
    %v3021 = vadd.f32 %v2765, 1.0
    %v3022 = vadd.f32 %v2766, 1.0
    %v3023 = vadd.f32 %v2767, 1.0
    %v3024 = vadd.f32 %v2768, 1.0
    %v3025 = vadd.f32 %v2769, 1.0
    %v3026 = vadd.f32 %v2770, 1.0
    %v3027 = vadd.f32 %v2771, 1.0
    %v3028 = vmul.f32 %v980, %v2772
    %v3029 = vmul.f32 %v981, %v2773
    %v3030 = vmul.f32 %v982, %v2774
    %v3031 = vmul.f32 %v983, %v2775
    %v3032 = vmul.f32 %v984, %v2776
    %v3033 = vmul.f32 %v985, %v2777
    %v3034 = vmul.f32 %v986, %v2778
    %v3035 = vmul.f32 %v987, %v2779
    %v3036 = vmul.f32 %v988, %v2780
    %v3037 = vmul.f32 %v989, %v2781
    %v3038 = vmul.f32 %v990, %v2782
    %v3039 = vmul.f32 %v991, %v2783
    %v3040 = vmul.f32 %v992, %v2784
    %v3041 = vmul.f32 %v993, %v2785
    %v3042 = vmul.f32 %v994, %v2786
    %v3043 = vmul.f32 %v995, %v2787
    %v3044 = vmul.f32 %v996, %v2788
    %v3045 = vmul.f32 %v997, %v2789
    %v3046 = vmul.f32 %v998, %v2790
    %v3047 = vmul.f32 %v999, %v2791
    %v3048 = vmul.f32 %v1000, %v2792
    %v3049 = vmul.f32 %v1001, %v2793
    %v3050 = vmul.f32 %v1002, %v2794
    %v3051 = vmul.f32 %v1003, %v2795
    %v3052 = vmul.f32 %v1004, %v2796
    %v3053 = vmul.f32 %v1005, %v2797
    %v3054 = vmul.f32 %v1006, %v2798
    %v3055 = vmul.f32 %v1007, %v2799
    %v3056 = vmul.f32 %v1008, %v2800
    %v3057 = vmul.f32 %v1009, %v2801
    %v3058 = vmul.f32 %v1010, %v2802
    %v3059 = vmul.f32 %v1011, %v2803
    %v3060 = vmul.f32 %v1012, %v2804
    %v3061 = vmul.f32 %v1013, %v2805
    %v3062 = vmul.f32 %v1014, %v2806
    %v3063 = vmul.f32 %v1015, %v2807
    %v3064 = vmul.f32 %v1016, %v2808
    %v3065 = vmul.f32 %v1017, %v2809
    %v3066 = vmul.f32 %v1018, %v2810
    %v3067 = vmul.f32 %v1019, %v2811
    %v3068 = vmul.f32 %v1020, %v2812
    %v3069 = vmul.f32 %v1021, %v2813
    %v3070 = vmul.f32 %v1022, %v2814
    %v3071 = vmul.f32 %v1023, %v2815
    %v3072 = vmul.f32 %v1024, %v2816
    %v3073 = vmul.f32 %v1025, %v2817
    %v3074 = vmul.f32 %v1026, %v2818
    %v3075 = vmul.f32 %v1027, %v2819
    %v3076 = vmul.f32 %v1028, %v2820
    %v3077 = vmul.f32 %v1029, %v2821
    %v3078 = vmul.f32 %v1030, %v2822
    %v3079 = vmul.f32 %v1031, %v2823
    %v3080 = vmul.f32 %v1032, %v2824
    %v3081 = vmul.f32 %v1033, %v2825
    %v3082 = vmul.f32 %v1034, %v2826
    %v3083 = vmul.f32 %v1035, %v2827
    %v3084 = vmul.f32 %v1036, %v2828
    %v3085 = vmul.f32 %v1037, %v2829
    %v3086 = vmul.f32 %v1038, %v2830
    %v3087 = vmul.f32 %v1039, %v2831
    %v3088 = vmul.f32 %v1040, %v2832
    %v3089 = vmul.f32 %v1041, %v2833
    %v3090 = vmul.f32 %v1042, %v2834
    %v3091 = vmul.f32 %v1043, %v2835
    %v3092 = vmul.f32 %v1044, %v2836
    %v3093 = vmul.f32 %v1045, %v2837
    %v3094 = vmul.f32 %v1046, %v2838
    %v3095 = vmul.f32 %v1047, %v2839
    %v3096 = vmul.f32 %v1048, %v2840
    %v3097 = vmul.f32 %v1049, %v2841
    %v3098 = vmul.f32 %v1050, %v2842
    %v3099 = vmul.f32 %v1051, %v2843
    %v3100 = vmul.f32 %v1052, %v2844
    %v3101 = vmul.f32 %v1053, %v2845
    %v3102 = vmul.f32 %v1054, %v2846
    %v3103 = vmul.f32 %v1055, %v2847
    %v3104 = vmul.f32 %v1056, %v2848
    %v3105 = vmul.f32 %v1057, %v2849
    %v3106 = vmul.f32 %v1058, %v2850
    %v3107 = vmul.f32 %v1059, %v2851
    %v3108 = vmul.f32 %v1060, %v2852
    %v3109 = vmul.f32 %v1061, %v2853
    %v3110 = vmul.f32 %v1062, %v2854
    %v3111 = vmul.f32 %v1063, %v2855
    %v3112 = vmul.f32 %v1064, %v2856
    %v3113 = vmul.f32 %v1065, %v2857
    %v3114 = vmul.f32 %v1066, %v2858
    %v3115 = vmul.f32 %v1067, %v2859
    %v3116 = vmul.f32 %v1068, %v2860
    %v3117 = vmul.f32 %v1069, %v2861
    %v3118 = vmul.f32 %v1070, %v2862
    %v3119 = vmul.f32 %v1071, %v2863
    %v3120 = vmul.f32 %v1072, %v2864
    %v3121 = vmul.f32 %v1073, %v2865
    %v3122 = vmul.f32 %v1074, %v2866
    %v3123 = vmul.f32 %v1075, %v2867
    %v3124 = vmul.f32 %v1076, %v2868
    %v3125 = vmul.f32 %v1077, %v2869
    %v3126 = vmul.f32 %v1078, %v2870
    %v3127 = vmul.f32 %v1079, %v2871
    %v3128 = vmul.f32 %v1080, %v2872
    %v3129 = vmul.f32 %v1081, %v2873
    %v3130 = vmul.f32 %v1082, %v2874
    %v3131 = vmul.f32 %v1083, %v2875
    %v3132 = vmul.f32 %v1084, %v2876
    %v3133 = vmul.f32 %v1085, %v2877
    %v3134 = vmul.f32 %v1086, %v2878
    %v3135 = vmul.f32 %v1087, %v2879
    %v3136 = vmul.f32 %v1088, %v2880
    %v3137 = vmul.f32 %v1089, %v2881
    %v3138 = vmul.f32 %v1090, %v2882
    %v3139 = vmul.f32 %v1091, %v2883
    %v3140 = vmul.f32 %v1092, %v2884
    %v3141 = vmul.f32 %v1093, %v2885
    %v3142 = vmul.f32 %v1094, %v2886
    %v3143 = vmul.f32 %v1095, %v2887
    %v3144 = vmul.f32 %v1096, %v2888
    %v3145 = vmul.f32 %v1097, %v2889
    %v3146 = vmul.f32 %v1098, %v2890
    %v3147 = vmul.f32 %v1099, %v2891
    %v3148 = vmul.f32 %v1100, %v2892
    %v3149 = vmul.f32 %v1101, %v2893
    %v3150 = vmul.f32 %v1102, %v2894
    %v3151 = vmul.f32 %v1103, %v2895
    %v3152 = vmul.f32 %v1104, %v2896
    %v3153 = vmul.f32 %v1105, %v2897
    %v3154 = vmul.f32 %v1106, %v2898
    %v3155 = vmul.f32 %v1107, %v2899
    %v3156 = vmul.f32 %v1108, %v2900
    %v3157 = vmul.f32 %v1109, %v2901
    %v3158 = vmul.f32 %v1110, %v2902
    %v3159 = vmul.f32 %v1111, %v2903
    %v3160 = vmul.f32 %v1112, %v2904
    %v3161 = vmul.f32 %v1113, %v2905
    %v3162 = vmul.f32 %v1114, %v2906
    %v3163 = vmul.f32 %v1115, %v2907
    %v3164 = vmul.f32 %v1116, %v2908
    %v3165 = vmul.f32 %v1117, %v2909
    %v3166 = vmul.f32 %v1118, %v2910
    %v3167 = vmul.f32 %v1119, %v2911
    %v3168 = vmul.f32 %v1120, %v2912
    %v3169 = vmul.f32 %v1121, %v2913
    %v3170 = vmul.f32 %v1122, %v2914
    %v3171 = vmul.f32 %v1123, %v2915
    %v3172 = vmul.f32 %v1124, %v2916
    %v3173 = vmul.f32 %v1125, %v2917
    %v3174 = vmul.f32 %v1126, %v2918
    %v3175 = vmul.f32 %v1127, %v2919
    %v3176 = vmul.f32 %v1128, %v2920
    %v3177 = vmul.f32 %v1129, %v2921
    %v3178 = vmul.f32 %v1130, %v2922
    %v3179 = vmul.f32 %v1131, %v2923
    %v3180 = vmul.f32 %v1132, %v2924
    %v3181 = vmul.f32 %v1133, %v2925
    %v3182 = vmul.f32 %v1134, %v2926
    %v3183 = vmul.f32 %v1135, %v2927
    %v3184 = vmul.f32 %v1136, %v2928
    %v3185 = vmul.f32 %v1137, %v2929
    %v3186 = vmul.f32 %v1138, %v2930
    %v3187 = vmul.f32 %v1139, %v2931
    %v3188 = vmul.f32 %v1140, %v2932
    %v3189 = vmul.f32 %v1141, %v2933
    %v3190 = vmul.f32 %v1142, %v2934
    %v3191 = vmul.f32 %v1143, %v2935
    %v3192 = vmul.f32 %v1144, %v2936
    %v3193 = vmul.f32 %v1145, %v2937
    %v3194 = vmul.f32 %v1146, %v2938
    %v3195 = vmul.f32 %v1147, %v2939
    %v3196 = vmul.f32 %v1148, %v2940
    %v3197 = vmul.f32 %v1149, %v2941
    %v3198 = vmul.f32 %v1150, %v2942
    %v3199 = vmul.f32 %v1151, %v2943
    %v3200 = vmul.f32 %v1152, %v2944
    %v3201 = vmul.f32 %v1153, %v2945
    %v3202 = vmul.f32 %v1154, %v2946
    %v3203 = vmul.f32 %v1155, %v2947
    %v3204 = vmul.f32 %v1156, %v2948
    %v3205 = vmul.f32 %v1157, %v2949
    %v3206 = vmul.f32 %v1158, %v2950
    %v3207 = vmul.f32 %v1159, %v2951
    %v3208 = vmul.f32 %v1160, %v2952
    %v3209 = vmul.f32 %v1161, %v2953
    %v3210 = vmul.f32 %v1162, %v2954
    %v3211 = vmul.f32 %v1163, %v2955
    %v3212 = vmul.f32 %v1164, %v2956
    %v3213 = vmul.f32 %v1165, %v2957
    %v3214 = vmul.f32 %v1166, %v2958
    %v3215 = vmul.f32 %v1167, %v2959
    %v3216 = vmul.f32 %v1168, %v2960
    %v3217 = vmul.f32 %v1169, %v2961
    %v3218 = vmul.f32 %v1170, %v2962
    %v3219 = vmul.f32 %v1171, %v2963
    %v3220 = vmul.f32 %v1172, %v2964
    %v3221 = vmul.f32 %v1173, %v2965
    %v3222 = vmul.f32 %v1174, %v2966
    %v3223 = vmul.f32 %v1175, %v2967
    %v3224 = vmul.f32 %v1176, %v2968
    %v3225 = vmul.f32 %v1177, %v2969
    %v3226 = vmul.f32 %v1178, %v2970
    %v3227 = vmul.f32 %v1179, %v2971
    %v3228 = vmul.f32 %v1180, %v2972
    %v3229 = vmul.f32 %v1181, %v2973
    %v3230 = vmul.f32 %v1182, %v2974
    %v3231 = vmul.f32 %v1183, %v2975
    %v3232 = vmul.f32 %v1184, %v2976
    %v3233 = vmul.f32 %v1185, %v2977
    %v3234 = vmul.f32 %v1186, %v2978
    %v3235 = vmul.f32 %v1187, %v2979
    %v3236 = vmul.f32 %v1188, %v2980
    %v3237 = vmul.f32 %v1189, %v2981
    %v3238 = vmul.f32 %v1190, %v2982
    %v3239 = vmul.f32 %v1191, %v2983
    %v3240 = vmul.f32 %v1192, %v2984
    %v3241 = vmul.f32 %v1193, %v2985
    %v3242 = vmul.f32 %v1194, %v2986
    %v3243 = vmul.f32 %v1195, %v2987
    %v3244 = vmul.f32 %v1196, %v2988
    %v3245 = vmul.f32 %v1197, %v2989
    %v3246 = vmul.f32 %v1198, %v2990
    %v3247 = vmul.f32 %v1199, %v2991
    %v3248 = vmul.f32 %v1200, %v2992
    %v3249 = vmul.f32 %v1201, %v2993
    %v3250 = vmul.f32 %v1202, %v2994
    %v3251 = vmul.f32 %v1203, %v2995
    %v3252 = vmul.f32 %v1204, %v2996
    %v3253 = vmul.f32 %v1205, %v2997
    %v3254 = vmul.f32 %v1206, %v2998
    %v3255 = vmul.f32 %v1207, %v2999
    %v3256 = vmul.f32 %v1208, %v3000
    %v3257 = vmul.f32 %v1209, %v3001
    %v3258 = vmul.f32 %v1210, %v3002
    %v3259 = vmul.f32 %v1211, %v3003
    %v3260 = vmul.f32 %v1212, %v3004
    %v3261 = vmul.f32 %v1213, %v3005
    %v3262 = vmul.f32 %v1214, %v3006
    %v3263 = vmul.f32 %v1215, %v3007
    %v3264 = vmul.f32 %v1216, %v3008
    %v3265 = vmul.f32 %v1217, %v3009
    %v3266 = vmul.f32 %v1218, %v3010
    %v3267 = vmul.f32 %v1219, %v3011
    %v3268 = vmul.f32 %v1220, %v3012
    %v3269 = vmul.f32 %v1221, %v3013
    %v3270 = vmul.f32 %v1222, %v3014
    %v3271 = vmul.f32 %v1223, %v3015
    %v3272 = vmul.f32 %v1224, %v3016
    %v3273 = vmul.f32 %v1225, %v3017
    %v3274 = vmul.f32 %v1226, %v3018
    %v3275 = vmul.f32 %v1227, %v3019
    %v3276 = vmul.f32 %v1228, %v3020
    %v3277 = vmul.f32 %v1229, %v3021
    %v3278 = vmul.f32 %v1230, %v3022
    %v3279 = vmul.f32 %v1231, %v3023
    %v3280 = vmul.f32 %v1232, %v3024
    %v3281 = vmul.f32 %v1233, %v3025
    %v3282 = vmul.f32 %v1234, %v3026
    %v3283 = vmul.f32 %v1235, %v3027
    %v3284 = vpack.c.bf16 %v3036, %v3028
    %v3285 = vpack.c.bf16 %v3037, %v3029
    %v3286 = vpack.c.bf16 %v3038, %v3030
    %v3287 = vpack.c.bf16 %v3039, %v3031
    %v3288 = vpack.c.bf16 %v3040, %v3032
    %v3289 = vpack.c.bf16 %v3041, %v3033
    %v3290 = vpack.c.bf16 %v3042, %v3034
    %v3291 = vpack.c.bf16 %v3043, %v3035
    %v3292 = vpack.c.bf16 %v3052, %v3044
    %v3293 = vpack.c.bf16 %v3053, %v3045
    %v3294 = vpack.c.bf16 %v3054, %v3046
    %v3295 = vpack.c.bf16 %v3055, %v3047
    %v3296 = vpack.c.bf16 %v3056, %v3048
    %v3297 = vpack.c.bf16 %v3057, %v3049
    %v3298 = vpack.c.bf16 %v3058, %v3050
    %v3299 = vpack.c.bf16 %v3059, %v3051
    %v3300 = vpack.c.bf16 %v3068, %v3060
    %v3301 = vpack.c.bf16 %v3069, %v3061
    %v3302 = vpack.c.bf16 %v3070, %v3062
    %v3303 = vpack.c.bf16 %v3071, %v3063
    %v3304 = vpack.c.bf16 %v3072, %v3064
    %v3305 = vpack.c.bf16 %v3073, %v3065
    %v3306 = vpack.c.bf16 %v3074, %v3066
    %v3307 = vpack.c.bf16 %v3075, %v3067
    %v3308 = vpack.c.bf16 %v3084, %v3076
    %v3309 = vpack.c.bf16 %v3085, %v3077
    %v3310 = vpack.c.bf16 %v3086, %v3078
    %v3311 = vpack.c.bf16 %v3087, %v3079
    %v3312 = vpack.c.bf16 %v3088, %v3080
    %v3313 = vpack.c.bf16 %v3089, %v3081
    %v3314 = vpack.c.bf16 %v3090, %v3082
    %v3315 = vpack.c.bf16 %v3091, %v3083
    %v3316 = vpack.c.bf16 %v3100, %v3092
    %v3317 = vpack.c.bf16 %v3101, %v3093
    %v3318 = vpack.c.bf16 %v3102, %v3094
    %v3319 = vpack.c.bf16 %v3103, %v3095
    %v3320 = vpack.c.bf16 %v3104, %v3096
    %v3321 = vpack.c.bf16 %v3105, %v3097
    %v3322 = vpack.c.bf16 %v3106, %v3098
    %v3323 = vpack.c.bf16 %v3107, %v3099
    %v3324 = vpack.c.bf16 %v3116, %v3108
    %v3325 = vpack.c.bf16 %v3117, %v3109
    %v3326 = vpack.c.bf16 %v3118, %v3110
    %v3327 = vpack.c.bf16 %v3119, %v3111
    %v3328 = vpack.c.bf16 %v3120, %v3112
    %v3329 = vpack.c.bf16 %v3121, %v3113
    %v3330 = vpack.c.bf16 %v3122, %v3114
    %v3331 = vpack.c.bf16 %v3123, %v3115
    %v3332 = vpack.c.bf16 %v3132, %v3124
    %v3333 = vpack.c.bf16 %v3133, %v3125
    %v3334 = vpack.c.bf16 %v3134, %v3126
    %v3335 = vpack.c.bf16 %v3135, %v3127
    %v3336 = vpack.c.bf16 %v3136, %v3128
    %v3337 = vpack.c.bf16 %v3137, %v3129
    %v3338 = vpack.c.bf16 %v3138, %v3130
    %v3339 = vpack.c.bf16 %v3139, %v3131
    %v3340 = vpack.c.bf16 %v3148, %v3140
    %v3341 = vpack.c.bf16 %v3149, %v3141
    %v3342 = vpack.c.bf16 %v3150, %v3142
    %v3343 = vpack.c.bf16 %v3151, %v3143
    %v3344 = vpack.c.bf16 %v3152, %v3144
    %v3345 = vpack.c.bf16 %v3153, %v3145
    %v3346 = vpack.c.bf16 %v3154, %v3146
    %v3347 = vpack.c.bf16 %v3155, %v3147
    %v3348 = vpack.c.bf16 %v3164, %v3156
    %v3349 = vpack.c.bf16 %v3165, %v3157
    %v3350 = vpack.c.bf16 %v3166, %v3158
    %v3351 = vpack.c.bf16 %v3167, %v3159
    %v3352 = vpack.c.bf16 %v3168, %v3160
    %v3353 = vpack.c.bf16 %v3169, %v3161
    %v3354 = vpack.c.bf16 %v3170, %v3162
    %v3355 = vpack.c.bf16 %v3171, %v3163
    %v3356 = vpack.c.bf16 %v3180, %v3172
    %v3357 = vpack.c.bf16 %v3181, %v3173
    %v3358 = vpack.c.bf16 %v3182, %v3174
    %v3359 = vpack.c.bf16 %v3183, %v3175
    %v3360 = vpack.c.bf16 %v3184, %v3176
    %v3361 = vpack.c.bf16 %v3185, %v3177
    %v3362 = vpack.c.bf16 %v3186, %v3178
    %v3363 = vpack.c.bf16 %v3187, %v3179
    %v3364 = vpack.c.bf16 %v3196, %v3188
    %v3365 = vpack.c.bf16 %v3197, %v3189
    %v3366 = vpack.c.bf16 %v3198, %v3190
    %v3367 = vpack.c.bf16 %v3199, %v3191
    %v3368 = vpack.c.bf16 %v3200, %v3192
    %v3369 = vpack.c.bf16 %v3201, %v3193
    %v3370 = vpack.c.bf16 %v3202, %v3194
    %v3371 = vpack.c.bf16 %v3203, %v3195
    %v3372 = vpack.c.bf16 %v3212, %v3204
    %v3373 = vpack.c.bf16 %v3213, %v3205
    %v3374 = vpack.c.bf16 %v3214, %v3206
    %v3375 = vpack.c.bf16 %v3215, %v3207
    %v3376 = vpack.c.bf16 %v3216, %v3208
    %v3377 = vpack.c.bf16 %v3217, %v3209
    %v3378 = vpack.c.bf16 %v3218, %v3210
    %v3379 = vpack.c.bf16 %v3219, %v3211
    %v3380 = vpack.c.bf16 %v3228, %v3220
    %v3381 = vpack.c.bf16 %v3229, %v3221
    %v3382 = vpack.c.bf16 %v3230, %v3222
    %v3383 = vpack.c.bf16 %v3231, %v3223
    %v3384 = vpack.c.bf16 %v3232, %v3224
    %v3385 = vpack.c.bf16 %v3233, %v3225
    %v3386 = vpack.c.bf16 %v3234, %v3226
    %v3387 = vpack.c.bf16 %v3235, %v3227
    %v3388 = vpack.c.bf16 %v3244, %v3236
    %v3389 = vpack.c.bf16 %v3245, %v3237
    %v3390 = vpack.c.bf16 %v3246, %v3238
    %v3391 = vpack.c.bf16 %v3247, %v3239
    %v3392 = vpack.c.bf16 %v3248, %v3240
    %v3393 = vpack.c.bf16 %v3249, %v3241
    %v3394 = vpack.c.bf16 %v3250, %v3242
    %v3395 = vpack.c.bf16 %v3251, %v3243
    %v3396 = vpack.c.bf16 %v3260, %v3252
    %v3397 = vpack.c.bf16 %v3261, %v3253
    %v3398 = vpack.c.bf16 %v3262, %v3254
    %v3399 = vpack.c.bf16 %v3263, %v3255
    %v3400 = vpack.c.bf16 %v3264, %v3256
    %v3401 = vpack.c.bf16 %v3265, %v3257
    %v3402 = vpack.c.bf16 %v3266, %v3258
    %v3403 = vpack.c.bf16 %v3267, %v3259
    %v3404 = vpack.c.bf16 %v3276, %v3268
    %v3405 = vpack.c.bf16 %v3277, %v3269
    %v3406 = vpack.c.bf16 %v3278, %v3270
    %v3407 = vpack.c.bf16 %v3279, %v3271
    %v3408 = vpack.c.bf16 %v3280, %v3272
    %v3409 = vpack.c.bf16 %v3281, %v3273
    %v3410 = vpack.c.bf16 %v3282, %v3274
    %v3411 = vpack.c.bf16 %v3283, %v3275
    %v3412 = vld [vmem:[#allocation3] sm:$0xf]
    %v3413 = vld [vmem:[#allocation3 + $0x4] sm:$0xf]
    %v3414 = vld [vmem:[#allocation3 + $0x8] sm:$0xf]
    %v3415 = vld [vmem:[#allocation3 + $0xc] sm:$0xf]
    %v3416 = vld [vmem:[#allocation3 + $0x10] sm:$0xf]
    %v3417 = vld [vmem:[#allocation3 + $0x14] sm:$0xf]
    %v3418 = vld [vmem:[#allocation3 + $0x18] sm:$0xf]
    %v3419 = vld [vmem:[#allocation3 + $0x1c] sm:$0xf]
    %v3420 = vld [vmem:[#allocation3 + $0x20] sm:$0xf]
    %v3421 = vld [vmem:[#allocation3 + $0x24] sm:$0xf]
    %v3422 = vld [vmem:[#allocation3 + $0x28] sm:$0xf]
    %v3423 = vld [vmem:[#allocation3 + $0x2c] sm:$0xf]
    %v3424 = vld [vmem:[#allocation3 + $0x30] sm:$0xf]
    %v3425 = vld [vmem:[#allocation3 + $0x34] sm:$0xf]
    %v3426 = vld [vmem:[#allocation3 + $0x38] sm:$0xf]
    %v3427 = vld [vmem:[#allocation3 + $0x3c] sm:$0xf]
    %v3428 = vld [vmem:[#allocation3 + $0x40] sm:$0xf]
    %v3429 = vld [vmem:[#allocation3 + $0x44] sm:$0xf]
    %v3430 = vld [vmem:[#allocation3 + $0x48] sm:$0xf]
    %v3431 = vld [vmem:[#allocation3 + $0x4c] sm:$0xf]
    %v3432 = vld [vmem:[#allocation3 + $0x50] sm:$0xf]
    %v3433 = vld [vmem:[#allocation3 + $0x54] sm:$0xf]
    %v3434 = vld [vmem:[#allocation3 + $0x58] sm:$0xf]
    %v3435 = vld [vmem:[#allocation3 + $0x5c] sm:$0xf]
    %v3436 = vld [vmem:[#allocation3 + $0x60] sm:$0xf]
    %v3437 = vld [vmem:[#allocation3 + $0x64] sm:$0xf]
    %v3438 = vld [vmem:[#allocation3 + $0x68] sm:$0xf]
    %v3439 = vld [vmem:[#allocation3 + $0x6c] sm:$0xf]
    %v3440 = vld [vmem:[#allocation3 + $0x70] sm:$0xf]
    %v3441 = vld [vmem:[#allocation3 + $0x74] sm:$0xf]
    %v3442 = vld [vmem:[#allocation3 + $0x78] sm:$0xf]
    %v3443 = vld [vmem:[#allocation3 + $0x7c] sm:$0xf]
    %v3444 = vld [vmem:[#allocation3 + $0x80] sm:$0xf]
    %v3445 = vld [vmem:[#allocation3 + $0x84] sm:$0xf]
    %v3446 = vld [vmem:[#allocation3 + $0x88] sm:$0xf]
    %v3447 = vld [vmem:[#allocation3 + $0x8c] sm:$0xf]
    %v3448 = vld [vmem:[#allocation3 + $0x90] sm:$0xf]
    %v3449 = vld [vmem:[#allocation3 + $0x94] sm:$0xf]
    %v3450 = vld [vmem:[#allocation3 + $0x98] sm:$0xf]
    %v3451 = vld [vmem:[#allocation3 + $0x9c] sm:$0xf]
    %v3452 = vld [vmem:[#allocation3 + $0xa0] sm:$0xf]
    %v3453 = vld [vmem:[#allocation3 + $0xa4] sm:$0xf]
    %v3454 = vld [vmem:[#allocation3 + $0xa8] sm:$0xf]
    %v3455 = vld [vmem:[#allocation3 + $0xac] sm:$0xf]
    %v3456 = vld [vmem:[#allocation3 + $0xb0] sm:$0xf]
    %v3457 = vld [vmem:[#allocation3 + $0xb4] sm:$0xf]
    %v3458 = vld [vmem:[#allocation3 + $0xb8] sm:$0xf]
    %v3459 = vld [vmem:[#allocation3 + $0xbc] sm:$0xf]
    %v3460 = vld [vmem:[#allocation3 + $0xc0] sm:$0xf]
    %v3461 = vld [vmem:[#allocation3 + $0xc4] sm:$0xf]
    %v3462 = vld [vmem:[#allocation3 + $0xc8] sm:$0xf]
    %v3463 = vld [vmem:[#allocation3 + $0xcc] sm:$0xf]
    %v3464 = vld [vmem:[#allocation3 + $0xd0] sm:$0xf]
    %v3465 = vld [vmem:[#allocation3 + $0xd4] sm:$0xf]
    %v3466 = vld [vmem:[#allocation3 + $0xd8] sm:$0xf]
    %v3467 = vld [vmem:[#allocation3 + $0xdc] sm:$0xf]
    %v3468 = vld [vmem:[#allocation3 + $0xe0] sm:$0xf]
    %v3469 = vld [vmem:[#allocation3 + $0xe4] sm:$0xf]
    %v3470 = vld [vmem:[#allocation3 + $0xe8] sm:$0xf]
    %v3471 = vld [vmem:[#allocation3 + $0xec] sm:$0xf]
    %v3472 = vld [vmem:[#allocation3 + $0xf0] sm:$0xf]
    %v3473 = vld [vmem:[#allocation3 + $0xf4] sm:$0xf]
    %v3474 = vld [vmem:[#allocation3 + $0xf8] sm:$0xf]
    %v3475 = vld [vmem:[#allocation3 + $0xfc] sm:$0xf]
    %v3476 = vld [vmem:[#allocation3 + $0x100] sm:$0xf]
    %v3477 = vld [vmem:[#allocation3 + $0x104] sm:$0xf]
    %v3478 = vld [vmem:[#allocation3 + $0x108] sm:$0xf]
    %v3479 = vld [vmem:[#allocation3 + $0x10c] sm:$0xf]
    %v3480 = vld [vmem:[#allocation3 + $0x110] sm:$0xf]
    %v3481 = vld [vmem:[#allocation3 + $0x114] sm:$0xf]
    %v3482 = vld [vmem:[#allocation3 + $0x118] sm:$0xf]
    %v3483 = vld [vmem:[#allocation3 + $0x11c] sm:$0xf]
    %v3484 = vld [vmem:[#allocation3 + $0x120] sm:$0xf]
    %v3485 = vld [vmem:[#allocation3 + $0x124] sm:$0xf]
    %v3486 = vld [vmem:[#allocation3 + $0x128] sm:$0xf]
    %v3487 = vld [vmem:[#allocation3 + $0x12c] sm:$0xf]
    %v3488 = vld [vmem:[#allocation3 + $0x130] sm:$0xf]
    %v3489 = vld [vmem:[#allocation3 + $0x134] sm:$0xf]
    %v3490 = vld [vmem:[#allocation3 + $0x138] sm:$0xf]
    %v3491 = vld [vmem:[#allocation3 + $0x13c] sm:$0xf]
    %v3492 = vld [vmem:[#allocation3 + $0x140] sm:$0xf]
    %v3493 = vld [vmem:[#allocation3 + $0x144] sm:$0xf]
    %v3494 = vld [vmem:[#allocation3 + $0x148] sm:$0xf]
    %v3495 = vld [vmem:[#allocation3 + $0x14c] sm:$0xf]
    %v3496 = vld [vmem:[#allocation3 + $0x150] sm:$0xf]
    %v3497 = vld [vmem:[#allocation3 + $0x154] sm:$0xf]
    %v3498 = vld [vmem:[#allocation3 + $0x158] sm:$0xf]
    %v3499 = vld [vmem:[#allocation3 + $0x15c] sm:$0xf]
    %v3500 = vld [vmem:[#allocation3 + $0x160] sm:$0xf]
    %v3501 = vld [vmem:[#allocation3 + $0x164] sm:$0xf]
    %v3502 = vld [vmem:[#allocation3 + $0x168] sm:$0xf]
    %v3503 = vld [vmem:[#allocation3 + $0x16c] sm:$0xf]
    %v3504 = vld [vmem:[#allocation3 + $0x170] sm:$0xf]
    %v3505 = vld [vmem:[#allocation3 + $0x174] sm:$0xf]
    %v3506 = vld [vmem:[#allocation3 + $0x178] sm:$0xf]
    %v3507 = vld [vmem:[#allocation3 + $0x17c] sm:$0xf]
    %v3508 = vld [vmem:[#allocation3 + $0x180] sm:$0xf]
    %v3509 = vld [vmem:[#allocation3 + $0x184] sm:$0xf]
    %v3510 = vld [vmem:[#allocation3 + $0x188] sm:$0xf]
    %v3511 = vld [vmem:[#allocation3 + $0x18c] sm:$0xf]
    %v3512 = vld [vmem:[#allocation3 + $0x190] sm:$0xf]
    %v3513 = vld [vmem:[#allocation3 + $0x194] sm:$0xf]
    %v3514 = vld [vmem:[#allocation3 + $0x198] sm:$0xf]
    %v3515 = vld [vmem:[#allocation3 + $0x19c] sm:$0xf]
    %v3516 = vld [vmem:[#allocation3 + $0x1a0] sm:$0xf]
    %v3517 = vld [vmem:[#allocation3 + $0x1a4] sm:$0xf]
    %v3518 = vld [vmem:[#allocation3 + $0x1a8] sm:$0xf]
    %v3519 = vld [vmem:[#allocation3 + $0x1ac] sm:$0xf]
    %v3520 = vld [vmem:[#allocation3 + $0x1b0] sm:$0xf]
    %v3521 = vld [vmem:[#allocation3 + $0x1b4] sm:$0xf]
    %v3522 = vld [vmem:[#allocation3 + $0x1b8] sm:$0xf]
    %v3523 = vld [vmem:[#allocation3 + $0x1bc] sm:$0xf]
    %v3524 = vld [vmem:[#allocation3 + $0x1c0] sm:$0xf]
    %v3525 = vld [vmem:[#allocation3 + $0x1c4] sm:$0xf]
    %v3526 = vld [vmem:[#allocation3 + $0x1c8] sm:$0xf]
    %v3527 = vld [vmem:[#allocation3 + $0x1cc] sm:$0xf]
    %v3528 = vld [vmem:[#allocation3 + $0x1d0] sm:$0xf]
    %v3529 = vld [vmem:[#allocation3 + $0x1d4] sm:$0xf]
    %v3530 = vld [vmem:[#allocation3 + $0x1d8] sm:$0xf]
    %v3531 = vld [vmem:[#allocation3 + $0x1dc] sm:$0xf]
    %v3532 = vld [vmem:[#allocation3 + $0x1e0] sm:$0xf]
    %v3533 = vld [vmem:[#allocation3 + $0x1e4] sm:$0xf]
    %v3534 = vld [vmem:[#allocation3 + $0x1e8] sm:$0xf]
    %v3535 = vld [vmem:[#allocation3 + $0x1ec] sm:$0xf]
    %v3536 = vld [vmem:[#allocation3 + $0x1f0] sm:$0xf]
    %v3537 = vld [vmem:[#allocation3 + $0x1f4] sm:$0xf]
    %v3538 = vld [vmem:[#allocation3 + $0x1f8] sm:$0xf]
    %v3539 = vld [vmem:[#allocation3 + $0x1fc] sm:$0xf]
    %v3540 = vld [vmem:[%s4] sm:$0x1]
    %v3542 = vperm.slane %v3540, 0
    %v3672 = vunpack.c.l.b16 %v3412
    %v3673 = vunpack.c.l.b16 %v3413
    %v3674 = vunpack.c.l.b16 %v3414
    %v3675 = vunpack.c.l.b16 %v3415
    %v3676 = vunpack.c.l.b16 %v3416
    %v3677 = vunpack.c.l.b16 %v3417
    %v3678 = vunpack.c.l.b16 %v3418
    %v3679 = vunpack.c.l.b16 %v3419
    %v3680 = vunpack.c.l.b16 %v3420
    %v3681 = vunpack.c.l.b16 %v3421
    %v3682 = vunpack.c.l.b16 %v3422
    %v3683 = vunpack.c.l.b16 %v3423
    %v3684 = vunpack.c.l.b16 %v3424
    %v3685 = vunpack.c.l.b16 %v3425
    %v3686 = vunpack.c.l.b16 %v3426
    %v3687 = vunpack.c.l.b16 %v3427
    %v3688 = vunpack.c.l.b16 %v3428
    %v3689 = vunpack.c.l.b16 %v3429
    %v3690 = vunpack.c.l.b16 %v3430
    %v3691 = vunpack.c.l.b16 %v3431
    %v3692 = vunpack.c.l.b16 %v3432
    %v3693 = vunpack.c.l.b16 %v3433
    %v3694 = vunpack.c.l.b16 %v3434
    %v3695 = vunpack.c.l.b16 %v3435
    %v3696 = vunpack.c.l.b16 %v3436
    %v3697 = vunpack.c.l.b16 %v3437
    %v3698 = vunpack.c.l.b16 %v3438
    %v3699 = vunpack.c.l.b16 %v3439
    %v3700 = vunpack.c.l.b16 %v3440
    %v3701 = vunpack.c.l.b16 %v3441
    %v3702 = vunpack.c.l.b16 %v3442
    %v3703 = vunpack.c.l.b16 %v3443
    %v3704 = vunpack.c.l.b16 %v3444
    %v3705 = vunpack.c.l.b16 %v3445
    %v3706 = vunpack.c.l.b16 %v3446
    %v3707 = vunpack.c.l.b16 %v3447
    %v3708 = vunpack.c.l.b16 %v3448
    %v3709 = vunpack.c.l.b16 %v3449
    %v3710 = vunpack.c.l.b16 %v3450
    %v3711 = vunpack.c.l.b16 %v3451
    %v3712 = vunpack.c.l.b16 %v3452
    %v3713 = vunpack.c.l.b16 %v3453
    %v3714 = vunpack.c.l.b16 %v3454
    %v3715 = vunpack.c.l.b16 %v3455
    %v3716 = vunpack.c.l.b16 %v3456
    %v3717 = vunpack.c.l.b16 %v3457
    %v3718 = vunpack.c.l.b16 %v3458
    %v3719 = vunpack.c.l.b16 %v3459
    %v3720 = vunpack.c.l.b16 %v3460
    %v3721 = vunpack.c.l.b16 %v3461
    %v3722 = vunpack.c.l.b16 %v3462
    %v3723 = vunpack.c.l.b16 %v3463
    %v3724 = vunpack.c.l.b16 %v3464
    %v3725 = vunpack.c.l.b16 %v3465
    %v3726 = vunpack.c.l.b16 %v3466
    %v3727 = vunpack.c.l.b16 %v3467
    %v3728 = vunpack.c.l.b16 %v3468
    %v3729 = vunpack.c.l.b16 %v3469
    %v3730 = vunpack.c.l.b16 %v3470
    %v3731 = vunpack.c.l.b16 %v3471
    %v3732 = vunpack.c.l.b16 %v3472
    %v3733 = vunpack.c.l.b16 %v3473
    %v3734 = vunpack.c.l.b16 %v3474
    %v3735 = vunpack.c.l.b16 %v3475
    %v3736 = vunpack.c.l.b16 %v3476
    %v3737 = vunpack.c.l.b16 %v3477
    %v3738 = vunpack.c.l.b16 %v3478
    %v3739 = vunpack.c.l.b16 %v3479
    %v3740 = vunpack.c.l.b16 %v3480
    %v3741 = vunpack.c.l.b16 %v3481
    %v3742 = vunpack.c.l.b16 %v3482
    %v3743 = vunpack.c.l.b16 %v3483
    %v3744 = vunpack.c.l.b16 %v3484
    %v3745 = vunpack.c.l.b16 %v3485
    %v3746 = vunpack.c.l.b16 %v3486
    %v3747 = vunpack.c.l.b16 %v3487
    %v3748 = vunpack.c.l.b16 %v3488
    %v3749 = vunpack.c.l.b16 %v3489
    %v3750 = vunpack.c.l.b16 %v3490
    %v3751 = vunpack.c.l.b16 %v3491
    %v3752 = vunpack.c.l.b16 %v3492
    %v3753 = vunpack.c.l.b16 %v3493
    %v3754 = vunpack.c.l.b16 %v3494
    %v3755 = vunpack.c.l.b16 %v3495
    %v3756 = vunpack.c.l.b16 %v3496
    %v3757 = vunpack.c.l.b16 %v3497
    %v3758 = vunpack.c.l.b16 %v3498
    %v3759 = vunpack.c.l.b16 %v3499
    %v3760 = vunpack.c.l.b16 %v3500
    %v3761 = vunpack.c.l.b16 %v3501
    %v3762 = vunpack.c.l.b16 %v3502
    %v3763 = vunpack.c.l.b16 %v3503
    %v3764 = vunpack.c.l.b16 %v3504
    %v3765 = vunpack.c.l.b16 %v3505
    %v3766 = vunpack.c.l.b16 %v3506
    %v3767 = vunpack.c.l.b16 %v3507
    %v3768 = vunpack.c.l.b16 %v3508
    %v3769 = vunpack.c.l.b16 %v3509
    %v3770 = vunpack.c.l.b16 %v3510
    %v3771 = vunpack.c.l.b16 %v3511
    %v3772 = vunpack.c.l.b16 %v3512
    %v3773 = vunpack.c.l.b16 %v3513
    %v3774 = vunpack.c.l.b16 %v3514
    %v3775 = vunpack.c.l.b16 %v3515
    %v3776 = vunpack.c.l.b16 %v3516
    %v3777 = vunpack.c.l.b16 %v3517
    %v3778 = vunpack.c.l.b16 %v3518
    %v3779 = vunpack.c.l.b16 %v3519
    %v3780 = vunpack.c.l.b16 %v3520
    %v3781 = vunpack.c.l.b16 %v3521
    %v3782 = vunpack.c.l.b16 %v3522
    %v3783 = vunpack.c.l.b16 %v3523
    %v3784 = vunpack.c.l.b16 %v3524
    %v3785 = vunpack.c.l.b16 %v3525
    %v3786 = vunpack.c.l.b16 %v3526
    %v3787 = vunpack.c.l.b16 %v3527
    %v3788 = vunpack.c.l.b16 %v3528
    %v3789 = vunpack.c.l.b16 %v3529
    %v3790 = vunpack.c.l.b16 %v3530
    %v3791 = vunpack.c.l.b16 %v3531
    %v3792 = vunpack.c.l.b16 %v3532
    %v3793 = vunpack.c.l.b16 %v3533
    %v3794 = vunpack.c.l.b16 %v3534
    %v3795 = vunpack.c.l.b16 %v3535
    %v3796 = vunpack.c.l.b16 %v3536
    %v3797 = vunpack.c.l.b16 %v3537
    %v3798 = vunpack.c.l.b16 %v3538
    %v3799 = vunpack.c.l.b16 %v3539
    %v3800 = vpack.c.b16 %v3673, %v3672
    %v3801 = vpack.c.b16 %v3675, %v3674
    %v3802 = vpack.c.b16 %v3677, %v3676
    %v3803 = vpack.c.b16 %v3679, %v3678
    %v3804 = vpack.c.b16 %v3681, %v3680
    %v3805 = vpack.c.b16 %v3683, %v3682
    %v3806 = vpack.c.b16 %v3685, %v3684
    %v3807 = vpack.c.b16 %v3687, %v3686
    %v3808 = vpack.c.b16 %v3689, %v3688
    %v3809 = vpack.c.b16 %v3691, %v3690
    %v3810 = vpack.c.b16 %v3693, %v3692
    %v3811 = vpack.c.b16 %v3695, %v3694
    %v3812 = vpack.c.b16 %v3697, %v3696
    %v3813 = vpack.c.b16 %v3699, %v3698
    %v3814 = vpack.c.b16 %v3701, %v3700
    %v3815 = vpack.c.b16 %v3703, %v3702
    %v3816 = vpack.c.b16 %v3705, %v3704
    %v3817 = vpack.c.b16 %v3707, %v3706
    %v3818 = vpack.c.b16 %v3709, %v3708
    %v3819 = vpack.c.b16 %v3711, %v3710
    %v3820 = vpack.c.b16 %v3713, %v3712
    %v3821 = vpack.c.b16 %v3715, %v3714
    %v3822 = vpack.c.b16 %v3717, %v3716
    %v3823 = vpack.c.b16 %v3719, %v3718
    %v3824 = vpack.c.b16 %v3721, %v3720
    %v3825 = vpack.c.b16 %v3723, %v3722
    %v3826 = vpack.c.b16 %v3725, %v3724
    %v3827 = vpack.c.b16 %v3727, %v3726
    %v3828 = vpack.c.b16 %v3729, %v3728
    %v3829 = vpack.c.b16 %v3731, %v3730
    %v3830 = vpack.c.b16 %v3733, %v3732
    %v3831 = vpack.c.b16 %v3735, %v3734
    %v3832 = vpack.c.b16 %v3737, %v3736
    %v3833 = vpack.c.b16 %v3739, %v3738
    %v3834 = vpack.c.b16 %v3741, %v3740
    %v3835 = vpack.c.b16 %v3743, %v3742
    %v3836 = vpack.c.b16 %v3745, %v3744
    %v3837 = vpack.c.b16 %v3747, %v3746
    %v3838 = vpack.c.b16 %v3749, %v3748
    %v3839 = vpack.c.b16 %v3751, %v3750
    %v3840 = vpack.c.b16 %v3753, %v3752
    %v3841 = vpack.c.b16 %v3755, %v3754
    %v3842 = vpack.c.b16 %v3757, %v3756
    %v3843 = vpack.c.b16 %v3759, %v3758
    %v3844 = vpack.c.b16 %v3761, %v3760
    %v3845 = vpack.c.b16 %v3763, %v3762
    %v3846 = vpack.c.b16 %v3765, %v3764
    %v3847 = vpack.c.b16 %v3767, %v3766
    %v3848 = vpack.c.b16 %v3769, %v3768
    %v3849 = vpack.c.b16 %v3771, %v3770
    %v3850 = vpack.c.b16 %v3773, %v3772
    %v3851 = vpack.c.b16 %v3775, %v3774
    %v3852 = vpack.c.b16 %v3777, %v3776
    %v3853 = vpack.c.b16 %v3779, %v3778
    %v3854 = vpack.c.b16 %v3781, %v3780
    %v3855 = vpack.c.b16 %v3783, %v3782
    %v3856 = vpack.c.b16 %v3785, %v3784
    %v3857 = vpack.c.b16 %v3787, %v3786
    %v3858 = vpack.c.b16 %v3789, %v3788
    %v3859 = vpack.c.b16 %v3791, %v3790
    %v3860 = vpack.c.b16 %v3793, %v3792
    %v3861 = vpack.c.b16 %v3795, %v3794
    %v3862 = vpack.c.b16 %v3797, %v3796
    %v3863 = vpack.c.b16 %v3799, %v3798
    %3928 = vmatpush.bf16.msra.mxu0 %v3807
    %3929 = vmatpush.bf16.msra.mxu0 %v3806
    %3930 = vmatpush.bf16.msra.mxu0 %v3805
    %3931 = vmatpush.bf16.msra.mxu0 %v3804
    %3932 = vmatpush.bf16.msra.mxu0 %v3803
    %3933 = vmatpush.bf16.msra.mxu0 %v3802
    %3934 = vmatpush.bf16.msra.mxu0 %v3801
    %3935 = vmatpush.bf16.msra.mxu0 %v3800
    %3936 = vmatmul.bf16.gmra.mxu0 %v3284
    %v3937 = vpop.f32.mrf.mxu0
    %v3938 = vadd.f32 %v3542, %v3937
    %v3939 = vpop.f32.mrf.mxu0
    %v3940 = vadd.f32 %v3542, %v3939
    %3941 = vmatmul.bf16.gmra.mxu0 %v3292
    %v3942 = vpop.f32.mrf.mxu0
    %v3943 = vadd.f32 %v3542, %v3942
    %v3944 = vpop.f32.mrf.mxu0
    %v3945 = vadd.f32 %v3542, %v3944
    %3946 = vmatmul.bf16.gmra.mxu0 %v3300
    %v3947 = vpop.f32.mrf.mxu0
    %v3948 = vadd.f32 %v3542, %v3947
    %v3949 = vpop.f32.mrf.mxu0
    %v3950 = vadd.f32 %v3542, %v3949
    %3951 = vmatmul.bf16.gmra.mxu0 %v3308
    %v3952 = vpop.f32.mrf.mxu0
    %v3953 = vadd.f32 %v3542, %v3952
    %v3954 = vpop.f32.mrf.mxu0
    %v3955 = vadd.f32 %v3542, %v3954
    %3956 = vmatmul.bf16.gmra.mxu0 %v3316
    %v3957 = vpop.f32.mrf.mxu0
    %v3958 = vadd.f32 %v3542, %v3957
    %v3959 = vpop.f32.mrf.mxu0
    %v3960 = vadd.f32 %v3542, %v3959
    %3961 = vmatmul.bf16.gmra.mxu0 %v3324
    %v3962 = vpop.f32.mrf.mxu0
    %v3963 = vadd.f32 %v3542, %v3962
    %v3964 = vpop.f32.mrf.mxu0
    %v3965 = vadd.f32 %v3542, %v3964
    %3966 = vmatmul.bf16.gmra.mxu0 %v3332
    %v3967 = vpop.f32.mrf.mxu0
    %v3968 = vadd.f32 %v3542, %v3967
    %v3969 = vpop.f32.mrf.mxu0
    %v3970 = vadd.f32 %v3542, %v3969
    %3971 = vmatmul.bf16.gmra.mxu0 %v3340
    %v3972 = vpop.f32.mrf.mxu0
    %v3973 = vadd.f32 %v3542, %v3972
    %v3974 = vpop.f32.mrf.mxu0
    %v3975 = vadd.f32 %v3542, %v3974
    %3976 = vmatmul.bf16.gmra.mxu0 %v3348
    %v3977 = vpop.f32.mrf.mxu0
    %v3978 = vadd.f32 %v3542, %v3977
    %v3979 = vpop.f32.mrf.mxu0
    %v3980 = vadd.f32 %v3542, %v3979
    %3981 = vmatmul.bf16.gmra.mxu0 %v3356
    %v3982 = vpop.f32.mrf.mxu0
    %v3983 = vadd.f32 %v3542, %v3982
    %v3984 = vpop.f32.mrf.mxu0
    %v3985 = vadd.f32 %v3542, %v3984
    %3986 = vmatmul.bf16.gmra.mxu0 %v3364
    %v3987 = vpop.f32.mrf.mxu0
    %v3988 = vadd.f32 %v3542, %v3987
    %v3989 = vpop.f32.mrf.mxu0
    %v3990 = vadd.f32 %v3542, %v3989
    %3991 = vmatmul.bf16.gmra.mxu0 %v3372
    %v3992 = vpop.f32.mrf.mxu0
    %v3993 = vadd.f32 %v3542, %v3992
    %v3994 = vpop.f32.mrf.mxu0
    %v3995 = vadd.f32 %v3542, %v3994
    %3996 = vmatmul.bf16.gmra.mxu0 %v3380
    %v3997 = vpop.f32.mrf.mxu0
    %v3998 = vadd.f32 %v3542, %v3997
    %v3999 = vpop.f32.mrf.mxu0
    %v4000 = vadd.f32 %v3542, %v3999
    %4001 = vmatmul.bf16.gmra.mxu0 %v3388
    %v4002 = vpop.f32.mrf.mxu0
    %v4003 = vadd.f32 %v3542, %v4002
    %v4004 = vpop.f32.mrf.mxu0
    %v4005 = vadd.f32 %v3542, %v4004
    %4006 = vmatmul.bf16.gmra.mxu0 %v3396
    %v4007 = vpop.f32.mrf.mxu0
    %v4008 = vadd.f32 %v3542, %v4007
    %v4009 = vpop.f32.mrf.mxu0
    %v4010 = vadd.f32 %v3542, %v4009
    %4011 = vmatmul.bf16.gmra.mxu0 %v3404
    %v4012 = vpop.f32.mrf.mxu0
    %v4013 = vadd.f32 %v3542, %v4012
    %v4014 = vpop.f32.mrf.mxu0
    %v4015 = vadd.f32 %v3542, %v4014
    %4016 = vdwg.mxu0
    %4017 = vmatpush.bf16.msra.mxu0 %v3815
    %4018 = vmatpush.bf16.msra.mxu0 %v3814
    %4019 = vmatpush.bf16.msra.mxu0 %v3813
    %4020 = vmatpush.bf16.msra.mxu0 %v3812
    %4021 = vmatpush.bf16.msra.mxu0 %v3811
    %4022 = vmatpush.bf16.msra.mxu0 %v3810
    %4023 = vmatpush.bf16.msra.mxu0 %v3809
    %4024 = vmatpush.bf16.msra.mxu0 %v3808
    %4025 = vmatmul.bf16.gmra.mxu0 %v3285
    %v4026 = vpop.f32.mrf.mxu0
    %v4027 = vadd.f32 %v3938, %v4026
    %v4028 = vpop.f32.mrf.mxu0
    %v4029 = vadd.f32 %v3940, %v4028
    %4030 = vmatmul.bf16.gmra.mxu0 %v3293
    %v4031 = vpop.f32.mrf.mxu0
    %v4032 = vadd.f32 %v3943, %v4031
    %v4033 = vpop.f32.mrf.mxu0
    %v4034 = vadd.f32 %v3945, %v4033
    %4035 = vmatmul.bf16.gmra.mxu0 %v3301
    %v4036 = vpop.f32.mrf.mxu0
    %v4037 = vadd.f32 %v3948, %v4036
    %v4038 = vpop.f32.mrf.mxu0
    %v4039 = vadd.f32 %v3950, %v4038
    %4040 = vmatmul.bf16.gmra.mxu0 %v3309
    %v4041 = vpop.f32.mrf.mxu0
    %v4042 = vadd.f32 %v3953, %v4041
    %v4043 = vpop.f32.mrf.mxu0
    %v4044 = vadd.f32 %v3955, %v4043
    %4045 = vmatmul.bf16.gmra.mxu0 %v3317
    %v4046 = vpop.f32.mrf.mxu0
    %v4047 = vadd.f32 %v3958, %v4046
    %v4048 = vpop.f32.mrf.mxu0
    %v4049 = vadd.f32 %v3960, %v4048
    %4050 = vmatmul.bf16.gmra.mxu0 %v3325
    %v4051 = vpop.f32.mrf.mxu0
    %v4052 = vadd.f32 %v3963, %v4051
    %v4053 = vpop.f32.mrf.mxu0
    %v4054 = vadd.f32 %v3965, %v4053
    %4055 = vmatmul.bf16.gmra.mxu0 %v3333
    %v4056 = vpop.f32.mrf.mxu0
    %v4057 = vadd.f32 %v3968, %v4056
    %v4058 = vpop.f32.mrf.mxu0
    %v4059 = vadd.f32 %v3970, %v4058
    %4060 = vmatmul.bf16.gmra.mxu0 %v3341
    %v4061 = vpop.f32.mrf.mxu0
    %v4062 = vadd.f32 %v3973, %v4061
    %v4063 = vpop.f32.mrf.mxu0
    %v4064 = vadd.f32 %v3975, %v4063
    %4065 = vmatmul.bf16.gmra.mxu0 %v3349
    %v4066 = vpop.f32.mrf.mxu0
    %v4067 = vadd.f32 %v3978, %v4066
    %v4068 = vpop.f32.mrf.mxu0
    %v4069 = vadd.f32 %v3980, %v4068
    %4070 = vmatmul.bf16.gmra.mxu0 %v3357
    %v4071 = vpop.f32.mrf.mxu0
    %v4072 = vadd.f32 %v3983, %v4071
    %v4073 = vpop.f32.mrf.mxu0
    %v4074 = vadd.f32 %v3985, %v4073
    %4075 = vmatmul.bf16.gmra.mxu0 %v3365
    %v4076 = vpop.f32.mrf.mxu0
    %v4077 = vadd.f32 %v3988, %v4076
    %v4078 = vpop.f32.mrf.mxu0
    %v4079 = vadd.f32 %v3990, %v4078
    %4080 = vmatmul.bf16.gmra.mxu0 %v3373
    %v4081 = vpop.f32.mrf.mxu0
    %v4082 = vadd.f32 %v3993, %v4081
    %v4083 = vpop.f32.mrf.mxu0
    %v4084 = vadd.f32 %v3995, %v4083
    %4085 = vmatmul.bf16.gmra.mxu0 %v3381
    %v4086 = vpop.f32.mrf.mxu0
    %v4087 = vadd.f32 %v3998, %v4086
    %v4088 = vpop.f32.mrf.mxu0
    %v4089 = vadd.f32 %v4000, %v4088
    %4090 = vmatmul.bf16.gmra.mxu0 %v3389
    %v4091 = vpop.f32.mrf.mxu0
    %v4092 = vadd.f32 %v4003, %v4091
    %v4093 = vpop.f32.mrf.mxu0
    %v4094 = vadd.f32 %v4005, %v4093
    %4095 = vmatmul.bf16.gmra.mxu0 %v3397
    %v4096 = vpop.f32.mrf.mxu0
    %v4097 = vadd.f32 %v4008, %v4096
    %v4098 = vpop.f32.mrf.mxu0
    %v4099 = vadd.f32 %v4010, %v4098
    %4100 = vmatmul.bf16.gmra.mxu0 %v3405
    %v4101 = vpop.f32.mrf.mxu0
    %v4102 = vadd.f32 %v4013, %v4101
    %v4103 = vpop.f32.mrf.mxu0
    %v4104 = vadd.f32 %v4015, %v4103
    %4105 = vdwg.mxu0
    %4106 = vmatpush.bf16.msra.mxu0 %v3823
    %4107 = vmatpush.bf16.msra.mxu0 %v3822
    %4108 = vmatpush.bf16.msra.mxu0 %v3821
    %4109 = vmatpush.bf16.msra.mxu0 %v3820
    %4110 = vmatpush.bf16.msra.mxu0 %v3819
    %4111 = vmatpush.bf16.msra.mxu0 %v3818
    %4112 = vmatpush.bf16.msra.mxu0 %v3817
    %4113 = vmatpush.bf16.msra.mxu0 %v3816
    %4114 = vmatmul.bf16.gmra.mxu0 %v3286
    %v4115 = vpop.f32.mrf.mxu0
    %v4116 = vadd.f32 %v4027, %v4115
    %v4117 = vpop.f32.mrf.mxu0
    %v4118 = vadd.f32 %v4029, %v4117
    %4119 = vmatmul.bf16.gmra.mxu0 %v3294
    %v4120 = vpop.f32.mrf.mxu0
    %v4121 = vadd.f32 %v4032, %v4120
    %v4122 = vpop.f32.mrf.mxu0
    %v4123 = vadd.f32 %v4034, %v4122
    %4124 = vmatmul.bf16.gmra.mxu0 %v3302
    %v4125 = vpop.f32.mrf.mxu0
    %v4126 = vadd.f32 %v4037, %v4125
    %v4127 = vpop.f32.mrf.mxu0
    %v4128 = vadd.f32 %v4039, %v4127
    %4129 = vmatmul.bf16.gmra.mxu0 %v3310
    %v4130 = vpop.f32.mrf.mxu0
    %v4131 = vadd.f32 %v4042, %v4130
    %v4132 = vpop.f32.mrf.mxu0
    %v4133 = vadd.f32 %v4044, %v4132
    %4134 = vmatmul.bf16.gmra.mxu0 %v3318
    %v4135 = vpop.f32.mrf.mxu0
    %v4136 = vadd.f32 %v4047, %v4135
    %v4137 = vpop.f32.mrf.mxu0
    %v4138 = vadd.f32 %v4049, %v4137
    %4139 = vmatmul.bf16.gmra.mxu0 %v3326
    %v4140 = vpop.f32.mrf.mxu0
    %v4141 = vadd.f32 %v4052, %v4140
    %v4142 = vpop.f32.mrf.mxu0
    %v4143 = vadd.f32 %v4054, %v4142
    %4144 = vmatmul.bf16.gmra.mxu0 %v3334
    %v4145 = vpop.f32.mrf.mxu0
    %v4146 = vadd.f32 %v4057, %v4145
    %v4147 = vpop.f32.mrf.mxu0
    %v4148 = vadd.f32 %v4059, %v4147
    %4149 = vmatmul.bf16.gmra.mxu0 %v3342
    %v4150 = vpop.f32.mrf.mxu0
    %v4151 = vadd.f32 %v4062, %v4150
    %v4152 = vpop.f32.mrf.mxu0
    %v4153 = vadd.f32 %v4064, %v4152
    %4154 = vmatmul.bf16.gmra.mxu0 %v3350
    %v4155 = vpop.f32.mrf.mxu0
    %v4156 = vadd.f32 %v4067, %v4155
    %v4157 = vpop.f32.mrf.mxu0
    %v4158 = vadd.f32 %v4069, %v4157
    %4159 = vmatmul.bf16.gmra.mxu0 %v3358
    %v4160 = vpop.f32.mrf.mxu0
    %v4161 = vadd.f32 %v4072, %v4160
    %v4162 = vpop.f32.mrf.mxu0
    %v4163 = vadd.f32 %v4074, %v4162
    %4164 = vmatmul.bf16.gmra.mxu0 %v3366
    %v4165 = vpop.f32.mrf.mxu0
    %v4166 = vadd.f32 %v4077, %v4165
    %v4167 = vpop.f32.mrf.mxu0
    %v4168 = vadd.f32 %v4079, %v4167
    %4169 = vmatmul.bf16.gmra.mxu0 %v3374
    %v4170 = vpop.f32.mrf.mxu0
    %v4171 = vadd.f32 %v4082, %v4170
    %v4172 = vpop.f32.mrf.mxu0
    %v4173 = vadd.f32 %v4084, %v4172
    %4174 = vmatmul.bf16.gmra.mxu0 %v3382
    %v4175 = vpop.f32.mrf.mxu0
    %v4176 = vadd.f32 %v4087, %v4175
    %v4177 = vpop.f32.mrf.mxu0
    %v4178 = vadd.f32 %v4089, %v4177
    %4179 = vmatmul.bf16.gmra.mxu0 %v3390
    %v4180 = vpop.f32.mrf.mxu0
    %v4181 = vadd.f32 %v4092, %v4180
    %v4182 = vpop.f32.mrf.mxu0
    %v4183 = vadd.f32 %v4094, %v4182
    %4184 = vmatmul.bf16.gmra.mxu0 %v3398
    %v4185 = vpop.f32.mrf.mxu0
    %v4186 = vadd.f32 %v4097, %v4185
    %v4187 = vpop.f32.mrf.mxu0
    %v4188 = vadd.f32 %v4099, %v4187
    %4189 = vmatmul.bf16.gmra.mxu0 %v3406
    %v4190 = vpop.f32.mrf.mxu0
    %v4191 = vadd.f32 %v4102, %v4190
    %v4192 = vpop.f32.mrf.mxu0
    %v4193 = vadd.f32 %v4104, %v4192
    %4194 = vdwg.mxu0
    %4195 = vmatpush.bf16.msra.mxu0 %v3831
    %4196 = vmatpush.bf16.msra.mxu0 %v3830
    %4197 = vmatpush.bf16.msra.mxu0 %v3829
    %4198 = vmatpush.bf16.msra.mxu0 %v3828
    %4199 = vmatpush.bf16.msra.mxu0 %v3827
    %4200 = vmatpush.bf16.msra.mxu0 %v3826
    %4201 = vmatpush.bf16.msra.mxu0 %v3825
    %4202 = vmatpush.bf16.msra.mxu0 %v3824
    %4203 = vmatmul.bf16.gmra.mxu0 %v3287
    %v4204 = vpop.f32.mrf.mxu0
    %v4205 = vadd.f32 %v4116, %v4204
    %v4206 = vpop.f32.mrf.mxu0
    %v4207 = vadd.f32 %v4118, %v4206
    %4208 = vmatmul.bf16.gmra.mxu0 %v3295
    %v4209 = vpop.f32.mrf.mxu0
    %v4210 = vadd.f32 %v4121, %v4209
    %v4211 = vpop.f32.mrf.mxu0
    %v4212 = vadd.f32 %v4123, %v4211
    %4213 = vmatmul.bf16.gmra.mxu0 %v3303
    %v4214 = vpop.f32.mrf.mxu0
    %v4215 = vadd.f32 %v4126, %v4214
    %v4216 = vpop.f32.mrf.mxu0
    %v4217 = vadd.f32 %v4128, %v4216
    %4218 = vmatmul.bf16.gmra.mxu0 %v3311
    %v4219 = vpop.f32.mrf.mxu0
    %v4220 = vadd.f32 %v4131, %v4219
    %v4221 = vpop.f32.mrf.mxu0
    %v4222 = vadd.f32 %v4133, %v4221
    %4223 = vmatmul.bf16.gmra.mxu0 %v3319
    %v4224 = vpop.f32.mrf.mxu0
    %v4225 = vadd.f32 %v4136, %v4224
    %v4226 = vpop.f32.mrf.mxu0
    %v4227 = vadd.f32 %v4138, %v4226
    %4228 = vmatmul.bf16.gmra.mxu0 %v3327
    %v4229 = vpop.f32.mrf.mxu0
    %v4230 = vadd.f32 %v4141, %v4229
    %v4231 = vpop.f32.mrf.mxu0
    %v4232 = vadd.f32 %v4143, %v4231
    %4233 = vmatmul.bf16.gmra.mxu0 %v3335
    %v4234 = vpop.f32.mrf.mxu0
    %v4235 = vadd.f32 %v4146, %v4234
    %v4236 = vpop.f32.mrf.mxu0
    %v4237 = vadd.f32 %v4148, %v4236
    %4238 = vmatmul.bf16.gmra.mxu0 %v3343
    %v4239 = vpop.f32.mrf.mxu0
    %v4240 = vadd.f32 %v4151, %v4239
    %v4241 = vpop.f32.mrf.mxu0
    %v4242 = vadd.f32 %v4153, %v4241
    %4243 = vmatmul.bf16.gmra.mxu0 %v3351
    %v4244 = vpop.f32.mrf.mxu0
    %v4245 = vadd.f32 %v4156, %v4244
    %v4246 = vpop.f32.mrf.mxu0
    %v4247 = vadd.f32 %v4158, %v4246
    %4248 = vmatmul.bf16.gmra.mxu0 %v3359
    %v4249 = vpop.f32.mrf.mxu0
    %v4250 = vadd.f32 %v4161, %v4249
    %v4251 = vpop.f32.mrf.mxu0
    %v4252 = vadd.f32 %v4163, %v4251
    %4253 = vmatmul.bf16.gmra.mxu0 %v3367
    %v4254 = vpop.f32.mrf.mxu0
    %v4255 = vadd.f32 %v4166, %v4254
    %v4256 = vpop.f32.mrf.mxu0
    %v4257 = vadd.f32 %v4168, %v4256
    %4258 = vmatmul.bf16.gmra.mxu0 %v3375
    %v4259 = vpop.f32.mrf.mxu0
    %v4260 = vadd.f32 %v4171, %v4259
    %v4261 = vpop.f32.mrf.mxu0
    %v4262 = vadd.f32 %v4173, %v4261
    %4263 = vmatmul.bf16.gmra.mxu0 %v3383
    %v4264 = vpop.f32.mrf.mxu0
    %v4265 = vadd.f32 %v4176, %v4264
    %v4266 = vpop.f32.mrf.mxu0
    %v4267 = vadd.f32 %v4178, %v4266
    %4268 = vmatmul.bf16.gmra.mxu0 %v3391
    %v4269 = vpop.f32.mrf.mxu0
    %v4270 = vadd.f32 %v4181, %v4269
    %v4271 = vpop.f32.mrf.mxu0
    %v4272 = vadd.f32 %v4183, %v4271
    %4273 = vmatmul.bf16.gmra.mxu0 %v3399
    %v4274 = vpop.f32.mrf.mxu0
    %v4275 = vadd.f32 %v4186, %v4274
    %v4276 = vpop.f32.mrf.mxu0
    %v4277 = vadd.f32 %v4188, %v4276
    %4278 = vmatmul.bf16.gmra.mxu0 %v3407
    %v4279 = vpop.f32.mrf.mxu0
    %v4280 = vadd.f32 %v4191, %v4279
    %v4281 = vpop.f32.mrf.mxu0
    %v4282 = vadd.f32 %v4193, %v4281
    %4283 = vdwg.mxu0
    %4284 = vmatpush.bf16.msra.mxu0 %v3839
    %4285 = vmatpush.bf16.msra.mxu0 %v3838
    %4286 = vmatpush.bf16.msra.mxu0 %v3837
    %4287 = vmatpush.bf16.msra.mxu0 %v3836
    %4288 = vmatpush.bf16.msra.mxu0 %v3835
    %4289 = vmatpush.bf16.msra.mxu0 %v3834
    %4290 = vmatpush.bf16.msra.mxu0 %v3833
    %4291 = vmatpush.bf16.msra.mxu0 %v3832
    %4292 = vmatmul.bf16.gmra.mxu0 %v3288
    %v4293 = vpop.f32.mrf.mxu0
    %v4294 = vadd.f32 %v4205, %v4293
    %v4295 = vpop.f32.mrf.mxu0
    %v4296 = vadd.f32 %v4207, %v4295
    %4297 = vmatmul.bf16.gmra.mxu0 %v3296
    %v4298 = vpop.f32.mrf.mxu0
    %v4299 = vadd.f32 %v4210, %v4298
    %v4300 = vpop.f32.mrf.mxu0
    %v4301 = vadd.f32 %v4212, %v4300
    %4302 = vmatmul.bf16.gmra.mxu0 %v3304
    %v4303 = vpop.f32.mrf.mxu0
    %v4304 = vadd.f32 %v4215, %v4303
    %v4305 = vpop.f32.mrf.mxu0
    %v4306 = vadd.f32 %v4217, %v4305
    %4307 = vmatmul.bf16.gmra.mxu0 %v3312
    %v4308 = vpop.f32.mrf.mxu0
    %v4309 = vadd.f32 %v4220, %v4308
    %v4310 = vpop.f32.mrf.mxu0
    %v4311 = vadd.f32 %v4222, %v4310
    %4312 = vmatmul.bf16.gmra.mxu0 %v3320
    %v4313 = vpop.f32.mrf.mxu0
    %v4314 = vadd.f32 %v4225, %v4313
    %v4315 = vpop.f32.mrf.mxu0
    %v4316 = vadd.f32 %v4227, %v4315
    %4317 = vmatmul.bf16.gmra.mxu0 %v3328
    %v4318 = vpop.f32.mrf.mxu0
    %v4319 = vadd.f32 %v4230, %v4318
    %v4320 = vpop.f32.mrf.mxu0
    %v4321 = vadd.f32 %v4232, %v4320
    %4322 = vmatmul.bf16.gmra.mxu0 %v3336
    %v4323 = vpop.f32.mrf.mxu0
    %v4324 = vadd.f32 %v4235, %v4323
    %v4325 = vpop.f32.mrf.mxu0
    %v4326 = vadd.f32 %v4237, %v4325
    %4327 = vmatmul.bf16.gmra.mxu0 %v3344
    %v4328 = vpop.f32.mrf.mxu0
    %v4329 = vadd.f32 %v4240, %v4328
    %v4330 = vpop.f32.mrf.mxu0
    %v4331 = vadd.f32 %v4242, %v4330
    %4332 = vmatmul.bf16.gmra.mxu0 %v3352
    %v4333 = vpop.f32.mrf.mxu0
    %v4334 = vadd.f32 %v4245, %v4333
    %v4335 = vpop.f32.mrf.mxu0
    %v4336 = vadd.f32 %v4247, %v4335
    %4337 = vmatmul.bf16.gmra.mxu0 %v3360
    %v4338 = vpop.f32.mrf.mxu0
    %v4339 = vadd.f32 %v4250, %v4338
    %v4340 = vpop.f32.mrf.mxu0
    %v4341 = vadd.f32 %v4252, %v4340
    %4342 = vmatmul.bf16.gmra.mxu0 %v3368
    %v4343 = vpop.f32.mrf.mxu0
    %v4344 = vadd.f32 %v4255, %v4343
    %v4345 = vpop.f32.mrf.mxu0
    %v4346 = vadd.f32 %v4257, %v4345
    %4347 = vmatmul.bf16.gmra.mxu0 %v3376
    %v4348 = vpop.f32.mrf.mxu0
    %v4349 = vadd.f32 %v4260, %v4348
    %v4350 = vpop.f32.mrf.mxu0
    %v4351 = vadd.f32 %v4262, %v4350
    %4352 = vmatmul.bf16.gmra.mxu0 %v3384
    %v4353 = vpop.f32.mrf.mxu0
    %v4354 = vadd.f32 %v4265, %v4353
    %v4355 = vpop.f32.mrf.mxu0
    %v4356 = vadd.f32 %v4267, %v4355
    %4357 = vmatmul.bf16.gmra.mxu0 %v3392
    %v4358 = vpop.f32.mrf.mxu0
    %v4359 = vadd.f32 %v4270, %v4358
    %v4360 = vpop.f32.mrf.mxu0
    %v4361 = vadd.f32 %v4272, %v4360
    %4362 = vmatmul.bf16.gmra.mxu0 %v3400
    %v4363 = vpop.f32.mrf.mxu0
    %v4364 = vadd.f32 %v4275, %v4363
    %v4365 = vpop.f32.mrf.mxu0
    %v4366 = vadd.f32 %v4277, %v4365
    %4367 = vmatmul.bf16.gmra.mxu0 %v3408
    %v4368 = vpop.f32.mrf.mxu0
    %v4369 = vadd.f32 %v4280, %v4368
    %v4370 = vpop.f32.mrf.mxu0
    %v4371 = vadd.f32 %v4282, %v4370
    %4372 = vdwg.mxu0
    %4373 = vmatpush.bf16.msra.mxu0 %v3847
    %4374 = vmatpush.bf16.msra.mxu0 %v3846
    %4375 = vmatpush.bf16.msra.mxu0 %v3845
    %4376 = vmatpush.bf16.msra.mxu0 %v3844
    %4377 = vmatpush.bf16.msra.mxu0 %v3843
    %4378 = vmatpush.bf16.msra.mxu0 %v3842
    %4379 = vmatpush.bf16.msra.mxu0 %v3841
    %4380 = vmatpush.bf16.msra.mxu0 %v3840
    %4381 = vmatmul.bf16.gmra.mxu0 %v3289
    %v4382 = vpop.f32.mrf.mxu0
    %v4383 = vadd.f32 %v4294, %v4382
    %v4384 = vpop.f32.mrf.mxu0
    %v4385 = vadd.f32 %v4296, %v4384
    %4386 = vmatmul.bf16.gmra.mxu0 %v3297
    %v4387 = vpop.f32.mrf.mxu0
    %v4388 = vadd.f32 %v4299, %v4387
    %v4389 = vpop.f32.mrf.mxu0
    %v4390 = vadd.f32 %v4301, %v4389
    %4391 = vmatmul.bf16.gmra.mxu0 %v3305
    %v4392 = vpop.f32.mrf.mxu0
    %v4393 = vadd.f32 %v4304, %v4392
    %v4394 = vpop.f32.mrf.mxu0
    %v4395 = vadd.f32 %v4306, %v4394
    %4396 = vmatmul.bf16.gmra.mxu0 %v3313
    %v4397 = vpop.f32.mrf.mxu0
    %v4398 = vadd.f32 %v4309, %v4397
    %v4399 = vpop.f32.mrf.mxu0
    %v4400 = vadd.f32 %v4311, %v4399
    %4401 = vmatmul.bf16.gmra.mxu0 %v3321
    %v4402 = vpop.f32.mrf.mxu0
    %v4403 = vadd.f32 %v4314, %v4402
    %v4404 = vpop.f32.mrf.mxu0
    %v4405 = vadd.f32 %v4316, %v4404
    %4406 = vmatmul.bf16.gmra.mxu0 %v3329
    %v4407 = vpop.f32.mrf.mxu0
    %v4408 = vadd.f32 %v4319, %v4407
    %v4409 = vpop.f32.mrf.mxu0
    %v4410 = vadd.f32 %v4321, %v4409
    %4411 = vmatmul.bf16.gmra.mxu0 %v3337
    %v4412 = vpop.f32.mrf.mxu0
    %v4413 = vadd.f32 %v4324, %v4412
    %v4414 = vpop.f32.mrf.mxu0
    %v4415 = vadd.f32 %v4326, %v4414
    %4416 = vmatmul.bf16.gmra.mxu0 %v3345
    %v4417 = vpop.f32.mrf.mxu0
    %v4418 = vadd.f32 %v4329, %v4417
    %v4419 = vpop.f32.mrf.mxu0
    %v4420 = vadd.f32 %v4331, %v4419
    %4421 = vmatmul.bf16.gmra.mxu0 %v3353
    %v4422 = vpop.f32.mrf.mxu0
    %v4423 = vadd.f32 %v4334, %v4422
    %v4424 = vpop.f32.mrf.mxu0
    %v4425 = vadd.f32 %v4336, %v4424
    %4426 = vmatmul.bf16.gmra.mxu0 %v3361
    %v4427 = vpop.f32.mrf.mxu0
    %v4428 = vadd.f32 %v4339, %v4427
    %v4429 = vpop.f32.mrf.mxu0
    %v4430 = vadd.f32 %v4341, %v4429
    %4431 = vmatmul.bf16.gmra.mxu0 %v3369
    %v4432 = vpop.f32.mrf.mxu0
    %v4433 = vadd.f32 %v4344, %v4432
    %v4434 = vpop.f32.mrf.mxu0
    %v4435 = vadd.f32 %v4346, %v4434
    %4436 = vmatmul.bf16.gmra.mxu0 %v3377
    %v4437 = vpop.f32.mrf.mxu0
    %v4438 = vadd.f32 %v4349, %v4437
    %v4439 = vpop.f32.mrf.mxu0
    %v4440 = vadd.f32 %v4351, %v4439
    %4441 = vmatmul.bf16.gmra.mxu0 %v3385
    %v4442 = vpop.f32.mrf.mxu0
    %v4443 = vadd.f32 %v4354, %v4442
    %v4444 = vpop.f32.mrf.mxu0
    %v4445 = vadd.f32 %v4356, %v4444
    %4446 = vmatmul.bf16.gmra.mxu0 %v3393
    %v4447 = vpop.f32.mrf.mxu0
    %v4448 = vadd.f32 %v4359, %v4447
    %v4449 = vpop.f32.mrf.mxu0
    %v4450 = vadd.f32 %v4361, %v4449
    %4451 = vmatmul.bf16.gmra.mxu0 %v3401
    %v4452 = vpop.f32.mrf.mxu0
    %v4453 = vadd.f32 %v4364, %v4452
    %v4454 = vpop.f32.mrf.mxu0
    %v4455 = vadd.f32 %v4366, %v4454
    %4456 = vmatmul.bf16.gmra.mxu0 %v3409
    %v4457 = vpop.f32.mrf.mxu0
    %v4458 = vadd.f32 %v4369, %v4457
    %v4459 = vpop.f32.mrf.mxu0
    %v4460 = vadd.f32 %v4371, %v4459
    %4461 = vdwg.mxu0
    %4462 = vmatpush.bf16.msra.mxu0 %v3855
    %4463 = vmatpush.bf16.msra.mxu0 %v3854
    %4464 = vmatpush.bf16.msra.mxu0 %v3853
    %4465 = vmatpush.bf16.msra.mxu0 %v3852
    %4466 = vmatpush.bf16.msra.mxu0 %v3851
    %4467 = vmatpush.bf16.msra.mxu0 %v3850
    %4468 = vmatpush.bf16.msra.mxu0 %v3849
    %4469 = vmatpush.bf16.msra.mxu0 %v3848
    %4470 = vmatmul.bf16.gmra.mxu0 %v3290
    %v4471 = vpop.f32.mrf.mxu0
    %v4472 = vadd.f32 %v4383, %v4471
    %v4473 = vpop.f32.mrf.mxu0
    %v4474 = vadd.f32 %v4385, %v4473
    %4475 = vmatmul.bf16.gmra.mxu0 %v3298
    %v4476 = vpop.f32.mrf.mxu0
    %v4477 = vadd.f32 %v4388, %v4476
    %v4478 = vpop.f32.mrf.mxu0
    %v4479 = vadd.f32 %v4390, %v4478
    %4480 = vmatmul.bf16.gmra.mxu0 %v3306
    %v4481 = vpop.f32.mrf.mxu0
    %v4482 = vadd.f32 %v4393, %v4481
    %v4483 = vpop.f32.mrf.mxu0
    %v4484 = vadd.f32 %v4395, %v4483
    %4485 = vmatmul.bf16.gmra.mxu0 %v3314
    %v4486 = vpop.f32.mrf.mxu0
    %v4487 = vadd.f32 %v4398, %v4486
    %v4488 = vpop.f32.mrf.mxu0
    %v4489 = vadd.f32 %v4400, %v4488
    %4490 = vmatmul.bf16.gmra.mxu0 %v3322
    %v4491 = vpop.f32.mrf.mxu0
    %v4492 = vadd.f32 %v4403, %v4491
    %v4493 = vpop.f32.mrf.mxu0
    %v4494 = vadd.f32 %v4405, %v4493
    %4495 = vmatmul.bf16.gmra.mxu0 %v3330
    %v4496 = vpop.f32.mrf.mxu0
    %v4497 = vadd.f32 %v4408, %v4496
    %v4498 = vpop.f32.mrf.mxu0
    %v4499 = vadd.f32 %v4410, %v4498
    %4500 = vmatmul.bf16.gmra.mxu0 %v3338
    %v4501 = vpop.f32.mrf.mxu0
    %v4502 = vadd.f32 %v4413, %v4501
    %v4503 = vpop.f32.mrf.mxu0
    %v4504 = vadd.f32 %v4415, %v4503
    %4505 = vmatmul.bf16.gmra.mxu0 %v3346
    %v4506 = vpop.f32.mrf.mxu0
    %v4507 = vadd.f32 %v4418, %v4506
    %v4508 = vpop.f32.mrf.mxu0
    %v4509 = vadd.f32 %v4420, %v4508
    %4510 = vmatmul.bf16.gmra.mxu0 %v3354
    %v4511 = vpop.f32.mrf.mxu0
    %v4512 = vadd.f32 %v4423, %v4511
    %v4513 = vpop.f32.mrf.mxu0
    %v4514 = vadd.f32 %v4425, %v4513
    %4515 = vmatmul.bf16.gmra.mxu0 %v3362
    %v4516 = vpop.f32.mrf.mxu0
    %v4517 = vadd.f32 %v4428, %v4516
    %v4518 = vpop.f32.mrf.mxu0
    %v4519 = vadd.f32 %v4430, %v4518
    %4520 = vmatmul.bf16.gmra.mxu0 %v3370
    %v4521 = vpop.f32.mrf.mxu0
    %v4522 = vadd.f32 %v4433, %v4521
    %v4523 = vpop.f32.mrf.mxu0
    %v4524 = vadd.f32 %v4435, %v4523
    %4525 = vmatmul.bf16.gmra.mxu0 %v3378
    %v4526 = vpop.f32.mrf.mxu0
    %v4527 = vadd.f32 %v4438, %v4526
    %v4528 = vpop.f32.mrf.mxu0
    %v4529 = vadd.f32 %v4440, %v4528
    %4530 = vmatmul.bf16.gmra.mxu0 %v3386
    %v4531 = vpop.f32.mrf.mxu0
    %v4532 = vadd.f32 %v4443, %v4531
    %v4533 = vpop.f32.mrf.mxu0
    %v4534 = vadd.f32 %v4445, %v4533
    %4535 = vmatmul.bf16.gmra.mxu0 %v3394
    %v4536 = vpop.f32.mrf.mxu0
    %v4537 = vadd.f32 %v4448, %v4536
    %v4538 = vpop.f32.mrf.mxu0
    %v4539 = vadd.f32 %v4450, %v4538
    %4540 = vmatmul.bf16.gmra.mxu0 %v3402
    %v4541 = vpop.f32.mrf.mxu0
    %v4542 = vadd.f32 %v4453, %v4541
    %v4543 = vpop.f32.mrf.mxu0
    %v4544 = vadd.f32 %v4455, %v4543
    %4545 = vmatmul.bf16.gmra.mxu0 %v3410
    %v4546 = vpop.f32.mrf.mxu0
    %v4547 = vadd.f32 %v4458, %v4546
    %v4548 = vpop.f32.mrf.mxu0
    %v4549 = vadd.f32 %v4460, %v4548
    %4550 = vdwg.mxu0
    %4551 = vmatpush.bf16.msra.mxu0 %v3863
    %4552 = vmatpush.bf16.msra.mxu0 %v3862
    %4553 = vmatpush.bf16.msra.mxu0 %v3861
    %4554 = vmatpush.bf16.msra.mxu0 %v3860
    %4555 = vmatpush.bf16.msra.mxu0 %v3859
    %4556 = vmatpush.bf16.msra.mxu0 %v3858
    %4557 = vmatpush.bf16.msra.mxu0 %v3857
    %4558 = vmatpush.bf16.msra.mxu0 %v3856
    %4559 = vmatmul.bf16.gmra.mxu0 %v3291
    %v4560 = vpop.f32.mrf.mxu0
    %v4561 = vadd.f32 %v4472, %v4560
    %v4562 = vpop.f32.mrf.mxu0
    %v4563 = vadd.f32 %v4474, %v4562
    %4564 = vmatmul.bf16.gmra.mxu0 %v3299
    %v4565 = vpop.f32.mrf.mxu0
    %v4566 = vadd.f32 %v4477, %v4565
    %v4567 = vpop.f32.mrf.mxu0
    %v4568 = vadd.f32 %v4479, %v4567
    %4569 = vmatmul.bf16.gmra.mxu0 %v3307
    %v4570 = vpop.f32.mrf.mxu0
    %v4571 = vadd.f32 %v4482, %v4570
    %v4572 = vpop.f32.mrf.mxu0
    %v4573 = vadd.f32 %v4484, %v4572
    %4574 = vmatmul.bf16.gmra.mxu0 %v3315
    %v4575 = vpop.f32.mrf.mxu0
    %v4576 = vadd.f32 %v4487, %v4575
    %v4577 = vpop.f32.mrf.mxu0
    %v4578 = vadd.f32 %v4489, %v4577
    %4579 = vmatmul.bf16.gmra.mxu0 %v3323
    %v4580 = vpop.f32.mrf.mxu0
    %v4581 = vadd.f32 %v4492, %v4580
    %v4582 = vpop.f32.mrf.mxu0
    %v4583 = vadd.f32 %v4494, %v4582
    %4584 = vmatmul.bf16.gmra.mxu0 %v3331
    %v4585 = vpop.f32.mrf.mxu0
    %v4586 = vadd.f32 %v4497, %v4585
    %v4587 = vpop.f32.mrf.mxu0
    %v4588 = vadd.f32 %v4499, %v4587
    %4589 = vmatmul.bf16.gmra.mxu0 %v3339
    %v4590 = vpop.f32.mrf.mxu0
    %v4591 = vadd.f32 %v4502, %v4590
    %v4592 = vpop.f32.mrf.mxu0
    %v4593 = vadd.f32 %v4504, %v4592
    %4594 = vmatmul.bf16.gmra.mxu0 %v3347
    %v4595 = vpop.f32.mrf.mxu0
    %v4596 = vadd.f32 %v4507, %v4595
    %v4597 = vpop.f32.mrf.mxu0
    %v4598 = vadd.f32 %v4509, %v4597
    %4599 = vmatmul.bf16.gmra.mxu0 %v3355
    %v4600 = vpop.f32.mrf.mxu0
    %v4601 = vadd.f32 %v4512, %v4600
    %v4602 = vpop.f32.mrf.mxu0
    %v4603 = vadd.f32 %v4514, %v4602
    %4604 = vmatmul.bf16.gmra.mxu0 %v3363
    %v4605 = vpop.f32.mrf.mxu0
    %v4606 = vadd.f32 %v4517, %v4605
    %v4607 = vpop.f32.mrf.mxu0
    %v4608 = vadd.f32 %v4519, %v4607
    %4609 = vmatmul.bf16.gmra.mxu0 %v3371
    %v4610 = vpop.f32.mrf.mxu0
    %v4611 = vadd.f32 %v4522, %v4610
    %v4612 = vpop.f32.mrf.mxu0
    %v4613 = vadd.f32 %v4524, %v4612
    %4614 = vmatmul.bf16.gmra.mxu0 %v3379
    %v4615 = vpop.f32.mrf.mxu0
    %v4616 = vadd.f32 %v4527, %v4615
    %v4617 = vpop.f32.mrf.mxu0
    %v4618 = vadd.f32 %v4529, %v4617
    %4619 = vmatmul.bf16.gmra.mxu0 %v3387
    %v4620 = vpop.f32.mrf.mxu0
    %v4621 = vadd.f32 %v4532, %v4620
    %v4622 = vpop.f32.mrf.mxu0
    %v4623 = vadd.f32 %v4534, %v4622
    %4624 = vmatmul.bf16.gmra.mxu0 %v3395
    %v4625 = vpop.f32.mrf.mxu0
    %v4626 = vadd.f32 %v4537, %v4625
    %v4627 = vpop.f32.mrf.mxu0
    %v4628 = vadd.f32 %v4539, %v4627
    %4629 = vmatmul.bf16.gmra.mxu0 %v3403
    %v4630 = vpop.f32.mrf.mxu0
    %v4631 = vadd.f32 %v4542, %v4630
    %v4632 = vpop.f32.mrf.mxu0
    %v4633 = vadd.f32 %v4544, %v4632
    %4634 = vmatmul.bf16.gmra.mxu0 %v3411
    %v4635 = vpop.f32.mrf.mxu0
    %v4636 = vadd.f32 %v4547, %v4635
    %v4637 = vpop.f32.mrf.mxu0
    %v4638 = vadd.f32 %v4549, %v4637
    %4639 = vdwg.mxu0
    %v4640 = vmul.f32 %v4561, 0.5
    %v4641 = vmul.f32 %v4563, 0.5
    %v4642 = vmul.f32 %v4566, 0.5
    %v4643 = vmul.f32 %v4568, 0.5
    %v4644 = vmul.f32 %v4571, 0.5
    %v4645 = vmul.f32 %v4573, 0.5
    %v4646 = vmul.f32 %v4576, 0.5
    %v4647 = vmul.f32 %v4578, 0.5
    %v4648 = vmul.f32 %v4581, 0.5
    %v4649 = vmul.f32 %v4583, 0.5
    %v4650 = vmul.f32 %v4586, 0.5
    %v4651 = vmul.f32 %v4588, 0.5
    %v4652 = vmul.f32 %v4591, 0.5
    %v4653 = vmul.f32 %v4593, 0.5
    %v4654 = vmul.f32 %v4596, 0.5
    %v4655 = vmul.f32 %v4598, 0.5
    %v4656 = vmul.f32 %v4601, 0.5
    %v4657 = vmul.f32 %v4603, 0.5
    %v4658 = vmul.f32 %v4606, 0.5
    %v4659 = vmul.f32 %v4608, 0.5
    %v4660 = vmul.f32 %v4611, 0.5
    %v4661 = vmul.f32 %v4613, 0.5
    %v4662 = vmul.f32 %v4616, 0.5
    %v4663 = vmul.f32 %v4618, 0.5
    %v4664 = vmul.f32 %v4621, 0.5
    %v4665 = vmul.f32 %v4623, 0.5
    %v4666 = vmul.f32 %v4626, 0.5
    %v4667 = vmul.f32 %v4628, 0.5
    %v4668 = vmul.f32 %v4631, 0.5
    %v4669 = vmul.f32 %v4633, 0.5
    %v4670 = vmul.f32 %v4636, 0.5
    %v4671 = vmul.f32 %v4638, 0.5
    %v4672 = vmul.f32 %v4561, 0.044715
    %v4673 = vmul.f32 %v4563, 0.044715
    %v4674 = vmul.f32 %v4566, 0.044715
    %v4675 = vmul.f32 %v4568, 0.044715
    %v4676 = vmul.f32 %v4571, 0.044715
    %v4677 = vmul.f32 %v4573, 0.044715
    %v4678 = vmul.f32 %v4576, 0.044715
    %v4679 = vmul.f32 %v4578, 0.044715
    %v4680 = vmul.f32 %v4581, 0.044715
    %v4681 = vmul.f32 %v4583, 0.044715
    %v4682 = vmul.f32 %v4586, 0.044715
    %v4683 = vmul.f32 %v4588, 0.044715
    %v4684 = vmul.f32 %v4591, 0.044715
    %v4685 = vmul.f32 %v4593, 0.044715
    %v4686 = vmul.f32 %v4596, 0.044715
    %v4687 = vmul.f32 %v4598, 0.044715
    %v4688 = vmul.f32 %v4601, 0.044715
    %v4689 = vmul.f32 %v4603, 0.044715
    %v4690 = vmul.f32 %v4606, 0.044715
    %v4691 = vmul.f32 %v4608, 0.044715
    %v4692 = vmul.f32 %v4611, 0.044715
    %v4693 = vmul.f32 %v4613, 0.044715
    %v4694 = vmul.f32 %v4616, 0.044715
    %v4695 = vmul.f32 %v4618, 0.044715
    %v4696 = vmul.f32 %v4621, 0.044715
    %v4697 = vmul.f32 %v4623, 0.044715
    %v4698 = vmul.f32 %v4626, 0.044715
    %v4699 = vmul.f32 %v4628, 0.044715
    %v4700 = vmul.f32 %v4631, 0.044715
    %v4701 = vmul.f32 %v4633, 0.044715
    %v4702 = vmul.f32 %v4636, 0.044715
    %v4703 = vmul.f32 %v4638, 0.044715
    %v4704 = vmul.f32 %v4672, %v4561
    %v4705 = vmul.f32 %v4673, %v4563
    %v4706 = vmul.f32 %v4674, %v4566
    %v4707 = vmul.f32 %v4675, %v4568
    %v4708 = vmul.f32 %v4676, %v4571
    %v4709 = vmul.f32 %v4677, %v4573
    %v4710 = vmul.f32 %v4678, %v4576
    %v4711 = vmul.f32 %v4679, %v4578
    %v4712 = vmul.f32 %v4680, %v4581
    %v4713 = vmul.f32 %v4681, %v4583
    %v4714 = vmul.f32 %v4682, %v4586
    %v4715 = vmul.f32 %v4683, %v4588
    %v4716 = vmul.f32 %v4684, %v4591
    %v4717 = vmul.f32 %v4685, %v4593
    %v4718 = vmul.f32 %v4686, %v4596
    %v4719 = vmul.f32 %v4687, %v4598
    %v4720 = vmul.f32 %v4688, %v4601
    %v4721 = vmul.f32 %v4689, %v4603
    %v4722 = vmul.f32 %v4690, %v4606
    %v4723 = vmul.f32 %v4691, %v4608
    %v4724 = vmul.f32 %v4692, %v4611
    %v4725 = vmul.f32 %v4693, %v4613
    %v4726 = vmul.f32 %v4694, %v4616
    %v4727 = vmul.f32 %v4695, %v4618
    %v4728 = vmul.f32 %v4696, %v4621
    %v4729 = vmul.f32 %v4697, %v4623
    %v4730 = vmul.f32 %v4698, %v4626
    %v4731 = vmul.f32 %v4699, %v4628
    %v4732 = vmul.f32 %v4700, %v4631
    %v4733 = vmul.f32 %v4701, %v4633
    %v4734 = vmul.f32 %v4702, %v4636
    %v4735 = vmul.f32 %v4703, %v4638
    %v4736 = vmul.f32 %v4704, %v4561
    %v4737 = vmul.f32 %v4705, %v4563
    %v4738 = vmul.f32 %v4706, %v4566
    %v4739 = vmul.f32 %v4707, %v4568
    %v4740 = vmul.f32 %v4708, %v4571
    %v4741 = vmul.f32 %v4709, %v4573
    %v4742 = vmul.f32 %v4710, %v4576
    %v4743 = vmul.f32 %v4711, %v4578
    %v4744 = vmul.f32 %v4712, %v4581
    %v4745 = vmul.f32 %v4713, %v4583
    %v4746 = vmul.f32 %v4714, %v4586
    %v4747 = vmul.f32 %v4715, %v4588
    %v4748 = vmul.f32 %v4716, %v4591
    %v4749 = vmul.f32 %v4717, %v4593
    %v4750 = vmul.f32 %v4718, %v4596
    %v4751 = vmul.f32 %v4719, %v4598
    %v4752 = vmul.f32 %v4720, %v4601
    %v4753 = vmul.f32 %v4721, %v4603
    %v4754 = vmul.f32 %v4722, %v4606
    %v4755 = vmul.f32 %v4723, %v4608
    %v4756 = vmul.f32 %v4724, %v4611
    %v4757 = vmul.f32 %v4725, %v4613
    %v4758 = vmul.f32 %v4726, %v4616
    %v4759 = vmul.f32 %v4727, %v4618
    %v4760 = vmul.f32 %v4728, %v4621
    %v4761 = vmul.f32 %v4729, %v4623
    %v4762 = vmul.f32 %v4730, %v4626
    %v4763 = vmul.f32 %v4731, %v4628
    %v4764 = vmul.f32 %v4732, %v4631
    %v4765 = vmul.f32 %v4733, %v4633
    %v4766 = vmul.f32 %v4734, %v4636
    %v4767 = vmul.f32 %v4735, %v4638
    %v4768 = vadd.f32 %v4561, %v4736
    %v4769 = vadd.f32 %v4563, %v4737
    %v4770 = vadd.f32 %v4566, %v4738
    %v4771 = vadd.f32 %v4568, %v4739
    %v4772 = vadd.f32 %v4571, %v4740
    %v4773 = vadd.f32 %v4573, %v4741
    %v4774 = vadd.f32 %v4576, %v4742
    %v4775 = vadd.f32 %v4578, %v4743
    %v4776 = vadd.f32 %v4581, %v4744
    %v4777 = vadd.f32 %v4583, %v4745
    %v4778 = vadd.f32 %v4586, %v4746
    %v4779 = vadd.f32 %v4588, %v4747
    %v4780 = vadd.f32 %v4591, %v4748
    %v4781 = vadd.f32 %v4593, %v4749
    %v4782 = vadd.f32 %v4596, %v4750
    %v4783 = vadd.f32 %v4598, %v4751
    %v4784 = vadd.f32 %v4601, %v4752
    %v4785 = vadd.f32 %v4603, %v4753
    %v4786 = vadd.f32 %v4606, %v4754
    %v4787 = vadd.f32 %v4608, %v4755
    %v4788 = vadd.f32 %v4611, %v4756
    %v4789 = vadd.f32 %v4613, %v4757
    %v4790 = vadd.f32 %v4616, %v4758
    %v4791 = vadd.f32 %v4618, %v4759
    %v4792 = vadd.f32 %v4621, %v4760
    %v4793 = vadd.f32 %v4623, %v4761
    %v4794 = vadd.f32 %v4626, %v4762
    %v4795 = vadd.f32 %v4628, %v4763
    %v4796 = vadd.f32 %v4631, %v4764
    %v4797 = vadd.f32 %v4633, %v4765
    %v4798 = vadd.f32 %v4636, %v4766
    %v4799 = vadd.f32 %v4638, %v4767
    %v4800 = vmul.f32 %v4768, 0.7978846
    %v4801 = vmul.f32 %v4769, 0.7978846
    %v4802 = vmul.f32 %v4770, 0.7978846
    %v4803 = vmul.f32 %v4771, 0.7978846
    %v4804 = vmul.f32 %v4772, 0.7978846
    %v4805 = vmul.f32 %v4773, 0.7978846
    %v4806 = vmul.f32 %v4774, 0.7978846
    %v4807 = vmul.f32 %v4775, 0.7978846
    %v4808 = vmul.f32 %v4776, 0.7978846
    %v4809 = vmul.f32 %v4777, 0.7978846
    %v4810 = vmul.f32 %v4778, 0.7978846
    %v4811 = vmul.f32 %v4779, 0.7978846
    %v4812 = vmul.f32 %v4780, 0.7978846
    %v4813 = vmul.f32 %v4781, 0.7978846
    %v4814 = vmul.f32 %v4782, 0.7978846
    %v4815 = vmul.f32 %v4783, 0.7978846
    %v4816 = vmul.f32 %v4784, 0.7978846
    %v4817 = vmul.f32 %v4785, 0.7978846
    %v4818 = vmul.f32 %v4786, 0.7978846
    %v4819 = vmul.f32 %v4787, 0.7978846
    %v4820 = vmul.f32 %v4788, 0.7978846
    %v4821 = vmul.f32 %v4789, 0.7978846
    %v4822 = vmul.f32 %v4790, 0.7978846
    %v4823 = vmul.f32 %v4791, 0.7978846
    %v4824 = vmul.f32 %v4792, 0.7978846
    %v4825 = vmul.f32 %v4793, 0.7978846
    %v4826 = vmul.f32 %v4794, 0.7978846
    %v4827 = vmul.f32 %v4795, 0.7978846
    %v4828 = vmul.f32 %v4796, 0.7978846
    %v4829 = vmul.f32 %v4797, 0.7978846
    %v4830 = vmul.f32 %v4798, 0.7978846
    %v4831 = vmul.f32 %v4799, 0.7978846
    %v4832 = vtanh.pop %v4800
    %v4833 = vtanh.pop %v4801
    %v4834 = vtanh.pop %v4802
    %v4835 = vtanh.pop %v4803
    %v4836 = vtanh.pop %v4804
    %v4837 = vtanh.pop %v4805
    %v4838 = vtanh.pop %v4806
    %v4839 = vtanh.pop %v4807
    %v4840 = vtanh.pop %v4808
    %v4841 = vtanh.pop %v4809
    %v4842 = vtanh.pop %v4810
    %v4843 = vtanh.pop %v4811
    %v4844 = vtanh.pop %v4812
    %v4845 = vtanh.pop %v4813
    %v4846 = vtanh.pop %v4814
    %v4847 = vtanh.pop %v4815
    %v4848 = vtanh.pop %v4816
    %v4849 = vtanh.pop %v4817
    %v4850 = vtanh.pop %v4818
    %v4851 = vtanh.pop %v4819
    %v4852 = vtanh.pop %v4820
    %v4853 = vtanh.pop %v4821
    %v4854 = vtanh.pop %v4822
    %v4855 = vtanh.pop %v4823
    %v4856 = vtanh.pop %v4824
    %v4857 = vtanh.pop %v4825
    %v4858 = vtanh.pop %v4826
    %v4859 = vtanh.pop %v4827
    %v4860 = vtanh.pop %v4828
    %v4861 = vtanh.pop %v4829
    %v4862 = vtanh.pop %v4830
    %v4863 = vtanh.pop %v4831
    %v4864 = vadd.f32 %v4832, 1.0
    %v4865 = vadd.f32 %v4833, 1.0
    %v4866 = vadd.f32 %v4834, 1.0
    %v4867 = vadd.f32 %v4835, 1.0
    %v4868 = vadd.f32 %v4836, 1.0
    %v4869 = vadd.f32 %v4837, 1.0
    %v4870 = vadd.f32 %v4838, 1.0
    %v4871 = vadd.f32 %v4839, 1.0
    %v4872 = vadd.f32 %v4840, 1.0
    %v4873 = vadd.f32 %v4841, 1.0
    %v4874 = vadd.f32 %v4842, 1.0
    %v4875 = vadd.f32 %v4843, 1.0
    %v4876 = vadd.f32 %v4844, 1.0
    %v4877 = vadd.f32 %v4845, 1.0
    %v4878 = vadd.f32 %v4846, 1.0
    %v4879 = vadd.f32 %v4847, 1.0
    %v4880 = vadd.f32 %v4848, 1.0
    %v4881 = vadd.f32 %v4849, 1.0
    %v4882 = vadd.f32 %v4850, 1.0
    %v4883 = vadd.f32 %v4851, 1.0
    %v4884 = vadd.f32 %v4852, 1.0
    %v4885 = vadd.f32 %v4853, 1.0
    %v4886 = vadd.f32 %v4854, 1.0
    %v4887 = vadd.f32 %v4855, 1.0
    %v4888 = vadd.f32 %v4856, 1.0
    %v4889 = vadd.f32 %v4857, 1.0
    %v4890 = vadd.f32 %v4858, 1.0
    %v4891 = vadd.f32 %v4859, 1.0
    %v4892 = vadd.f32 %v4860, 1.0
    %v4893 = vadd.f32 %v4861, 1.0
    %v4894 = vadd.f32 %v4862, 1.0
    %v4895 = vadd.f32 %v4863, 1.0
    %v4896 = vmul.f32 %v4640, %v4864
    %v4897 = vmul.f32 %v4641, %v4865
    %v4898 = vmul.f32 %v4642, %v4866
    %v4899 = vmul.f32 %v4643, %v4867
    %v4900 = vmul.f32 %v4644, %v4868
    %v4901 = vmul.f32 %v4645, %v4869
    %v4902 = vmul.f32 %v4646, %v4870
    %v4903 = vmul.f32 %v4647, %v4871
    %v4904 = vmul.f32 %v4648, %v4872
    %v4905 = vmul.f32 %v4649, %v4873
    %v4906 = vmul.f32 %v4650, %v4874
    %v4907 = vmul.f32 %v4651, %v4875
    %v4908 = vmul.f32 %v4652, %v4876
    %v4909 = vmul.f32 %v4653, %v4877
    %v4910 = vmul.f32 %v4654, %v4878
    %v4911 = vmul.f32 %v4655, %v4879
    %v4912 = vmul.f32 %v4656, %v4880
    %v4913 = vmul.f32 %v4657, %v4881
    %v4914 = vmul.f32 %v4658, %v4882
    %v4915 = vmul.f32 %v4659, %v4883
    %v4916 = vmul.f32 %v4660, %v4884
    %v4917 = vmul.f32 %v4661, %v4885
    %v4918 = vmul.f32 %v4662, %v4886
    %v4919 = vmul.f32 %v4663, %v4887
    %v4920 = vmul.f32 %v4664, %v4888
    %v4921 = vmul.f32 %v4665, %v4889
    %v4922 = vmul.f32 %v4666, %v4890
    %v4923 = vmul.f32 %v4667, %v4891
    %v4924 = vmul.f32 %v4668, %v4892
    %v4925 = vmul.f32 %v4669, %v4893
    %v4926 = vmul.f32 %v4670, %v4894
    %v4927 = vmul.f32 %v4671, %v4895
    %v4928 = vpack.c.bf16 %v4897, %v4896
    %v4929 = vpack.c.bf16 %v4899, %v4898
    %v4930 = vpack.c.bf16 %v4901, %v4900
    %v4931 = vpack.c.bf16 %v4903, %v4902
    %v4932 = vpack.c.bf16 %v4905, %v4904
    %v4933 = vpack.c.bf16 %v4907, %v4906
    %v4934 = vpack.c.bf16 %v4909, %v4908
    %v4935 = vpack.c.bf16 %v4911, %v4910
    %v4936 = vpack.c.bf16 %v4913, %v4912
    %v4937 = vpack.c.bf16 %v4915, %v4914
    %v4938 = vpack.c.bf16 %v4917, %v4916
    %v4939 = vpack.c.bf16 %v4919, %v4918
    %v4940 = vpack.c.bf16 %v4921, %v4920
    %v4941 = vpack.c.bf16 %v4923, %v4922
    %v4942 = vpack.c.bf16 %v4925, %v4924
    %v4943 = vpack.c.bf16 %v4927, %v4926
    %v4944 = vld [vmem:[%s5] sm:$0xf]
    %v4945 = vld [vmem:[%s5 + $0x4] sm:$0xf]
    %v4946 = vld [vmem:[%s5 + $0x8] sm:$0xf]
    %v4947 = vld [vmem:[%s5 + $0xc] sm:$0xf]
    %v4948 = vld [vmem:[%s5 + $0x10] sm:$0xf]
    %v4949 = vld [vmem:[%s5 + $0x14] sm:$0xf]
    %v4950 = vld [vmem:[%s5 + $0x18] sm:$0xf]
    %v4951 = vld [vmem:[%s5 + $0x1c] sm:$0xf]
    %v4952 = vld [vmem:[%s5 + $0x20] sm:$0xf]
    %v4953 = vld [vmem:[%s5 + $0x24] sm:$0xf]
    %v4954 = vld [vmem:[%s5 + $0x28] sm:$0xf]
    %v4955 = vld [vmem:[%s5 + $0x2c] sm:$0xf]
    %v4956 = vld [vmem:[%s5 + $0x30] sm:$0xf]
    %v4957 = vld [vmem:[%s5 + $0x34] sm:$0xf]
    %v4958 = vld [vmem:[%s5 + $0x38] sm:$0xf]
    %v4959 = vld [vmem:[%s5 + $0x3c] sm:$0xf]
    %v4960 = vld [vmem:[%s6] sm:$0x1]
    %v4962 = vperm.slane %v4960, 0
    %v4980 = vunpack.c.l.b16 %v4944
    %v4981 = vunpack.c.l.b16 %v4945
    %v4982 = vunpack.c.l.b16 %v4946
    %v4983 = vunpack.c.l.b16 %v4947
    %v4984 = vunpack.c.l.b16 %v4948
    %v4985 = vunpack.c.l.b16 %v4949
    %v4986 = vunpack.c.l.b16 %v4950
    %v4987 = vunpack.c.l.b16 %v4951
    %v4988 = vunpack.c.l.b16 %v4952
    %v4989 = vunpack.c.l.b16 %v4953
    %v4990 = vunpack.c.l.b16 %v4954
    %v4991 = vunpack.c.l.b16 %v4955
    %v4992 = vunpack.c.l.b16 %v4956
    %v4993 = vunpack.c.l.b16 %v4957
    %v4994 = vunpack.c.l.b16 %v4958
    %v4995 = vunpack.c.l.b16 %v4959
    %v4996 = vpack.c.b16 %v4981, %v4980
    %v4997 = vpack.c.b16 %v4983, %v4982
    %v4998 = vpack.c.b16 %v4985, %v4984
    %v4999 = vpack.c.b16 %v4987, %v4986
    %v5000 = vpack.c.b16 %v4989, %v4988
    %v5001 = vpack.c.b16 %v4991, %v4990
    %v5002 = vpack.c.b16 %v4993, %v4992
    %v5003 = vpack.c.b16 %v4995, %v4994
    %5012 = vmatpush.bf16.msra.mxu0 %v5003
    %5013 = vmatpush.bf16.msra.mxu0 %v5002
    %5014 = vmatpush.bf16.msra.mxu0 %v5001
    %5015 = vmatpush.bf16.msra.mxu0 %v5000
    %5016 = vmatpush.bf16.msra.mxu0 %v4999
    %5017 = vmatpush.bf16.msra.mxu0 %v4998
    %5018 = vmatpush.bf16.msra.mxu0 %v4997
    %5019 = vmatpush.bf16.msra.mxu0 %v4996
    %5020 = vmatmul.bf16.gmra.mxu0 %v4928
    %v5021 = vpop.f32.mrf.mxu0
    %v5022 = vadd.f32 %v4962, %v5021
    %v5023 = vpop.f32.mrf.mxu0
    %v5024 = vadd.f32 %v4962, %v5023
    %5025 = vmatmul.bf16.gmra.mxu0 %v4929
    %v5026 = vpop.f32.mrf.mxu0
    %v5027 = vadd.f32 %v4962, %v5026
    %v5028 = vpop.f32.mrf.mxu0
    %v5029 = vadd.f32 %v4962, %v5028
    %5030 = vmatmul.bf16.gmra.mxu0 %v4930
    %v5031 = vpop.f32.mrf.mxu0
    %v5032 = vadd.f32 %v4962, %v5031
    %v5033 = vpop.f32.mrf.mxu0
    %v5034 = vadd.f32 %v4962, %v5033
    %5035 = vmatmul.bf16.gmra.mxu0 %v4931
    %v5036 = vpop.f32.mrf.mxu0
    %v5037 = vadd.f32 %v4962, %v5036
    %v5038 = vpop.f32.mrf.mxu0
    %v5039 = vadd.f32 %v4962, %v5038
    %5040 = vmatmul.bf16.gmra.mxu0 %v4932
    %v5041 = vpop.f32.mrf.mxu0
    %v5042 = vadd.f32 %v4962, %v5041
    %v5043 = vpop.f32.mrf.mxu0
    %v5044 = vadd.f32 %v4962, %v5043
    %5045 = vmatmul.bf16.gmra.mxu0 %v4933
    %v5046 = vpop.f32.mrf.mxu0
    %v5047 = vadd.f32 %v4962, %v5046
    %v5048 = vpop.f32.mrf.mxu0
    %v5049 = vadd.f32 %v4962, %v5048
    %5050 = vmatmul.bf16.gmra.mxu0 %v4934
    %v5051 = vpop.f32.mrf.mxu0
    %v5052 = vadd.f32 %v4962, %v5051
    %v5053 = vpop.f32.mrf.mxu0
    %v5054 = vadd.f32 %v4962, %v5053
    %5055 = vmatmul.bf16.gmra.mxu0 %v4935
    %v5056 = vpop.f32.mrf.mxu0
    %v5057 = vadd.f32 %v4962, %v5056
    %v5058 = vpop.f32.mrf.mxu0
    %v5059 = vadd.f32 %v4962, %v5058
    %5060 = vmatmul.bf16.gmra.mxu0 %v4936
    %v5061 = vpop.f32.mrf.mxu0
    %v5062 = vadd.f32 %v4962, %v5061
    %v5063 = vpop.f32.mrf.mxu0
    %v5064 = vadd.f32 %v4962, %v5063
    %5065 = vmatmul.bf16.gmra.mxu0 %v4937
    %v5066 = vpop.f32.mrf.mxu0
    %v5067 = vadd.f32 %v4962, %v5066
    %v5068 = vpop.f32.mrf.mxu0
    %v5069 = vadd.f32 %v4962, %v5068
    %5070 = vmatmul.bf16.gmra.mxu0 %v4938
    %v5071 = vpop.f32.mrf.mxu0
    %v5072 = vadd.f32 %v4962, %v5071
    %v5073 = vpop.f32.mrf.mxu0
    %v5074 = vadd.f32 %v4962, %v5073
    %5075 = vmatmul.bf16.gmra.mxu0 %v4939
    %v5076 = vpop.f32.mrf.mxu0
    %v5077 = vadd.f32 %v4962, %v5076
    %v5078 = vpop.f32.mrf.mxu0
    %v5079 = vadd.f32 %v4962, %v5078
    %5080 = vmatmul.bf16.gmra.mxu0 %v4940
    %v5081 = vpop.f32.mrf.mxu0
    %v5082 = vadd.f32 %v4962, %v5081
    %v5083 = vpop.f32.mrf.mxu0
    %v5084 = vadd.f32 %v4962, %v5083
    %5085 = vmatmul.bf16.gmra.mxu0 %v4941
    %v5086 = vpop.f32.mrf.mxu0
    %v5087 = vadd.f32 %v4962, %v5086
    %v5088 = vpop.f32.mrf.mxu0
    %v5089 = vadd.f32 %v4962, %v5088
    %5090 = vmatmul.bf16.gmra.mxu0 %v4942
    %v5091 = vpop.f32.mrf.mxu0
    %v5092 = vadd.f32 %v4962, %v5091
    %v5093 = vpop.f32.mrf.mxu0
    %v5094 = vadd.f32 %v4962, %v5093
    %5095 = vmatmul.bf16.gmra.mxu0 %v4943
    %v5096 = vpop.f32.mrf.mxu0
    %v5097 = vadd.f32 %v4962, %v5096
    %v5098 = vpop.f32.mrf.mxu0
    %v5099 = vadd.f32 %v4962, %v5098
    %5100 = vdwg.mxu0
    %v5101 = vmul.f32 %v5022, 0.5
    %v5102 = vmul.f32 %v5024, 0.5
    %v5103 = vmul.f32 %v5027, 0.5
    %v5104 = vmul.f32 %v5029, 0.5
    %v5105 = vmul.f32 %v5032, 0.5
    %v5106 = vmul.f32 %v5034, 0.5
    %v5107 = vmul.f32 %v5037, 0.5
    %v5108 = vmul.f32 %v5039, 0.5
    %v5109 = vmul.f32 %v5042, 0.5
    %v5110 = vmul.f32 %v5044, 0.5
    %v5111 = vmul.f32 %v5047, 0.5
    %v5112 = vmul.f32 %v5049, 0.5
    %v5113 = vmul.f32 %v5052, 0.5
    %v5114 = vmul.f32 %v5054, 0.5
    %v5115 = vmul.f32 %v5057, 0.5
    %v5116 = vmul.f32 %v5059, 0.5
    %v5117 = vmul.f32 %v5062, 0.5
    %v5118 = vmul.f32 %v5064, 0.5
    %v5119 = vmul.f32 %v5067, 0.5
    %v5120 = vmul.f32 %v5069, 0.5
    %v5121 = vmul.f32 %v5072, 0.5
    %v5122 = vmul.f32 %v5074, 0.5
    %v5123 = vmul.f32 %v5077, 0.5
    %v5124 = vmul.f32 %v5079, 0.5
    %v5125 = vmul.f32 %v5082, 0.5
    %v5126 = vmul.f32 %v5084, 0.5
    %v5127 = vmul.f32 %v5087, 0.5
    %v5128 = vmul.f32 %v5089, 0.5
    %v5129 = vmul.f32 %v5092, 0.5
    %v5130 = vmul.f32 %v5094, 0.5
    %v5131 = vmul.f32 %v5097, 0.5
    %v5132 = vmul.f32 %v5099, 0.5
    %v5133 = vmul.f32 %v5022, 0.044715
    %v5134 = vmul.f32 %v5024, 0.044715
    %v5135 = vmul.f32 %v5027, 0.044715
    %v5136 = vmul.f32 %v5029, 0.044715
    %v5137 = vmul.f32 %v5032, 0.044715
    %v5138 = vmul.f32 %v5034, 0.044715
    %v5139 = vmul.f32 %v5037, 0.044715
    %v5140 = vmul.f32 %v5039, 0.044715
    %v5141 = vmul.f32 %v5042, 0.044715
    %v5142 = vmul.f32 %v5044, 0.044715
    %v5143 = vmul.f32 %v5047, 0.044715
    %v5144 = vmul.f32 %v5049, 0.044715
    %v5145 = vmul.f32 %v5052, 0.044715
    %v5146 = vmul.f32 %v5054, 0.044715
    %v5147 = vmul.f32 %v5057, 0.044715
    %v5148 = vmul.f32 %v5059, 0.044715
    %v5149 = vmul.f32 %v5062, 0.044715
    %v5150 = vmul.f32 %v5064, 0.044715
    %v5151 = vmul.f32 %v5067, 0.044715
    %v5152 = vmul.f32 %v5069, 0.044715
    %v5153 = vmul.f32 %v5072, 0.044715
    %v5154 = vmul.f32 %v5074, 0.044715
    %v5155 = vmul.f32 %v5077, 0.044715
    %v5156 = vmul.f32 %v5079, 0.044715
    %v5157 = vmul.f32 %v5082, 0.044715
    %v5158 = vmul.f32 %v5084, 0.044715
    %v5159 = vmul.f32 %v5087, 0.044715
    %v5160 = vmul.f32 %v5089, 0.044715
    %v5161 = vmul.f32 %v5092, 0.044715
    %v5162 = vmul.f32 %v5094, 0.044715
    %v5163 = vmul.f32 %v5097, 0.044715
    %v5164 = vmul.f32 %v5099, 0.044715
    %v5165 = vmul.f32 %v5133, %v5022
    %v5166 = vmul.f32 %v5134, %v5024
    %v5167 = vmul.f32 %v5135, %v5027
    %v5168 = vmul.f32 %v5136, %v5029
    %v5169 = vmul.f32 %v5137, %v5032
    %v5170 = vmul.f32 %v5138, %v5034
    %v5171 = vmul.f32 %v5139, %v5037
    %v5172 = vmul.f32 %v5140, %v5039
    %v5173 = vmul.f32 %v5141, %v5042
    %v5174 = vmul.f32 %v5142, %v5044
    %v5175 = vmul.f32 %v5143, %v5047
    %v5176 = vmul.f32 %v5144, %v5049
    %v5177 = vmul.f32 %v5145, %v5052
    %v5178 = vmul.f32 %v5146, %v5054
    %v5179 = vmul.f32 %v5147, %v5057
    %v5180 = vmul.f32 %v5148, %v5059
    %v5181 = vmul.f32 %v5149, %v5062
    %v5182 = vmul.f32 %v5150, %v5064
    %v5183 = vmul.f32 %v5151, %v5067
    %v5184 = vmul.f32 %v5152, %v5069
    %v5185 = vmul.f32 %v5153, %v5072
    %v5186 = vmul.f32 %v5154, %v5074
    %v5187 = vmul.f32 %v5155, %v5077
    %v5188 = vmul.f32 %v5156, %v5079
    %v5189 = vmul.f32 %v5157, %v5082
    %v5190 = vmul.f32 %v5158, %v5084
    %v5191 = vmul.f32 %v5159, %v5087
    %v5192 = vmul.f32 %v5160, %v5089
    %v5193 = vmul.f32 %v5161, %v5092
    %v5194 = vmul.f32 %v5162, %v5094
    %v5195 = vmul.f32 %v5163, %v5097
    %v5196 = vmul.f32 %v5164, %v5099
    %v5197 = vmul.f32 %v5165, %v5022
    %v5198 = vmul.f32 %v5166, %v5024
    %v5199 = vmul.f32 %v5167, %v5027
    %v5200 = vmul.f32 %v5168, %v5029
    %v5201 = vmul.f32 %v5169, %v5032
    %v5202 = vmul.f32 %v5170, %v5034
    %v5203 = vmul.f32 %v5171, %v5037
    %v5204 = vmul.f32 %v5172, %v5039
    %v5205 = vmul.f32 %v5173, %v5042
    %v5206 = vmul.f32 %v5174, %v5044
    %v5207 = vmul.f32 %v5175, %v5047
    %v5208 = vmul.f32 %v5176, %v5049
    %v5209 = vmul.f32 %v5177, %v5052
    %v5210 = vmul.f32 %v5178, %v5054
    %v5211 = vmul.f32 %v5179, %v5057
    %v5212 = vmul.f32 %v5180, %v5059
    %v5213 = vmul.f32 %v5181, %v5062
    %v5214 = vmul.f32 %v5182, %v5064
    %v5215 = vmul.f32 %v5183, %v5067
    %v5216 = vmul.f32 %v5184, %v5069
    %v5217 = vmul.f32 %v5185, %v5072
    %v5218 = vmul.f32 %v5186, %v5074
    %v5219 = vmul.f32 %v5187, %v5077
    %v5220 = vmul.f32 %v5188, %v5079
    %v5221 = vmul.f32 %v5189, %v5082
    %v5222 = vmul.f32 %v5190, %v5084
    %v5223 = vmul.f32 %v5191, %v5087
    %v5224 = vmul.f32 %v5192, %v5089
    %v5225 = vmul.f32 %v5193, %v5092
    %v5226 = vmul.f32 %v5194, %v5094
    %v5227 = vmul.f32 %v5195, %v5097
    %v5228 = vmul.f32 %v5196, %v5099
    %v5229 = vadd.f32 %v5022, %v5197
    %v5230 = vadd.f32 %v5024, %v5198
    %v5231 = vadd.f32 %v5027, %v5199
    %v5232 = vadd.f32 %v5029, %v5200
    %v5233 = vadd.f32 %v5032, %v5201
    %v5234 = vadd.f32 %v5034, %v5202
    %v5235 = vadd.f32 %v5037, %v5203
    %v5236 = vadd.f32 %v5039, %v5204
    %v5237 = vadd.f32 %v5042, %v5205
    %v5238 = vadd.f32 %v5044, %v5206
    %v5239 = vadd.f32 %v5047, %v5207
    %v5240 = vadd.f32 %v5049, %v5208
    %v5241 = vadd.f32 %v5052, %v5209
    %v5242 = vadd.f32 %v5054, %v5210
    %v5243 = vadd.f32 %v5057, %v5211
    %v5244 = vadd.f32 %v5059, %v5212
    %v5245 = vadd.f32 %v5062, %v5213
    %v5246 = vadd.f32 %v5064, %v5214
    %v5247 = vadd.f32 %v5067, %v5215
    %v5248 = vadd.f32 %v5069, %v5216
    %v5249 = vadd.f32 %v5072, %v5217
    %v5250 = vadd.f32 %v5074, %v5218
    %v5251 = vadd.f32 %v5077, %v5219
    %v5252 = vadd.f32 %v5079, %v5220
    %v5253 = vadd.f32 %v5082, %v5221
    %v5254 = vadd.f32 %v5084, %v5222
    %v5255 = vadd.f32 %v5087, %v5223
    %v5256 = vadd.f32 %v5089, %v5224
    %v5257 = vadd.f32 %v5092, %v5225
    %v5258 = vadd.f32 %v5094, %v5226
    %v5259 = vadd.f32 %v5097, %v5227
    %v5260 = vadd.f32 %v5099, %v5228
    %v5261 = vmul.f32 %v5229, 0.7978846
    %v5262 = vmul.f32 %v5230, 0.7978846
    %v5263 = vmul.f32 %v5231, 0.7978846
    %v5264 = vmul.f32 %v5232, 0.7978846
    %v5265 = vmul.f32 %v5233, 0.7978846
    %v5266 = vmul.f32 %v5234, 0.7978846
    %v5267 = vmul.f32 %v5235, 0.7978846
    %v5268 = vmul.f32 %v5236, 0.7978846
    %v5269 = vmul.f32 %v5237, 0.7978846
    %v5270 = vmul.f32 %v5238, 0.7978846
    %v5271 = vmul.f32 %v5239, 0.7978846
    %v5272 = vmul.f32 %v5240, 0.7978846
    %v5273 = vmul.f32 %v5241, 0.7978846
    %v5274 = vmul.f32 %v5242, 0.7978846
    %v5275 = vmul.f32 %v5243, 0.7978846
    %v5276 = vmul.f32 %v5244, 0.7978846
    %v5277 = vmul.f32 %v5245, 0.7978846
    %v5278 = vmul.f32 %v5246, 0.7978846
    %v5279 = vmul.f32 %v5247, 0.7978846
    %v5280 = vmul.f32 %v5248, 0.7978846
    %v5281 = vmul.f32 %v5249, 0.7978846
    %v5282 = vmul.f32 %v5250, 0.7978846
    %v5283 = vmul.f32 %v5251, 0.7978846
    %v5284 = vmul.f32 %v5252, 0.7978846
    %v5285 = vmul.f32 %v5253, 0.7978846
    %v5286 = vmul.f32 %v5254, 0.7978846
    %v5287 = vmul.f32 %v5255, 0.7978846
    %v5288 = vmul.f32 %v5256, 0.7978846
    %v5289 = vmul.f32 %v5257, 0.7978846
    %v5290 = vmul.f32 %v5258, 0.7978846
    %v5291 = vmul.f32 %v5259, 0.7978846
    %v5292 = vmul.f32 %v5260, 0.7978846
    %v5293 = vtanh.pop %v5261
    %v5294 = vtanh.pop %v5262
    %v5295 = vtanh.pop %v5263
    %v5296 = vtanh.pop %v5264
    %v5297 = vtanh.pop %v5265
    %v5298 = vtanh.pop %v5266
    %v5299 = vtanh.pop %v5267
    %v5300 = vtanh.pop %v5268
    %v5301 = vtanh.pop %v5269
    %v5302 = vtanh.pop %v5270
    %v5303 = vtanh.pop %v5271
    %v5304 = vtanh.pop %v5272
    %v5305 = vtanh.pop %v5273
    %v5306 = vtanh.pop %v5274
    %v5307 = vtanh.pop %v5275
    %v5308 = vtanh.pop %v5276
    %v5309 = vtanh.pop %v5277
    %v5310 = vtanh.pop %v5278
    %v5311 = vtanh.pop %v5279
    %v5312 = vtanh.pop %v5280
    %v5313 = vtanh.pop %v5281
    %v5314 = vtanh.pop %v5282
    %v5315 = vtanh.pop %v5283
    %v5316 = vtanh.pop %v5284
    %v5317 = vtanh.pop %v5285
    %v5318 = vtanh.pop %v5286
    %v5319 = vtanh.pop %v5287
    %v5320 = vtanh.pop %v5288
    %v5321 = vtanh.pop %v5289
    %v5322 = vtanh.pop %v5290
    %v5323 = vtanh.pop %v5291
    %v5324 = vtanh.pop %v5292
    %v5325 = vadd.f32 %v5293, 1.0
    %v5326 = vadd.f32 %v5294, 1.0
    %v5327 = vadd.f32 %v5295, 1.0
    %v5328 = vadd.f32 %v5296, 1.0
    %v5329 = vadd.f32 %v5297, 1.0
    %v5330 = vadd.f32 %v5298, 1.0
    %v5331 = vadd.f32 %v5299, 1.0
    %v5332 = vadd.f32 %v5300, 1.0
    %v5333 = vadd.f32 %v5301, 1.0
    %v5334 = vadd.f32 %v5302, 1.0
    %v5335 = vadd.f32 %v5303, 1.0
    %v5336 = vadd.f32 %v5304, 1.0
    %v5337 = vadd.f32 %v5305, 1.0
    %v5338 = vadd.f32 %v5306, 1.0
    %v5339 = vadd.f32 %v5307, 1.0
    %v5340 = vadd.f32 %v5308, 1.0
    %v5341 = vadd.f32 %v5309, 1.0
    %v5342 = vadd.f32 %v5310, 1.0
    %v5343 = vadd.f32 %v5311, 1.0
    %v5344 = vadd.f32 %v5312, 1.0
    %v5345 = vadd.f32 %v5313, 1.0
    %v5346 = vadd.f32 %v5314, 1.0
    %v5347 = vadd.f32 %v5315, 1.0
    %v5348 = vadd.f32 %v5316, 1.0
    %v5349 = vadd.f32 %v5317, 1.0
    %v5350 = vadd.f32 %v5318, 1.0
    %v5351 = vadd.f32 %v5319, 1.0
    %v5352 = vadd.f32 %v5320, 1.0
    %v5353 = vadd.f32 %v5321, 1.0
    %v5354 = vadd.f32 %v5322, 1.0
    %v5355 = vadd.f32 %v5323, 1.0
    %v5356 = vadd.f32 %v5324, 1.0
    %v5357 = vmul.f32 %v5101, %v5325
    %v5358 = vmul.f32 %v5102, %v5326
    %v5359 = vmul.f32 %v5103, %v5327
    %v5360 = vmul.f32 %v5104, %v5328
    %v5361 = vmul.f32 %v5105, %v5329
    %v5362 = vmul.f32 %v5106, %v5330
    %v5363 = vmul.f32 %v5107, %v5331
    %v5364 = vmul.f32 %v5108, %v5332
    %v5365 = vmul.f32 %v5109, %v5333
    %v5366 = vmul.f32 %v5110, %v5334
    %v5367 = vmul.f32 %v5111, %v5335
    %v5368 = vmul.f32 %v5112, %v5336
    %v5369 = vmul.f32 %v5113, %v5337
    %v5370 = vmul.f32 %v5114, %v5338
    %v5371 = vmul.f32 %v5115, %v5339
    %v5372 = vmul.f32 %v5116, %v5340
    %v5373 = vmul.f32 %v5117, %v5341
    %v5374 = vmul.f32 %v5118, %v5342
    %v5375 = vmul.f32 %v5119, %v5343
    %v5376 = vmul.f32 %v5120, %v5344
    %v5377 = vmul.f32 %v5121, %v5345
    %v5378 = vmul.f32 %v5122, %v5346
    %v5379 = vmul.f32 %v5123, %v5347
    %v5380 = vmul.f32 %v5124, %v5348
    %v5381 = vmul.f32 %v5125, %v5349
    %v5382 = vmul.f32 %v5126, %v5350
    %v5383 = vmul.f32 %v5127, %v5351
    %v5384 = vmul.f32 %v5128, %v5352
    %v5385 = vmul.f32 %v5129, %v5353
    %v5386 = vmul.f32 %v5130, %v5354
    %v5387 = vmul.f32 %v5131, %v5355
    %v5388 = vmul.f32 %v5132, %v5356
    %v5389 = vpack.c.bf16 %v5358, %v5357
    %v5390 = vpack.c.bf16 %v5360, %v5359
    %v5391 = vpack.c.bf16 %v5362, %v5361
    %v5392 = vpack.c.bf16 %v5364, %v5363
    %v5393 = vpack.c.bf16 %v5366, %v5365
    %v5394 = vpack.c.bf16 %v5368, %v5367
    %v5395 = vpack.c.bf16 %v5370, %v5369
    %v5396 = vpack.c.bf16 %v5372, %v5371
    %v5397 = vpack.c.bf16 %v5374, %v5373
    %v5398 = vpack.c.bf16 %v5376, %v5375
    %v5399 = vpack.c.bf16 %v5378, %v5377
    %v5400 = vpack.c.bf16 %v5380, %v5379
    %v5401 = vpack.c.bf16 %v5382, %v5381
    %v5402 = vpack.c.bf16 %v5384, %v5383
    %v5403 = vpack.c.bf16 %v5386, %v5385
    %v5404 = vpack.c.bf16 %v5388, %v5387
    %v5405 = vld [vmem:[%s7] sm:$0xf]
    %v5406 = vld [vmem:[%s7 + $0x4] sm:$0xf]
    %v5407 = vld [vmem:[%s7 + $0x8] sm:$0xf]
    %v5408 = vld [vmem:[%s7 + $0xc] sm:$0xf]
    %v5409 = vld [vmem:[%s7 + $0x10] sm:$0xf]
    %v5410 = vld [vmem:[%s7 + $0x14] sm:$0xf]
    %v5411 = vld [vmem:[%s7 + $0x18] sm:$0xf]
    %v5412 = vld [vmem:[%s7 + $0x1c] sm:$0xf]
    %v5413 = vld [vmem:[%s8] sm:$0x1]
    %v5415 = vperm.slane %v5413, 0
    %v5425 = vunpack.c.l.b16 %v5405
    %v5426 = vunpack.c.l.b16 %v5406
    %v5427 = vunpack.c.l.b16 %v5407
    %v5428 = vunpack.c.l.b16 %v5408
    %v5429 = vunpack.c.l.b16 %v5409
    %v5430 = vunpack.c.l.b16 %v5410
    %v5431 = vunpack.c.l.b16 %v5411
    %v5432 = vunpack.c.l.b16 %v5412
    %v5433 = vpack.c.b16 %v5426, %v5425
    %v5434 = vpack.c.b16 %v5428, %v5427
    %v5435 = vpack.c.b16 %v5430, %v5429
    %v5436 = vpack.c.b16 %v5432, %v5431
    %vm5441 = vcmask 523264
    %v5443 = vsel %vm5441, %v5389, 0
    %v5446 = vsel %vm5441, %v5390, 0
    %v5449 = vsel %vm5441, %v5391, 0
    %v5452 = vsel %vm5441, %v5392, 0
    %v5455 = vsel %vm5441, %v5393, 0
    %v5458 = vsel %vm5441, %v5394, 0
    %v5461 = vsel %vm5441, %v5395, 0
    %v5464 = vsel %vm5441, %v5396, 0
    %v5467 = vsel %vm5441, %v5397, 0
    %v5470 = vsel %vm5441, %v5398, 0
    %v5473 = vsel %vm5441, %v5399, 0
    %v5476 = vsel %vm5441, %v5400, 0
    %v5479 = vsel %vm5441, %v5401, 0
    %v5482 = vsel %vm5441, %v5402, 0
    %v5485 = vsel %vm5441, %v5403, 0
    %v5488 = vsel %vm5441, %v5404, 0
    %5490 = vmatpush.bf16.msra.mxu0 0
    %5491 = vmatpush.bf16.msra.mxu0 0
    %5492 = vmatpush.bf16.msra.mxu0 0
    %5493 = vmatpush.bf16.msra.mxu0 0
    %5494 = vmatpush.bf16.msra.mxu0 %v5436
    %5495 = vmatpush.bf16.msra.mxu0 %v5435
    %5496 = vmatpush.bf16.msra.mxu0 %v5434
    %5497 = vmatpush.bf16.msra.mxu0 %v5433
    %5498 = vmatmul.bf16.gmra.mxu0 %v5443
    %v5499 = vpop.f32.mrf.mxu0
    %v5500 = vadd.f32 %v5415, %v5499
    %v5501 = vpop.f32.mrf.mxu0
    %v5502 = vadd.f32 %v5415, %v5501
    %5503 = vmatmul.bf16.gmra.mxu0 %v5446
    %v5504 = vpop.f32.mrf.mxu0
    %v5505 = vadd.f32 %v5415, %v5504
    %v5506 = vpop.f32.mrf.mxu0
    %v5507 = vadd.f32 %v5415, %v5506
    %5508 = vmatmul.bf16.gmra.mxu0 %v5449
    %v5509 = vpop.f32.mrf.mxu0
    %v5510 = vadd.f32 %v5415, %v5509
    %v5511 = vpop.f32.mrf.mxu0
    %v5512 = vadd.f32 %v5415, %v5511
    %5513 = vmatmul.bf16.gmra.mxu0 %v5452
    %v5514 = vpop.f32.mrf.mxu0
    %v5515 = vadd.f32 %v5415, %v5514
    %v5516 = vpop.f32.mrf.mxu0
    %v5517 = vadd.f32 %v5415, %v5516
    %5518 = vmatmul.bf16.gmra.mxu0 %v5455
    %v5519 = vpop.f32.mrf.mxu0
    %v5520 = vadd.f32 %v5415, %v5519
    %v5521 = vpop.f32.mrf.mxu0
    %v5522 = vadd.f32 %v5415, %v5521
    %5523 = vmatmul.bf16.gmra.mxu0 %v5458
    %v5524 = vpop.f32.mrf.mxu0
    %v5525 = vadd.f32 %v5415, %v5524
    %v5526 = vpop.f32.mrf.mxu0
    %v5527 = vadd.f32 %v5415, %v5526
    %5528 = vmatmul.bf16.gmra.mxu0 %v5461
    %v5529 = vpop.f32.mrf.mxu0
    %v5530 = vadd.f32 %v5415, %v5529
    %v5531 = vpop.f32.mrf.mxu0
    %v5532 = vadd.f32 %v5415, %v5531
    %5533 = vmatmul.bf16.gmra.mxu0 %v5464
    %v5534 = vpop.f32.mrf.mxu0
    %v5535 = vadd.f32 %v5415, %v5534
    %v5536 = vpop.f32.mrf.mxu0
    %v5537 = vadd.f32 %v5415, %v5536
    %5538 = vmatmul.bf16.gmra.mxu0 %v5467
    %v5539 = vpop.f32.mrf.mxu0
    %v5540 = vadd.f32 %v5415, %v5539
    %v5541 = vpop.f32.mrf.mxu0
    %v5542 = vadd.f32 %v5415, %v5541
    %5543 = vmatmul.bf16.gmra.mxu0 %v5470
    %v5544 = vpop.f32.mrf.mxu0
    %v5545 = vadd.f32 %v5415, %v5544
    %v5546 = vpop.f32.mrf.mxu0
    %v5547 = vadd.f32 %v5415, %v5546
    %5548 = vmatmul.bf16.gmra.mxu0 %v5473
    %v5549 = vpop.f32.mrf.mxu0
    %v5550 = vadd.f32 %v5415, %v5549
    %v5551 = vpop.f32.mrf.mxu0
    %v5552 = vadd.f32 %v5415, %v5551
    %5553 = vmatmul.bf16.gmra.mxu0 %v5476
    %v5554 = vpop.f32.mrf.mxu0
    %v5555 = vadd.f32 %v5415, %v5554
    %v5556 = vpop.f32.mrf.mxu0
    %v5557 = vadd.f32 %v5415, %v5556
    %5558 = vmatmul.bf16.gmra.mxu0 %v5479
    %v5559 = vpop.f32.mrf.mxu0
    %v5560 = vadd.f32 %v5415, %v5559
    %v5561 = vpop.f32.mrf.mxu0
    %v5562 = vadd.f32 %v5415, %v5561
    %5563 = vmatmul.bf16.gmra.mxu0 %v5482
    %v5564 = vpop.f32.mrf.mxu0
    %v5565 = vadd.f32 %v5415, %v5564
    %v5566 = vpop.f32.mrf.mxu0
    %v5567 = vadd.f32 %v5415, %v5566
    %5568 = vmatmul.bf16.gmra.mxu0 %v5485
    %v5569 = vpop.f32.mrf.mxu0
    %v5570 = vadd.f32 %v5415, %v5569
    %v5571 = vpop.f32.mrf.mxu0
    %v5572 = vadd.f32 %v5415, %v5571
    %5573 = vmatmul.bf16.gmra.mxu0 %v5488
    %v5574 = vpop.f32.mrf.mxu0
    %v5575 = vadd.f32 %v5415, %v5574
    %v5576 = vpop.f32.mrf.mxu0
    %v5577 = vadd.f32 %v5415, %v5576
    %5578 = vdwg.mxu0
    %v5579 = vmul.f32 %v5500, 0.5
    %v5580 = vmul.f32 %v5502, 0.5
    %v5581 = vmul.f32 %v5505, 0.5
    %v5582 = vmul.f32 %v5507, 0.5
    %v5583 = vmul.f32 %v5510, 0.5
    %v5584 = vmul.f32 %v5512, 0.5
    %v5585 = vmul.f32 %v5515, 0.5
    %v5586 = vmul.f32 %v5517, 0.5
    %v5587 = vmul.f32 %v5520, 0.5
    %v5588 = vmul.f32 %v5522, 0.5
    %v5589 = vmul.f32 %v5525, 0.5
    %v5590 = vmul.f32 %v5527, 0.5
    %v5591 = vmul.f32 %v5530, 0.5
    %v5592 = vmul.f32 %v5532, 0.5
    %v5593 = vmul.f32 %v5535, 0.5
    %v5594 = vmul.f32 %v5537, 0.5
    %v5595 = vmul.f32 %v5540, 0.5
    %v5596 = vmul.f32 %v5542, 0.5
    %v5597 = vmul.f32 %v5545, 0.5
    %v5598 = vmul.f32 %v5547, 0.5
    %v5599 = vmul.f32 %v5550, 0.5
    %v5600 = vmul.f32 %v5552, 0.5
    %v5601 = vmul.f32 %v5555, 0.5
    %v5602 = vmul.f32 %v5557, 0.5
    %v5603 = vmul.f32 %v5560, 0.5
    %v5604 = vmul.f32 %v5562, 0.5
    %v5605 = vmul.f32 %v5565, 0.5
    %v5606 = vmul.f32 %v5567, 0.5
    %v5607 = vmul.f32 %v5570, 0.5
    %v5608 = vmul.f32 %v5572, 0.5
    %v5609 = vmul.f32 %v5575, 0.5
    %v5610 = vmul.f32 %v5577, 0.5
    %v5611 = vmul.f32 %v5500, 0.044715
    %v5612 = vmul.f32 %v5502, 0.044715
    %v5613 = vmul.f32 %v5505, 0.044715
    %v5614 = vmul.f32 %v5507, 0.044715
    %v5615 = vmul.f32 %v5510, 0.044715
    %v5616 = vmul.f32 %v5512, 0.044715
    %v5617 = vmul.f32 %v5515, 0.044715
    %v5618 = vmul.f32 %v5517, 0.044715
    %v5619 = vmul.f32 %v5520, 0.044715
    %v5620 = vmul.f32 %v5522, 0.044715
    %v5621 = vmul.f32 %v5525, 0.044715
    %v5622 = vmul.f32 %v5527, 0.044715
    %v5623 = vmul.f32 %v5530, 0.044715
    %v5624 = vmul.f32 %v5532, 0.044715
    %v5625 = vmul.f32 %v5535, 0.044715
    %v5626 = vmul.f32 %v5537, 0.044715
    %v5627 = vmul.f32 %v5540, 0.044715
    %v5628 = vmul.f32 %v5542, 0.044715
    %v5629 = vmul.f32 %v5545, 0.044715
    %v5630 = vmul.f32 %v5547, 0.044715
    %v5631 = vmul.f32 %v5550, 0.044715
    %v5632 = vmul.f32 %v5552, 0.044715
    %v5633 = vmul.f32 %v5555, 0.044715
    %v5634 = vmul.f32 %v5557, 0.044715
    %v5635 = vmul.f32 %v5560, 0.044715
    %v5636 = vmul.f32 %v5562, 0.044715
    %v5637 = vmul.f32 %v5565, 0.044715
    %v5638 = vmul.f32 %v5567, 0.044715
    %v5639 = vmul.f32 %v5570, 0.044715
    %v5640 = vmul.f32 %v5572, 0.044715
    %v5641 = vmul.f32 %v5575, 0.044715
    %v5642 = vmul.f32 %v5577, 0.044715
    %v5643 = vmul.f32 %v5611, %v5500
    %v5644 = vmul.f32 %v5612, %v5502
    %v5645 = vmul.f32 %v5613, %v5505
    %v5646 = vmul.f32 %v5614, %v5507
    %v5647 = vmul.f32 %v5615, %v5510
    %v5648 = vmul.f32 %v5616, %v5512
    %v5649 = vmul.f32 %v5617, %v5515
    %v5650 = vmul.f32 %v5618, %v5517
    %v5651 = vmul.f32 %v5619, %v5520
    %v5652 = vmul.f32 %v5620, %v5522
    %v5653 = vmul.f32 %v5621, %v5525
    %v5654 = vmul.f32 %v5622, %v5527
    %v5655 = vmul.f32 %v5623, %v5530
    %v5656 = vmul.f32 %v5624, %v5532
    %v5657 = vmul.f32 %v5625, %v5535
    %v5658 = vmul.f32 %v5626, %v5537
    %v5659 = vmul.f32 %v5627, %v5540
    %v5660 = vmul.f32 %v5628, %v5542
    %v5661 = vmul.f32 %v5629, %v5545
    %v5662 = vmul.f32 %v5630, %v5547
    %v5663 = vmul.f32 %v5631, %v5550
    %v5664 = vmul.f32 %v5632, %v5552
    %v5665 = vmul.f32 %v5633, %v5555
    %v5666 = vmul.f32 %v5634, %v5557
    %v5667 = vmul.f32 %v5635, %v5560
    %v5668 = vmul.f32 %v5636, %v5562
    %v5669 = vmul.f32 %v5637, %v5565
    %v5670 = vmul.f32 %v5638, %v5567
    %v5671 = vmul.f32 %v5639, %v5570
    %v5672 = vmul.f32 %v5640, %v5572
    %v5673 = vmul.f32 %v5641, %v5575
    %v5674 = vmul.f32 %v5642, %v5577
    %v5675 = vmul.f32 %v5643, %v5500
    %v5676 = vmul.f32 %v5644, %v5502
    %v5677 = vmul.f32 %v5645, %v5505
    %v5678 = vmul.f32 %v5646, %v5507
    %v5679 = vmul.f32 %v5647, %v5510
    %v5680 = vmul.f32 %v5648, %v5512
    %v5681 = vmul.f32 %v5649, %v5515
    %v5682 = vmul.f32 %v5650, %v5517
    %v5683 = vmul.f32 %v5651, %v5520
    %v5684 = vmul.f32 %v5652, %v5522
    %v5685 = vmul.f32 %v5653, %v5525
    %v5686 = vmul.f32 %v5654, %v5527
    %v5687 = vmul.f32 %v5655, %v5530
    %v5688 = vmul.f32 %v5656, %v5532
    %v5689 = vmul.f32 %v5657, %v5535
    %v5690 = vmul.f32 %v5658, %v5537
    %v5691 = vmul.f32 %v5659, %v5540
    %v5692 = vmul.f32 %v5660, %v5542
    %v5693 = vmul.f32 %v5661, %v5545
    %v5694 = vmul.f32 %v5662, %v5547
    %v5695 = vmul.f32 %v5663, %v5550
    %v5696 = vmul.f32 %v5664, %v5552
    %v5697 = vmul.f32 %v5665, %v5555
    %v5698 = vmul.f32 %v5666, %v5557
    %v5699 = vmul.f32 %v5667, %v5560
    %v5700 = vmul.f32 %v5668, %v5562
    %v5701 = vmul.f32 %v5669, %v5565
    %v5702 = vmul.f32 %v5670, %v5567
    %v5703 = vmul.f32 %v5671, %v5570
    %v5704 = vmul.f32 %v5672, %v5572
    %v5705 = vmul.f32 %v5673, %v5575
    %v5706 = vmul.f32 %v5674, %v5577
    %v5707 = vadd.f32 %v5500, %v5675
    %v5708 = vadd.f32 %v5502, %v5676
    %v5709 = vadd.f32 %v5505, %v5677
    %v5710 = vadd.f32 %v5507, %v5678
    %v5711 = vadd.f32 %v5510, %v5679
    %v5712 = vadd.f32 %v5512, %v5680
    %v5713 = vadd.f32 %v5515, %v5681
    %v5714 = vadd.f32 %v5517, %v5682
    %v5715 = vadd.f32 %v5520, %v5683
    %v5716 = vadd.f32 %v5522, %v5684
    %v5717 = vadd.f32 %v5525, %v5685
    %v5718 = vadd.f32 %v5527, %v5686
    %v5719 = vadd.f32 %v5530, %v5687
    %v5720 = vadd.f32 %v5532, %v5688
    %v5721 = vadd.f32 %v5535, %v5689
    %v5722 = vadd.f32 %v5537, %v5690
    %v5723 = vadd.f32 %v5540, %v5691
    %v5724 = vadd.f32 %v5542, %v5692
    %v5725 = vadd.f32 %v5545, %v5693
    %v5726 = vadd.f32 %v5547, %v5694
    %v5727 = vadd.f32 %v5550, %v5695
    %v5728 = vadd.f32 %v5552, %v5696
    %v5729 = vadd.f32 %v5555, %v5697
    %v5730 = vadd.f32 %v5557, %v5698
    %v5731 = vadd.f32 %v5560, %v5699
    %v5732 = vadd.f32 %v5562, %v5700
    %v5733 = vadd.f32 %v5565, %v5701
    %v5734 = vadd.f32 %v5567, %v5702
    %v5735 = vadd.f32 %v5570, %v5703
    %v5736 = vadd.f32 %v5572, %v5704
    %v5737 = vadd.f32 %v5575, %v5705
    %v5738 = vadd.f32 %v5577, %v5706
    %v5739 = vmul.f32 %v5707, 0.7978846
    %v5740 = vmul.f32 %v5708, 0.7978846
    %v5741 = vmul.f32 %v5709, 0.7978846
    %v5742 = vmul.f32 %v5710, 0.7978846
    %v5743 = vmul.f32 %v5711, 0.7978846
    %v5744 = vmul.f32 %v5712, 0.7978846
    %v5745 = vmul.f32 %v5713, 0.7978846
    %v5746 = vmul.f32 %v5714, 0.7978846
    %v5747 = vmul.f32 %v5715, 0.7978846
    %v5748 = vmul.f32 %v5716, 0.7978846
    %v5749 = vmul.f32 %v5717, 0.7978846
    %v5750 = vmul.f32 %v5718, 0.7978846
    %v5751 = vmul.f32 %v5719, 0.7978846
    %v5752 = vmul.f32 %v5720, 0.7978846
    %v5753 = vmul.f32 %v5721, 0.7978846
    %v5754 = vmul.f32 %v5722, 0.7978846
    %v5755 = vmul.f32 %v5723, 0.7978846
    %v5756 = vmul.f32 %v5724, 0.7978846
    %v5757 = vmul.f32 %v5725, 0.7978846
    %v5758 = vmul.f32 %v5726, 0.7978846
    %v5759 = vmul.f32 %v5727, 0.7978846
    %v5760 = vmul.f32 %v5728, 0.7978846
    %v5761 = vmul.f32 %v5729, 0.7978846
    %v5762 = vmul.f32 %v5730, 0.7978846
    %v5763 = vmul.f32 %v5731, 0.7978846
    %v5764 = vmul.f32 %v5732, 0.7978846
    %v5765 = vmul.f32 %v5733, 0.7978846
    %v5766 = vmul.f32 %v5734, 0.7978846
    %v5767 = vmul.f32 %v5735, 0.7978846
    %v5768 = vmul.f32 %v5736, 0.7978846
    %v5769 = vmul.f32 %v5737, 0.7978846
    %v5770 = vmul.f32 %v5738, 0.7978846
    %v5771 = vtanh.pop %v5739
    %v5772 = vtanh.pop %v5740
    %v5773 = vtanh.pop %v5741
    %v5774 = vtanh.pop %v5742
    %v5775 = vtanh.pop %v5743
    %v5776 = vtanh.pop %v5744
    %v5777 = vtanh.pop %v5745
    %v5778 = vtanh.pop %v5746
    %v5779 = vtanh.pop %v5747
    %v5780 = vtanh.pop %v5748
    %v5781 = vtanh.pop %v5749
    %v5782 = vtanh.pop %v5750
    %v5783 = vtanh.pop %v5751
    %v5784 = vtanh.pop %v5752
    %v5785 = vtanh.pop %v5753
    %v5786 = vtanh.pop %v5754
    %v5787 = vtanh.pop %v5755
    %v5788 = vtanh.pop %v5756
    %v5789 = vtanh.pop %v5757
    %v5790 = vtanh.pop %v5758
    %v5791 = vtanh.pop %v5759
    %v5792 = vtanh.pop %v5760
    %v5793 = vtanh.pop %v5761
    %v5794 = vtanh.pop %v5762
    %v5795 = vtanh.pop %v5763
    %v5796 = vtanh.pop %v5764
    %v5797 = vtanh.pop %v5765
    %v5798 = vtanh.pop %v5766
    %v5799 = vtanh.pop %v5767
    %v5800 = vtanh.pop %v5768
    %v5801 = vtanh.pop %v5769
    %v5802 = vtanh.pop %v5770
    %v5803 = vadd.f32 %v5771, 1.0
    %v5804 = vadd.f32 %v5772, 1.0
    %v5805 = vadd.f32 %v5773, 1.0
    %v5806 = vadd.f32 %v5774, 1.0
    %v5807 = vadd.f32 %v5775, 1.0
    %v5808 = vadd.f32 %v5776, 1.0
    %v5809 = vadd.f32 %v5777, 1.0
    %v5810 = vadd.f32 %v5778, 1.0
    %v5811 = vadd.f32 %v5779, 1.0
    %v5812 = vadd.f32 %v5780, 1.0
    %v5813 = vadd.f32 %v5781, 1.0
    %v5814 = vadd.f32 %v5782, 1.0
    %v5815 = vadd.f32 %v5783, 1.0
    %v5816 = vadd.f32 %v5784, 1.0
    %v5817 = vadd.f32 %v5785, 1.0
    %v5818 = vadd.f32 %v5786, 1.0
    %v5819 = vadd.f32 %v5787, 1.0
    %v5820 = vadd.f32 %v5788, 1.0
    %v5821 = vadd.f32 %v5789, 1.0
    %v5822 = vadd.f32 %v5790, 1.0
    %v5823 = vadd.f32 %v5791, 1.0
    %v5824 = vadd.f32 %v5792, 1.0
    %v5825 = vadd.f32 %v5793, 1.0
    %v5826 = vadd.f32 %v5794, 1.0
    %v5827 = vadd.f32 %v5795, 1.0
    %v5828 = vadd.f32 %v5796, 1.0
    %v5829 = vadd.f32 %v5797, 1.0
    %v5830 = vadd.f32 %v5798, 1.0
    %v5831 = vadd.f32 %v5799, 1.0
    %v5832 = vadd.f32 %v5800, 1.0
    %v5833 = vadd.f32 %v5801, 1.0
    %v5834 = vadd.f32 %v5802, 1.0
    %v5835 = vmul.f32 %v5579, %v5803
    %v5836 = vmul.f32 %v5580, %v5804
    %v5837 = vmul.f32 %v5581, %v5805
    %v5838 = vmul.f32 %v5582, %v5806
    %v5839 = vmul.f32 %v5583, %v5807
    %v5840 = vmul.f32 %v5584, %v5808
    %v5841 = vmul.f32 %v5585, %v5809
    %v5842 = vmul.f32 %v5586, %v5810
    %v5843 = vmul.f32 %v5587, %v5811
    %v5844 = vmul.f32 %v5588, %v5812
    %v5845 = vmul.f32 %v5589, %v5813
    %v5846 = vmul.f32 %v5590, %v5814
    %v5847 = vmul.f32 %v5591, %v5815
    %v5848 = vmul.f32 %v5592, %v5816
    %v5849 = vmul.f32 %v5593, %v5817
    %v5850 = vmul.f32 %v5594, %v5818
    %v5851 = vmul.f32 %v5595, %v5819
    %v5852 = vmul.f32 %v5596, %v5820
    %v5853 = vmul.f32 %v5597, %v5821
    %v5854 = vmul.f32 %v5598, %v5822
    %v5855 = vmul.f32 %v5599, %v5823
    %v5856 = vmul.f32 %v5600, %v5824
    %v5857 = vmul.f32 %v5601, %v5825
    %v5858 = vmul.f32 %v5602, %v5826
    %v5859 = vmul.f32 %v5603, %v5827
    %v5860 = vmul.f32 %v5604, %v5828
    %v5861 = vmul.f32 %v5605, %v5829
    %v5862 = vmul.f32 %v5606, %v5830
    %v5863 = vmul.f32 %v5607, %v5831
    %v5864 = vmul.f32 %v5608, %v5832
    %v5865 = vmul.f32 %v5609, %v5833
    %v5866 = vmul.f32 %v5610, %v5834
    %v5867 = vld [vmem:[%s9] sm:$0x1]
    %v5869 = vperm.slane %v5867, 0
    %v5871 = vmul.f32 %v5835, %v5869
    %v5872 = vmul.f32 %v5836, %v5869
    %v5873 = vmul.f32 %v5837, %v5869
    %v5874 = vmul.f32 %v5838, %v5869
    %v5875 = vmul.f32 %v5839, %v5869
    %v5876 = vmul.f32 %v5840, %v5869
    %v5877 = vmul.f32 %v5841, %v5869
    %v5878 = vmul.f32 %v5842, %v5869
    %v5879 = vmul.f32 %v5843, %v5869
    %v5880 = vmul.f32 %v5844, %v5869
    %v5881 = vmul.f32 %v5845, %v5869
    %v5882 = vmul.f32 %v5846, %v5869
    %v5883 = vmul.f32 %v5847, %v5869
    %v5884 = vmul.f32 %v5848, %v5869
    %v5885 = vmul.f32 %v5849, %v5869
    %v5886 = vmul.f32 %v5850, %v5869
    %v5887 = vmul.f32 %v5851, %v5869
    %v5888 = vmul.f32 %v5852, %v5869
    %v5889 = vmul.f32 %v5853, %v5869
    %v5890 = vmul.f32 %v5854, %v5869
    %v5891 = vmul.f32 %v5855, %v5869
    %v5892 = vmul.f32 %v5856, %v5869
    %v5893 = vmul.f32 %v5857, %v5869
    %v5894 = vmul.f32 %v5858, %v5869
    %v5895 = vmul.f32 %v5859, %v5869
    %v5896 = vmul.f32 %v5860, %v5869
    %v5897 = vmul.f32 %v5861, %v5869
    %v5898 = vmul.f32 %v5862, %v5869
    %v5899 = vmul.f32 %v5863, %v5869
    %v5900 = vmul.f32 %v5864, %v5869
    %v5901 = vmul.f32 %v5865, %v5869
    %v5902 = vmul.f32 %v5866, %v5869
    %vm5903 = vcmask 130048
    %v5904 = vsel %vm5903, %v5871, 0.0
    %5905 = vadd.xlane.f32.xlu0 %v5904
    %v5906 = vpop.xlane.xlu0 %5905
    %v5907 = vsel %vm5903, %v5872, 0.0
    %5908 = vadd.xlane.f32.xlu0 %v5907
    %v5909 = vpop.xlane.xlu0 %5908
    %v5910 = vsel %vm5903, %v5873, 0.0
    %5911 = vadd.xlane.f32.xlu0 %v5910
    %v5912 = vpop.xlane.xlu0 %5911
    %v5913 = vsel %vm5903, %v5874, 0.0
    %5914 = vadd.xlane.f32.xlu0 %v5913
    %v5915 = vpop.xlane.xlu0 %5914
    %v5916 = vsel %vm5903, %v5875, 0.0
    %5917 = vadd.xlane.f32.xlu0 %v5916
    %v5918 = vpop.xlane.xlu0 %5917
    %v5919 = vsel %vm5903, %v5876, 0.0
    %5920 = vadd.xlane.f32.xlu0 %v5919
    %v5921 = vpop.xlane.xlu0 %5920
    %v5922 = vsel %vm5903, %v5877, 0.0
    %5923 = vadd.xlane.f32.xlu0 %v5922
    %v5924 = vpop.xlane.xlu0 %5923
    %v5925 = vsel %vm5903, %v5878, 0.0
    %5926 = vadd.xlane.f32.xlu0 %v5925
    %v5927 = vpop.xlane.xlu0 %5926
    %v5928 = vsel %vm5903, %v5879, 0.0
    %5929 = vadd.xlane.f32.xlu0 %v5928
    %v5930 = vpop.xlane.xlu0 %5929
    %v5931 = vsel %vm5903, %v5880, 0.0
    %5932 = vadd.xlane.f32.xlu0 %v5931
    %v5933 = vpop.xlane.xlu0 %5932
    %v5934 = vsel %vm5903, %v5881, 0.0
    %5935 = vadd.xlane.f32.xlu0 %v5934
    %v5936 = vpop.xlane.xlu0 %5935
    %v5937 = vsel %vm5903, %v5882, 0.0
    %5938 = vadd.xlane.f32.xlu0 %v5937
    %v5939 = vpop.xlane.xlu0 %5938
    %v5940 = vsel %vm5903, %v5883, 0.0
    %5941 = vadd.xlane.f32.xlu0 %v5940
    %v5942 = vpop.xlane.xlu0 %5941
    %v5943 = vsel %vm5903, %v5884, 0.0
    %5944 = vadd.xlane.f32.xlu0 %v5943
    %v5945 = vpop.xlane.xlu0 %5944
    %v5946 = vsel %vm5903, %v5885, 0.0
    %5947 = vadd.xlane.f32.xlu0 %v5946
    %v5948 = vpop.xlane.xlu0 %5947
    %v5949 = vsel %vm5903, %v5886, 0.0
    %5950 = vadd.xlane.f32.xlu0 %v5949
    %v5951 = vpop.xlane.xlu0 %5950
    %v5952 = vsel %vm5903, %v5887, 0.0
    %5953 = vadd.xlane.f32.xlu0 %v5952
    %v5954 = vpop.xlane.xlu0 %5953
    %v5955 = vsel %vm5903, %v5888, 0.0
    %5956 = vadd.xlane.f32.xlu0 %v5955
    %v5957 = vpop.xlane.xlu0 %5956
    %v5958 = vsel %vm5903, %v5889, 0.0
    %5959 = vadd.xlane.f32.xlu0 %v5958
    %v5960 = vpop.xlane.xlu0 %5959
    %v5961 = vsel %vm5903, %v5890, 0.0
    %5962 = vadd.xlane.f32.xlu0 %v5961
    %v5963 = vpop.xlane.xlu0 %5962
    %v5964 = vsel %vm5903, %v5891, 0.0
    %5965 = vadd.xlane.f32.xlu0 %v5964
    %v5966 = vpop.xlane.xlu0 %5965
    %v5967 = vsel %vm5903, %v5892, 0.0
    %5968 = vadd.xlane.f32.xlu0 %v5967
    %v5969 = vpop.xlane.xlu0 %5968
    %v5970 = vsel %vm5903, %v5893, 0.0
    %5971 = vadd.xlane.f32.xlu0 %v5970
    %v5972 = vpop.xlane.xlu0 %5971
    %v5973 = vsel %vm5903, %v5894, 0.0
    %5974 = vadd.xlane.f32.xlu0 %v5973
    %v5975 = vpop.xlane.xlu0 %5974
    %v5976 = vsel %vm5903, %v5895, 0.0
    %5977 = vadd.xlane.f32.xlu0 %v5976
    %v5978 = vpop.xlane.xlu0 %5977
    %v5979 = vsel %vm5903, %v5896, 0.0
    %5980 = vadd.xlane.f32.xlu0 %v5979
    %v5981 = vpop.xlane.xlu0 %5980
    %v5982 = vsel %vm5903, %v5897, 0.0
    %5983 = vadd.xlane.f32.xlu0 %v5982
    %v5984 = vpop.xlane.xlu0 %5983
    %v5985 = vsel %vm5903, %v5898, 0.0
    %5986 = vadd.xlane.f32.xlu0 %v5985
    %v5987 = vpop.xlane.xlu0 %5986
    %v5988 = vsel %vm5903, %v5899, 0.0
    %5989 = vadd.xlane.f32.xlu0 %v5988
    %v5990 = vpop.xlane.xlu0 %5989
    %v5991 = vsel %vm5903, %v5900, 0.0
    %5992 = vadd.xlane.f32.xlu0 %v5991
    %v5993 = vpop.xlane.xlu0 %5992
    %v5994 = vsel %vm5903, %v5901, 0.0
    %5995 = vadd.xlane.f32.xlu0 %v5994
    %v5996 = vpop.xlane.xlu0 %5995
    %v5997 = vsel %vm5903, %v5902, 0.0
    %5998 = vadd.xlane.f32.xlu0 %v5997
    %v5999 = vpop.xlane.xlu0 %5998
    %v6000 = vld [vmem:[#allocation2] sm:$0x1]
    %v6002 = vperm.slane %v6000, 0
    %v6004 = vadd.f32 %v5906, %v6002
    %v6005 = vadd.f32 %v5909, %v6002
    %v6006 = vadd.f32 %v5912, %v6002
    %v6007 = vadd.f32 %v5915, %v6002
    %v6008 = vadd.f32 %v5918, %v6002
    %v6009 = vadd.f32 %v5921, %v6002
    %v6010 = vadd.f32 %v5924, %v6002
    %v6011 = vadd.f32 %v5927, %v6002
    %v6012 = vadd.f32 %v5930, %v6002
    %v6013 = vadd.f32 %v5933, %v6002
    %v6014 = vadd.f32 %v5936, %v6002
    %v6015 = vadd.f32 %v5939, %v6002
    %v6016 = vadd.f32 %v5942, %v6002
    %v6017 = vadd.f32 %v5945, %v6002
    %v6018 = vadd.f32 %v5948, %v6002
    %v6019 = vadd.f32 %v5951, %v6002
    %v6020 = vadd.f32 %v5954, %v6002
    %v6021 = vadd.f32 %v5957, %v6002
    %v6022 = vadd.f32 %v5960, %v6002
    %v6023 = vadd.f32 %v5963, %v6002
    %v6024 = vadd.f32 %v5966, %v6002
    %v6025 = vadd.f32 %v5969, %v6002
    %v6026 = vadd.f32 %v5972, %v6002
    %v6027 = vadd.f32 %v5975, %v6002
    %v6028 = vadd.f32 %v5978, %v6002
    %v6029 = vadd.f32 %v5981, %v6002
    %v6030 = vadd.f32 %v5984, %v6002
    %v6031 = vadd.f32 %v5987, %v6002
    %v6032 = vadd.f32 %v5990, %v6002
    %v6033 = vadd.f32 %v5993, %v6002
    %v6034 = vadd.f32 %v5996, %v6002
    %v6035 = vadd.f32 %v5999, %v6002
    %vm6036 = vcmask 7168
    %6037 = vst.msk [vmem:[%s11] sm:$0xff] %vm6036, %v6004
    %6038 = vst.msk [vmem:[%s11 + $0x8] sm:$0xff] %vm6036, %v6005
    %6039 = vst.msk [vmem:[%s11 + $0x10] sm:$0xff] %vm6036, %v6006
    %6040 = vst.msk [vmem:[%s11 + $0x18] sm:$0xff] %vm6036, %v6007
    %6041 = vst.msk [vmem:[%s11 + $0x20] sm:$0xff] %vm6036, %v6008
    %6042 = vst.msk [vmem:[%s11 + $0x28] sm:$0xff] %vm6036, %v6009
    %6043 = vst.msk [vmem:[%s11 + $0x30] sm:$0xff] %vm6036, %v6010
    %6044 = vst.msk [vmem:[%s11 + $0x38] sm:$0xff] %vm6036, %v6011
    %6045 = vst.msk [vmem:[%s11 + $0x40] sm:$0xff] %vm6036, %v6012
    %6046 = vst.msk [vmem:[%s11 + $0x48] sm:$0xff] %vm6036, %v6013
    %6047 = vst.msk [vmem:[%s11 + $0x50] sm:$0xff] %vm6036, %v6014
    %6048 = vst.msk [vmem:[%s11 + $0x58] sm:$0xff] %vm6036, %v6015
    %6049 = vst.msk [vmem:[%s11 + $0x60] sm:$0xff] %vm6036, %v6016
    %6050 = vst.msk [vmem:[%s11 + $0x68] sm:$0xff] %vm6036, %v6017
    %6051 = vst.msk [vmem:[%s11 + $0x70] sm:$0xff] %vm6036, %v6018
    %6052 = vst.msk [vmem:[%s11 + $0x78] sm:$0xff] %vm6036, %v6019
    %6053 = vst.msk [vmem:[%s11 + $0x80] sm:$0xff] %vm6036, %v6020
    %6054 = vst.msk [vmem:[%s11 + $0x88] sm:$0xff] %vm6036, %v6021
    %6055 = vst.msk [vmem:[%s11 + $0x90] sm:$0xff] %vm6036, %v6022
    %6056 = vst.msk [vmem:[%s11 + $0x98] sm:$0xff] %vm6036, %v6023
    %6057 = vst.msk [vmem:[%s11 + $0xa0] sm:$0xff] %vm6036, %v6024
    %6058 = vst.msk [vmem:[%s11 + $0xa8] sm:$0xff] %vm6036, %v6025
    %6059 = vst.msk [vmem:[%s11 + $0xb0] sm:$0xff] %vm6036, %v6026
    %6060 = vst.msk [vmem:[%s11 + $0xb8] sm:$0xff] %vm6036, %v6027
    %6061 = vst.msk [vmem:[%s11 + $0xc0] sm:$0xff] %vm6036, %v6028
    %6062 = vst.msk [vmem:[%s11 + $0xc8] sm:$0xff] %vm6036, %v6029
    %6063 = vst.msk [vmem:[%s11 + $0xd0] sm:$0xff] %vm6036, %v6030
    %6064 = vst.msk [vmem:[%s11 + $0xd8] sm:$0xff] %vm6036, %v6031
    %6065 = vst.msk [vmem:[%s11 + $0xe0] sm:$0xff] %vm6036, %v6032
    %6066 = vst.msk [vmem:[%s11 + $0xe8] sm:$0xff] %vm6036, %v6033
    %6067 = vst.msk [vmem:[%s11 + $0xf0] sm:$0xff] %vm6036, %v6034
    %6068 = vst.msk [vmem:[%s11 + $0xf8] sm:$0xff] %vm6036, %v6035
    // Predicated region
    $region50: #{tpu_custom_call.1} parent=1 // pred_check
      _
    $region51: #{tpu_custom_call.1} parent=1 // pred_check_branch
      %6070 = sbr.rel (0) target = $region53
    $region52: #{tpu_custom_call.1} parent=1 // pred_region
      _
    $region53: #{tpu_custom_call.1} parent=1 // pred_fallthru
      _
    // Predicated region
    $region54: #{tpu_custom_call.1} parent=1 // pred_check
      _
    $region55: #{tpu_custom_call.1} parent=1 // pred_check_branch
      %6072 = sbr.rel (0) target = $region57
    $region56: #{tpu_custom_call.1} parent=1 // pred_region
      _
    $region57: #{tpu_custom_call.1} parent=1 // pred_fallthru
      _
    %6073 = vsyncpa [#allocation4], 1

</llo_original>
